<compile_context>
chip_gen: v7x
topology: tpu7x:2x2x1
jax: 0.10.0
libtpu: 0.0.40
codegen_flags: <defaults>
</compile_context>

<pallas_src>
import jax
import jax.numpy as jnp
from jax.experimental import pallas as pl
from jax.experimental.pallas import tpu as pltpu


B_TILE = 8  # sublane width; batch tile handled per grid step


def _lstm_kernel(x_ref, wih0_ref, whh0_ref, b0_ref,
                 w1_ref, b1_ref, fcw_ref, fcb_ref, out_ref):
    Bt, T, D = x_ref.shape
    H = whh0_ref.shape[0]
    G = 4 * H

    # ---- hoisted layer-0 input projection: ONE MXU matmul for all T steps ----
    x_flat = x_ref[...].reshape(Bt * T, D)                       # (Bt*T, D)
    x_proj = (jnp.dot(x_flat, wih0_ref[...],
                      preferred_element_type=jnp.float32)
              + b0_ref[...])                                     # bias folded here
    x_proj = x_proj.reshape(Bt, T, G)                            # (Bt, T, 4H)

    whh0 = whh0_ref[...]                                         # (H, 4H)
    w1 = w1_ref[...]                                             # (2H, 4H) = [wih1; whh1]
    b1 = jnp.broadcast_to(b1_ref[...], (Bt, G))                  # broadcast once

    def gates_to_ifgo(gates):
        # full-vreg EUP launches, then cheap static lane slices (PyTorch order i,f,g,o)
        sig = jax.nn.sigmoid(gates)
        tnh = jnp.tanh(gates)
        return (sig[:, 0:H], sig[:, H:2 * H],
                tnh[:, 2 * H:3 * H], sig[:, 3 * H:4 * H])

    zeros = jnp.zeros((Bt, H), jnp.float32)
    h0, c0, h1, c1 = zeros, zeros, zeros, zeros

    # static unroll over time: T is small & static -> full LLO scheduler visibility
    for t in range(T):
        # layer 0: only the recurrent matmul remains on the serial chain
        g0 = x_proj[:, t, :] + jnp.dot(h0, whh0,
                                       preferred_element_type=jnp.float32)
        i, f, g, o = gates_to_ifgo(g0)
        c0 = f * c0 + i * g
        h0 = o * jnp.tanh(c0)

        # layer 1: single fused matmul over [h0_new, h1_prev]
        g1 = (jnp.dot(jnp.concatenate([h0, h1], axis=1), w1,
                      preferred_element_type=jnp.float32) + b1)
        i, f, g, o = gates_to_ifgo(g1)
        c1 = f * c1 + i * g
        h1 = o * jnp.tanh(c1)

    # fc + softmax on the final hidden state of the last layer
    logits = (jnp.dot(h1, fcw_ref[...], preferred_element_type=jnp.float32)
              + fcb_ref[...])                                    # (Bt, 3)
    m = jnp.max(logits, axis=-1, keepdims=True)
    e = jnp.exp(logits - m)
    out_ref[...] = e / jnp.sum(e, axis=-1, keepdims=True)


def mylstm_forward(x, params):
    """x: (B, T, D) float32 batch-first (PyTorch convention)."""
    B, T, D = x.shape
    H = params["whh0"].shape[0]
    G = 4 * H

    # pad batch to a full sublane tile so every vector op / matmul LHS is unmasked
    Bp = ((B + B_TILE - 1) // B_TILE) * B_TILE
    if Bp != B:
        x = jnp.pad(x, ((0, Bp - B), (0, 0), (0, 0)))

    grid = (Bp // B_TILE,)  # batch-parallel grid (shards across TCs on v7x)

    out = pl.pallas_call(
        _lstm_kernel,
        out_shape=jax.ShapeDtypeStruct((Bp, 3), jnp.float32),
        grid=grid,
        in_specs=[
            pl.BlockSpec((B_TILE, T, D), lambda b: (b, 0, 0)),   # x tile per batch block
            pl.BlockSpec((D, G), lambda b: (0, 0)),              # wih0 (resident)
            pl.BlockSpec((H, G), lambda b: (0, 0)),              # whh0
            pl.BlockSpec((1, G), lambda b: (0, 0)),              # b0 = b_ih0 + b_hh0
            pl.BlockSpec((2 * H, G), lambda b: (0, 0)),          # stacked [wih1; whh1]
            pl.BlockSpec((1, G), lambda b: (0, 0)),              # b1 = b_ih1 + b_hh1
            pl.BlockSpec((H, 3), lambda b: (0, 0)),              # fc weight (pre-T)
            pl.BlockSpec((1, 3), lambda b: (0, 0)),              # fc bias
        ],
        out_specs=pl.BlockSpec((B_TILE, 3), lambda b: (b, 0)),
        compiler_params=pltpu.CompilerParams(
            dimension_semantics=("parallel",)),
    )(x, params["wih0"], params["whh0"], params["b0"],
      params["w1"], params["b1"], params["fcw"], params["fcb"])

    # drop batch padding; .squeeze() mirrors the PyTorch `x.squeeze()`
    return jnp.squeeze(out[:B])


def init_params(key, dimension, hidden):
    """Deterministic init mirroring PyTorch LSTM/Linear shapes (uniform(-k, k))."""
    H = hidden
    k_lstm = 1.0 / jnp.sqrt(H)
    k_fc = 1.0 / jnp.sqrt(H)
    keys = jax.random.split(key, 10)

    def u(k, shape, bound):
        return jax.random.uniform(k, shape, jnp.float32, -bound, bound)

    # PyTorch stores weight_ih_l* as (4H, in); pre-transposed here to (in, 4H).
    wih0 = u(keys[0], (dimension, 4 * H), k_lstm)
    whh0 = u(keys[1], (H, 4 * H), k_lstm)
    b0 = u(keys[2], (1, 4 * H), k_lstm) + u(keys[3], (1, 4 * H), k_lstm)  # b_ih + b_hh
    wih1 = u(keys[4], (H, 4 * H), k_lstm)
    whh1 = u(keys[5], (H, 4 * H), k_lstm)
    b1 = u(keys[6], (1, 4 * H), k_lstm) + u(keys[7], (1, 4 * H), k_lstm)
    w1 = jnp.concatenate([wih1, whh1], axis=0)    # (2H, 4H) pre-stacked for fused matmul
    fcw = u(keys[8], (H, 3), k_fc)                # Linear(H, 3) weight, pre-transposed
    fcb = u(keys[9], (1, 3), k_fc)
    # TODO(synk): weights kept f32; cast to bf16 at the MXU boundary if H is scaled up
    #             (keep gate/state math f32), per v6e/v7x guidance.
    return dict(wih0=wih0, whh0=whh0, b0=b0, w1=w1, b1=b1, fcw=fcw, fcb=fcb)


if __name__ == "__main__":
    # Small shapes: max_length (= seq len = hidden size) = 8, dimension = 16, batch = 4
    batch, seq, dimension = 4, 8, 16
    hidden = seq  # max_length = X_train.shape[1]

    key = jax.random.PRNGKey(0)
    k_x, k_p = jax.random.split(key)
    x = jax.random.normal(k_x, (batch, seq, dimension), jnp.float32)
    params = init_params(k_p, dimension, hidden)

    out = mylstm_forward(x, params)
    jax.block_until_ready(out)

    assert out.shape == (batch, 3)
    # softmax rows sum to 1
    assert jnp.allclose(jnp.sum(out, axis=-1), 1.0, atol=1e-5)
    print("KERNEL_OK")
</pallas_src>

<mosaic_0001>
module attributes {stable_mosaic.version = 11 : i64} {
  func.func @_lstm_kernel(%arg0: i32, %arg1: memref<8x8x16xf32, #tpu.memory_space<vmem>>, %arg2: memref<16x32xf32, #tpu.memory_space<vmem>>, %arg3: memref<8x32xf32, #tpu.memory_space<vmem>>, %arg4: memref<1x32xf32, #tpu.memory_space<vmem>>, %arg5: memref<16x32xf32, #tpu.memory_space<vmem>>, %arg6: memref<1x32xf32, #tpu.memory_space<vmem>>, %arg7: memref<8x3xf32, #tpu.memory_space<vmem>>, %arg8: memref<1x3xf32, #tpu.memory_space<vmem>>, %arg9: memref<8x3xf32, #tpu.memory_space<vmem>>) attributes {dimension_semantics = [#tpu.dimension_semantics<parallel>], iteration_bounds = array<i64: 1>, scalar_prefetch = 0 : i64, scratch_operands = 0 : i64, tpu.core_type = #tpu.core_type<tc>, window_params = [{transform_indices = @transform_0, window_bounds = array<i64: 8, 8, 16>}, {pipeline_mode = #tpu.pipeline_mode<synchronous>, transform_indices = @transform_1, window_bounds = array<i64: 16, 32>}, {pipeline_mode = #tpu.pipeline_mode<synchronous>, transform_indices = @transform_2, window_bounds = array<i64: 8, 32>}, {pipeline_mode = #tpu.pipeline_mode<synchronous>, transform_indices = @transform_3, window_bounds = array<i64: 1, 32>}, {pipeline_mode = #tpu.pipeline_mode<synchronous>, transform_indices = @transform_4, window_bounds = array<i64: 16, 32>}, {pipeline_mode = #tpu.pipeline_mode<synchronous>, transform_indices = @transform_5, window_bounds = array<i64: 1, 32>}, {pipeline_mode = #tpu.pipeline_mode<synchronous>, transform_indices = @transform_6, window_bounds = array<i64: 8, 3>}, {pipeline_mode = #tpu.pipeline_mode<synchronous>, transform_indices = @transform_7, window_bounds = array<i64: 1, 3>}, {transform_indices = @transform_8, window_bounds = array<i64: 8, 3>}]} {
    %c0 = arith.constant 0 : index
    %c0_0 = arith.constant 0 : index
    %c0_1 = arith.constant 0 : index
    %0 = vector.load %arg1[%c0, %c0_0, %c0_1] : memref<8x8x16xf32, #tpu.memory_space<vmem>>, vector<8x8x16xf32>
    %1 = vector.shape_cast %0 : vector<8x8x16xf32> to vector<64x16xf32>
    %c0_2 = arith.constant 0 : index
    %c0_3 = arith.constant 0 : index
    %2 = vector.load %arg2[%c0_2, %c0_3] : memref<16x32xf32, #tpu.memory_space<vmem>>, vector<16x32xf32>
    %cst = arith.constant dense<0.000000e+00> : vector<64x32xf32>
    %3 = tpu.matmul %1, %2, %cst {dimension_numbers = #tpu.dot_dimension_numbers<[1], [0], [0], [1], [0, 0, 1, 1], [], []>} : vector<64x16xf32>, vector<16x32xf32>, vector<64x32xf32> -> vector<64x32xf32>
    %c0_4 = arith.constant 0 : index
    %c0_5 = arith.constant 0 : index
    %4 = vector.load %arg4[%c0_4, %c0_5] : memref<1x32xf32, #tpu.memory_space<vmem>>, vector<1x32xf32>
    %5 = vector.broadcast %4 : vector<1x32xf32> to vector<64x32xf32>
    %6 = arith.addf %3, %5 : vector<64x32xf32>
    %7 = vector.shape_cast %6 : vector<64x32xf32> to vector<8x8x32xf32>
    %c0_6 = arith.constant 0 : index
    %c0_7 = arith.constant 0 : index
    %8 = vector.load %arg3[%c0_6, %c0_7] : memref<8x32xf32, #tpu.memory_space<vmem>>, vector<8x32xf32>
    %c0_8 = arith.constant 0 : index
    %c0_9 = arith.constant 0 : index
    %9 = vector.load %arg5[%c0_8, %c0_9] : memref<16x32xf32, #tpu.memory_space<vmem>>, vector<16x32xf32>
    %c0_10 = arith.constant 0 : index
    %c0_11 = arith.constant 0 : index
    %10 = vector.load %arg6[%c0_10, %c0_11] : memref<1x32xf32, #tpu.memory_space<vmem>>, vector<1x32xf32>
    %11 = vector.shape_cast %10 : vector<1x32xf32> to vector<1x32xf32>
    %12 = vector.broadcast %11 : vector<1x32xf32> to vector<8x32xf32>
    %cst_12 = arith.constant 0.000000e+00 : f32
    %13 = vector.broadcast %cst_12 : f32 to vector<8x8xf32>
    %14 = vector.extract_strided_slice %7 {offsets = [0, 0, 0], sizes = [8, 1, 32], strides = [1, 1, 1]} : vector<8x8x32xf32> to vector<8x1x32xf32>
    %15 = vector.shape_cast %14 : vector<8x1x32xf32> to vector<8x32xf32>
    %cst_13 = arith.constant dense<0.000000e+00> : vector<8x32xf32>
    %16 = tpu.matmul %13, %8, %cst_13 {dimension_numbers = #tpu.dot_dimension_numbers<[1], [0], [0], [1], [0, 0, 1, 1], [], []>} : vector<8x8xf32>, vector<8x32xf32>, vector<8x32xf32> -> vector<8x32xf32>
    %17 = arith.addf %15, %16 : vector<8x32xf32>
    %18 = arith.negf %17 : vector<8x32xf32>
    %19 = math.exp %18 : vector<8x32xf32>
    %cst_14 = arith.constant 1.000000e+00 : f32
    %20 = vector.broadcast %cst_14 : f32 to vector<8x32xf32>
    %21 = arith.addf %20, %19 : vector<8x32xf32>
    %22 = arith.divf %20, %21 : vector<8x32xf32>
    %23 = math.tanh %17 : vector<8x32xf32>
    %24 = vector.extract_strided_slice %22 {offsets = [0, 0], sizes = [8, 8], strides = [1, 1]} : vector<8x32xf32> to vector<8x8xf32>
    %25 = vector.extract_strided_slice %22 {offsets = [0, 8], sizes = [8, 8], strides = [1, 1]} : vector<8x32xf32> to vector<8x8xf32>
    %26 = vector.extract_strided_slice %23 {offsets = [0, 16], sizes = [8, 8], strides = [1, 1]} : vector<8x32xf32> to vector<8x8xf32>
    %27 = vector.extract_strided_slice %22 {offsets = [0, 24], sizes = [8, 8], strides = [1, 1]} : vector<8x32xf32> to vector<8x8xf32>
    %28 = arith.mulf %25, %13 : vector<8x8xf32>
    %29 = arith.mulf %24, %26 : vector<8x8xf32>
    %30 = arith.addf %28, %29 : vector<8x8xf32>
    %31 = math.tanh %30 : vector<8x8xf32>
    %32 = arith.mulf %27, %31 : vector<8x8xf32>
    %33 = tpu.concatenate %32, %13 in 1 : vector<8x8xf32>, vector<8x8xf32> -> vector<8x16xf32>
    %cst_15 = arith.constant dense<0.000000e+00> : vector<8x32xf32>
    %34 = tpu.matmul %33, %9, %cst_15 {dimension_numbers = #tpu.dot_dimension_numbers<[1], [0], [0], [1], [0, 0, 1, 1], [], []>} : vector<8x16xf32>, vector<16x32xf32>, vector<8x32xf32> -> vector<8x32xf32>
    %35 = arith.addf %34, %12 : vector<8x32xf32>
    %36 = arith.negf %35 : vector<8x32xf32>
    %37 = math.exp %36 : vector<8x32xf32>
    %cst_16 = arith.constant 1.000000e+00 : f32
    %38 = vector.broadcast %cst_16 : f32 to vector<8x32xf32>
    %39 = arith.addf %38, %37 : vector<8x32xf32>
    %40 = arith.divf %38, %39 : vector<8x32xf32>
    %41 = math.tanh %35 : vector<8x32xf32>
    %42 = vector.extract_strided_slice %40 {offsets = [0, 0], sizes = [8, 8], strides = [1, 1]} : vector<8x32xf32> to vector<8x8xf32>
    %43 = vector.extract_strided_slice %40 {offsets = [0, 8], sizes = [8, 8], strides = [1, 1]} : vector<8x32xf32> to vector<8x8xf32>
    %44 = vector.extract_strided_slice %41 {offsets = [0, 16], sizes = [8, 8], strides = [1, 1]} : vector<8x32xf32> to vector<8x8xf32>
    %45 = vector.extract_strided_slice %40 {offsets = [0, 24], sizes = [8, 8], strides = [1, 1]} : vector<8x32xf32> to vector<8x8xf32>
    %46 = arith.mulf %43, %13 : vector<8x8xf32>
    %47 = arith.mulf %42, %44 : vector<8x8xf32>
    %48 = arith.addf %46, %47 : vector<8x8xf32>
    %49 = math.tanh %48 : vector<8x8xf32>
    %50 = arith.mulf %45, %49 : vector<8x8xf32>
    %51 = vector.extract_strided_slice %7 {offsets = [0, 1, 0], sizes = [8, 1, 32], strides = [1, 1, 1]} : vector<8x8x32xf32> to vector<8x1x32xf32>
    %52 = vector.shape_cast %51 : vector<8x1x32xf32> to vector<8x32xf32>
    %cst_17 = arith.constant dense<0.000000e+00> : vector<8x32xf32>
    %53 = tpu.matmul %32, %8, %cst_17 {dimension_numbers = #tpu.dot_dimension_numbers<[1], [0], [0], [1], [0, 0, 1, 1], [], []>} : vector<8x8xf32>, vector<8x32xf32>, vector<8x32xf32> -> vector<8x32xf32>
    %54 = arith.addf %52, %53 : vector<8x32xf32>
    %55 = arith.negf %54 : vector<8x32xf32>
    %56 = math.exp %55 : vector<8x32xf32>
    %cst_18 = arith.constant 1.000000e+00 : f32
    %57 = vector.broadcast %cst_18 : f32 to vector<8x32xf32>
    %58 = arith.addf %57, %56 : vector<8x32xf32>
    %59 = arith.divf %57, %58 : vector<8x32xf32>
    %60 = math.tanh %54 : vector<8x32xf32>
    %61 = vector.extract_strided_slice %59 {offsets = [0, 0], sizes = [8, 8], strides = [1, 1]} : vector<8x32xf32> to vector<8x8xf32>
    %62 = vector.extract_strided_slice %59 {offsets = [0, 8], sizes = [8, 8], strides = [1, 1]} : vector<8x32xf32> to vector<8x8xf32>
    %63 = vector.extract_strided_slice %60 {offsets = [0, 16], sizes = [8, 8], strides = [1, 1]} : vector<8x32xf32> to vector<8x8xf32>
    %64 = vector.extract_strided_slice %59 {offsets = [0, 24], sizes = [8, 8], strides = [1, 1]} : vector<8x32xf32> to vector<8x8xf32>
    %65 = arith.mulf %62, %30 : vector<8x8xf32>
    %66 = arith.mulf %61, %63 : vector<8x8xf32>
    %67 = arith.addf %65, %66 : vector<8x8xf32>
    %68 = math.tanh %67 : vector<8x8xf32>
    %69 = arith.mulf %64, %68 : vector<8x8xf32>
    %70 = tpu.concatenate %69, %50 in 1 : vector<8x8xf32>, vector<8x8xf32> -> vector<8x16xf32>
    %cst_19 = arith.constant dense<0.000000e+00> : vector<8x32xf32>
    %71 = tpu.matmul %70, %9, %cst_19 {dimension_numbers = #tpu.dot_dimension_numbers<[1], [0], [0], [1], [0, 0, 1, 1], [], []>} : vector<8x16xf32>, vector<16x32xf32>, vector<8x32xf32> -> vector<8x32xf32>
    %72 = arith.addf %71, %12 : vector<8x32xf32>
    %73 = arith.negf %72 : vector<8x32xf32>
    %74 = math.exp %73 : vector<8x32xf32>
    %cst_20 = arith.constant 1.000000e+00 : f32
    %75 = vector.broadcast %cst_20 : f32 to vector<8x32xf32>
    %76 = arith.addf %75, %74 : vector<8x32xf32>
    %77 = arith.divf %75, %76 : vector<8x32xf32>
    %78 = math.tanh %72 : vector<8x32xf32>
    %79 = vector.extract_strided_slice %77 {offsets = [0, 0], sizes = [8, 8], strides = [1, 1]} : vector<8x32xf32> to vector<8x8xf32>
    %80 = vector.extract_strided_slice %77 {offsets = [0, 8], sizes = [8, 8], strides = [1, 1]} : vector<8x32xf32> to vector<8x8xf32>
    %81 = vector.extract_strided_slice %78 {offsets = [0, 16], sizes = [8, 8], strides = [1, 1]} : vector<8x32xf32> to vector<8x8xf32>
    %82 = vector.extract_strided_slice %77 {offsets = [0, 24], sizes = [8, 8], strides = [1, 1]} : vector<8x32xf32> to vector<8x8xf32>
    %83 = arith.mulf %80, %48 : vector<8x8xf32>
    %84 = arith.mulf %79, %81 : vector<8x8xf32>
    %85 = arith.addf %83, %84 : vector<8x8xf32>
    %86 = math.tanh %85 : vector<8x8xf32>
    %87 = arith.mulf %82, %86 : vector<8x8xf32>
    %88 = vector.extract_strided_slice %7 {offsets = [0, 2, 0], sizes = [8, 1, 32], strides = [1, 1, 1]} : vector<8x8x32xf32> to vector<8x1x32xf32>
    %89 = vector.shape_cast %88 : vector<8x1x32xf32> to vector<8x32xf32>
    %cst_21 = arith.constant dense<0.000000e+00> : vector<8x32xf32>
    %90 = tpu.matmul %69, %8, %cst_21 {dimension_numbers = #tpu.dot_dimension_numbers<[1], [0], [0], [1], [0, 0, 1, 1], [], []>} : vector<8x8xf32>, vector<8x32xf32>, vector<8x32xf32> -> vector<8x32xf32>
    %91 = arith.addf %89, %90 : vector<8x32xf32>
    %92 = arith.negf %91 : vector<8x32xf32>
    %93 = math.exp %92 : vector<8x32xf32>
    %cst_22 = arith.constant 1.000000e+00 : f32
    %94 = vector.broadcast %cst_22 : f32 to vector<8x32xf32>
    %95 = arith.addf %94, %93 : vector<8x32xf32>
    %96 = arith.divf %94, %95 : vector<8x32xf32>
    %97 = math.tanh %91 : vector<8x32xf32>
    %98 = vector.extract_strided_slice %96 {offsets = [0, 0], sizes = [8, 8], strides = [1, 1]} : vector<8x32xf32> to vector<8x8xf32>
    %99 = vector.extract_strided_slice %96 {offsets = [0, 8], sizes = [8, 8], strides = [1, 1]} : vector<8x32xf32> to vector<8x8xf32>
    %100 = vector.extract_strided_slice %97 {offsets = [0, 16], sizes = [8, 8], strides = [1, 1]} : vector<8x32xf32> to vector<8x8xf32>
    %101 = vector.extract_strided_slice %96 {offsets = [0, 24], sizes = [8, 8], strides = [1, 1]} : vector<8x32xf32> to vector<8x8xf32>
    %102 = arith.mulf %99, %67 : vector<8x8xf32>
    %103 = arith.mulf %98, %100 : vector<8x8xf32>
    %104 = arith.addf %102, %103 : vector<8x8xf32>
    %105 = math.tanh %104 : vector<8x8xf32>
    %106 = arith.mulf %101, %105 : vector<8x8xf32>
    %107 = tpu.concatenate %106, %87 in 1 : vector<8x8xf32>, vector<8x8xf32> -> vector<8x16xf32>
    %cst_23 = arith.constant dense<0.000000e+00> : vector<8x32xf32>
    %108 = tpu.matmul %107, %9, %cst_23 {dimension_numbers = #tpu.dot_dimension_numbers<[1], [0], [0], [1], [0, 0, 1, 1], [], []>} : vector<8x16xf32>, vector<16x32xf32>, vector<8x32xf32> -> vector<8x32xf32>
    %109 = arith.addf %108, %12 : vector<8x32xf32>
    %110 = arith.negf %109 : vector<8x32xf32>
    %111 = math.exp %110 : vector<8x32xf32>
    %cst_24 = arith.constant 1.000000e+00 : f32
    %112 = vector.broadcast %cst_24 : f32 to vector<8x32xf32>
    %113 = arith.addf %112, %111 : vector<8x32xf32>
    %114 = arith.divf %112, %113 : vector<8x32xf32>
    %115 = math.tanh %109 : vector<8x32xf32>
    %116 = vector.extract_strided_slice %114 {offsets = [0, 0], sizes = [8, 8], strides = [1, 1]} : vector<8x32xf32> to vector<8x8xf32>
    %117 = vector.extract_strided_slice %114 {offsets = [0, 8], sizes = [8, 8], strides = [1, 1]} : vector<8x32xf32> to vector<8x8xf32>
    %118 = vector.extract_strided_slice %115 {offsets = [0, 16], sizes = [8, 8], strides = [1, 1]} : vector<8x32xf32> to vector<8x8xf32>
    %119 = vector.extract_strided_slice %114 {offsets = [0, 24], sizes = [8, 8], strides = [1, 1]} : vector<8x32xf32> to vector<8x8xf32>
    %120 = arith.mulf %117, %85 : vector<8x8xf32>
    %121 = arith.mulf %116, %118 : vector<8x8xf32>
    %122 = arith.addf %120, %121 : vector<8x8xf32>
    %123 = math.tanh %122 : vector<8x8xf32>
    %124 = arith.mulf %119, %123 : vector<8x8xf32>
    %125 = vector.extract_strided_slice %7 {offsets = [0, 3, 0], sizes = [8, 1, 32], strides = [1, 1, 1]} : vector<8x8x32xf32> to vector<8x1x32xf32>
    %126 = vector.shape_cast %125 : vector<8x1x32xf32> to vector<8x32xf32>
    %cst_25 = arith.constant dense<0.000000e+00> : vector<8x32xf32>
    %127 = tpu.matmul %106, %8, %cst_25 {dimension_numbers = #tpu.dot_dimension_numbers<[1], [0], [0], [1], [0, 0, 1, 1], [], []>} : vector<8x8xf32>, vector<8x32xf32>, vector<8x32xf32> -> vector<8x32xf32>
    %128 = arith.addf %126, %127 : vector<8x32xf32>
    %129 = arith.negf %128 : vector<8x32xf32>
    %130 = math.exp %129 : vector<8x32xf32>
    %cst_26 = arith.constant 1.000000e+00 : f32
    %131 = vector.broadcast %cst_26 : f32 to vector<8x32xf32>
    %132 = arith.addf %131, %130 : vector<8x32xf32>
    %133 = arith.divf %131, %132 : vector<8x32xf32>
    %134 = math.tanh %128 : vector<8x32xf32>
    %135 = vector.extract_strided_slice %133 {offsets = [0, 0], sizes = [8, 8], strides = [1, 1]} : vector<8x32xf32> to vector<8x8xf32>
    %136 = vector.extract_strided_slice %133 {offsets = [0, 8], sizes = [8, 8], strides = [1, 1]} : vector<8x32xf32> to vector<8x8xf32>
    %137 = vector.extract_strided_slice %134 {offsets = [0, 16], sizes = [8, 8], strides = [1, 1]} : vector<8x32xf32> to vector<8x8xf32>
    %138 = vector.extract_strided_slice %133 {offsets = [0, 24], sizes = [8, 8], strides = [1, 1]} : vector<8x32xf32> to vector<8x8xf32>
    %139 = arith.mulf %136, %104 : vector<8x8xf32>
    %140 = arith.mulf %135, %137 : vector<8x8xf32>
    %141 = arith.addf %139, %140 : vector<8x8xf32>
    %142 = math.tanh %141 : vector<8x8xf32>
    %143 = arith.mulf %138, %142 : vector<8x8xf32>
    %144 = tpu.concatenate %143, %124 in 1 : vector<8x8xf32>, vector<8x8xf32> -> vector<8x16xf32>
    %cst_27 = arith.constant dense<0.000000e+00> : vector<8x32xf32>
    %145 = tpu.matmul %144, %9, %cst_27 {dimension_numbers = #tpu.dot_dimension_numbers<[1], [0], [0], [1], [0, 0, 1, 1], [], []>} : vector<8x16xf32>, vector<16x32xf32>, vector<8x32xf32> -> vector<8x32xf32>
    %146 = arith.addf %145, %12 : vector<8x32xf32>
    %147 = arith.negf %146 : vector<8x32xf32>
    %148 = math.exp %147 : vector<8x32xf32>
    %cst_28 = arith.constant 1.000000e+00 : f32
    %149 = vector.broadcast %cst_28 : f32 to vector<8x32xf32>
    %150 = arith.addf %149, %148 : vector<8x32xf32>
    %151 = arith.divf %149, %150 : vector<8x32xf32>
    %152 = math.tanh %146 : vector<8x32xf32>
    %153 = vector.extract_strided_slice %151 {offsets = [0, 0], sizes = [8, 8], strides = [1, 1]} : vector<8x32xf32> to vector<8x8xf32>
    %154 = vector.extract_strided_slice %151 {offsets = [0, 8], sizes = [8, 8], strides = [1, 1]} : vector<8x32xf32> to vector<8x8xf32>
    %155 = vector.extract_strided_slice %152 {offsets = [0, 16], sizes = [8, 8], strides = [1, 1]} : vector<8x32xf32> to vector<8x8xf32>
    %156 = vector.extract_strided_slice %151 {offsets = [0, 24], sizes = [8, 8], strides = [1, 1]} : vector<8x32xf32> to vector<8x8xf32>
    %157 = arith.mulf %154, %122 : vector<8x8xf32>
    %158 = arith.mulf %153, %155 : vector<8x8xf32>
    %159 = arith.addf %157, %158 : vector<8x8xf32>
    %160 = math.tanh %159 : vector<8x8xf32>
    %161 = arith.mulf %156, %160 : vector<8x8xf32>
    %162 = vector.extract_strided_slice %7 {offsets = [0, 4, 0], sizes = [8, 1, 32], strides = [1, 1, 1]} : vector<8x8x32xf32> to vector<8x1x32xf32>
    %163 = vector.shape_cast %162 : vector<8x1x32xf32> to vector<8x32xf32>
    %cst_29 = arith.constant dense<0.000000e+00> : vector<8x32xf32>
    %164 = tpu.matmul %143, %8, %cst_29 {dimension_numbers = #tpu.dot_dimension_numbers<[1], [0], [0], [1], [0, 0, 1, 1], [], []>} : vector<8x8xf32>, vector<8x32xf32>, vector<8x32xf32> -> vector<8x32xf32>
    %165 = arith.addf %163, %164 : vector<8x32xf32>
    %166 = arith.negf %165 : vector<8x32xf32>
    %167 = math.exp %166 : vector<8x32xf32>
    %cst_30 = arith.constant 1.000000e+00 : f32
    %168 = vector.broadcast %cst_30 : f32 to vector<8x32xf32>
    %169 = arith.addf %168, %167 : vector<8x32xf32>
    %170 = arith.divf %168, %169 : vector<8x32xf32>
    %171 = math.tanh %165 : vector<8x32xf32>
    %172 = vector.extract_strided_slice %170 {offsets = [0, 0], sizes = [8, 8], strides = [1, 1]} : vector<8x32xf32> to vector<8x8xf32>
    %173 = vector.extract_strided_slice %170 {offsets = [0, 8], sizes = [8, 8], strides = [1, 1]} : vector<8x32xf32> to vector<8x8xf32>
    %174 = vector.extract_strided_slice %171 {offsets = [0, 16], sizes = [8, 8], strides = [1, 1]} : vector<8x32xf32> to vector<8x8xf32>
    %175 = vector.extract_strided_slice %170 {offsets = [0, 24], sizes = [8, 8], strides = [1, 1]} : vector<8x32xf32> to vector<8x8xf32>
    %176 = arith.mulf %173, %141 : vector<8x8xf32>
    %177 = arith.mulf %172, %174 : vector<8x8xf32>
    %178 = arith.addf %176, %177 : vector<8x8xf32>
    %179 = math.tanh %178 : vector<8x8xf32>
    %180 = arith.mulf %175, %179 : vector<8x8xf32>
    %181 = tpu.concatenate %180, %161 in 1 : vector<8x8xf32>, vector<8x8xf32> -> vector<8x16xf32>
    %cst_31 = arith.constant dense<0.000000e+00> : vector<8x32xf32>
    %182 = tpu.matmul %181, %9, %cst_31 {dimension_numbers = #tpu.dot_dimension_numbers<[1], [0], [0], [1], [0, 0, 1, 1], [], []>} : vector<8x16xf32>, vector<16x32xf32>, vector<8x32xf32> -> vector<8x32xf32>
    %183 = arith.addf %182, %12 : vector<8x32xf32>
    %184 = arith.negf %183 : vector<8x32xf32>
    %185 = math.exp %184 : vector<8x32xf32>
    %cst_32 = arith.constant 1.000000e+00 : f32
    %186 = vector.broadcast %cst_32 : f32 to vector<8x32xf32>
    %187 = arith.addf %186, %185 : vector<8x32xf32>
    %188 = arith.divf %186, %187 : vector<8x32xf32>
    %189 = math.tanh %183 : vector<8x32xf32>
    %190 = vector.extract_strided_slice %188 {offsets = [0, 0], sizes = [8, 8], strides = [1, 1]} : vector<8x32xf32> to vector<8x8xf32>
    %191 = vector.extract_strided_slice %188 {offsets = [0, 8], sizes = [8, 8], strides = [1, 1]} : vector<8x32xf32> to vector<8x8xf32>
    %192 = vector.extract_strided_slice %189 {offsets = [0, 16], sizes = [8, 8], strides = [1, 1]} : vector<8x32xf32> to vector<8x8xf32>
    %193 = vector.extract_strided_slice %188 {offsets = [0, 24], sizes = [8, 8], strides = [1, 1]} : vector<8x32xf32> to vector<8x8xf32>
    %194 = arith.mulf %191, %159 : vector<8x8xf32>
    %195 = arith.mulf %190, %192 : vector<8x8xf32>
    %196 = arith.addf %194, %195 : vector<8x8xf32>
    %197 = math.tanh %196 : vector<8x8xf32>
    %198 = arith.mulf %193, %197 : vector<8x8xf32>
    %199 = vector.extract_strided_slice %7 {offsets = [0, 5, 0], sizes = [8, 1, 32], strides = [1, 1, 1]} : vector<8x8x32xf32> to vector<8x1x32xf32>
    %200 = vector.shape_cast %199 : vector<8x1x32xf32> to vector<8x32xf32>
    %cst_33 = arith.constant dense<0.000000e+00> : vector<8x32xf32>
    %201 = tpu.matmul %180, %8, %cst_33 {dimension_numbers = #tpu.dot_dimension_numbers<[1], [0], [0], [1], [0, 0, 1, 1], [], []>} : vector<8x8xf32>, vector<8x32xf32>, vector<8x32xf32> -> vector<8x32xf32>
    %202 = arith.addf %200, %201 : vector<8x32xf32>
    %203 = arith.negf %202 : vector<8x32xf32>
    %204 = math.exp %203 : vector<8x32xf32>
    %cst_34 = arith.constant 1.000000e+00 : f32
    %205 = vector.broadcast %cst_34 : f32 to vector<8x32xf32>
    %206 = arith.addf %205, %204 : vector<8x32xf32>
    %207 = arith.divf %205, %206 : vector<8x32xf32>
    %208 = math.tanh %202 : vector<8x32xf32>
    %209 = vector.extract_strided_slice %207 {offsets = [0, 0], sizes = [8, 8], strides = [1, 1]} : vector<8x32xf32> to vector<8x8xf32>
    %210 = vector.extract_strided_slice %207 {offsets = [0, 8], sizes = [8, 8], strides = [1, 1]} : vector<8x32xf32> to vector<8x8xf32>
    %211 = vector.extract_strided_slice %208 {offsets = [0, 16], sizes = [8, 8], strides = [1, 1]} : vector<8x32xf32> to vector<8x8xf32>
    %212 = vector.extract_strided_slice %207 {offsets = [0, 24], sizes = [8, 8], strides = [1, 1]} : vector<8x32xf32> to vector<8x8xf32>
    %213 = arith.mulf %210, %178 : vector<8x8xf32>
    %214 = arith.mulf %209, %211 : vector<8x8xf32>
    %215 = arith.addf %213, %214 : vector<8x8xf32>
    %216 = math.tanh %215 : vector<8x8xf32>
    %217 = arith.mulf %212, %216 : vector<8x8xf32>
    %218 = tpu.concatenate %217, %198 in 1 : vector<8x8xf32>, vector<8x8xf32> -> vector<8x16xf32>
    %cst_35 = arith.constant dense<0.000000e+00> : vector<8x32xf32>
    %219 = tpu.matmul %218, %9, %cst_35 {dimension_numbers = #tpu.dot_dimension_numbers<[1], [0], [0], [1], [0, 0, 1, 1], [], []>} : vector<8x16xf32>, vector<16x32xf32>, vector<8x32xf32> -> vector<8x32xf32>
    %220 = arith.addf %219, %12 : vector<8x32xf32>
    %221 = arith.negf %220 : vector<8x32xf32>
    %222 = math.exp %221 : vector<8x32xf32>
    %cst_36 = arith.constant 1.000000e+00 : f32
    %223 = vector.broadcast %cst_36 : f32 to vector<8x32xf32>
    %224 = arith.addf %223, %222 : vector<8x32xf32>
    %225 = arith.divf %223, %224 : vector<8x32xf32>
    %226 = math.tanh %220 : vector<8x32xf32>
    %227 = vector.extract_strided_slice %225 {offsets = [0, 0], sizes = [8, 8], strides = [1, 1]} : vector<8x32xf32> to vector<8x8xf32>
    %228 = vector.extract_strided_slice %225 {offsets = [0, 8], sizes = [8, 8], strides = [1, 1]} : vector<8x32xf32> to vector<8x8xf32>
    %229 = vector.extract_strided_slice %226 {offsets = [0, 16], sizes = [8, 8], strides = [1, 1]} : vector<8x32xf32> to vector<8x8xf32>
    %230 = vector.extract_strided_slice %225 {offsets = [0, 24], sizes = [8, 8], strides = [1, 1]} : vector<8x32xf32> to vector<8x8xf32>
    %231 = arith.mulf %228, %196 : vector<8x8xf32>
    %232 = arith.mulf %227, %229 : vector<8x8xf32>
    %233 = arith.addf %231, %232 : vector<8x8xf32>
    %234 = math.tanh %233 : vector<8x8xf32>
    %235 = arith.mulf %230, %234 : vector<8x8xf32>
    %236 = vector.extract_strided_slice %7 {offsets = [0, 6, 0], sizes = [8, 1, 32], strides = [1, 1, 1]} : vector<8x8x32xf32> to vector<8x1x32xf32>
    %237 = vector.shape_cast %236 : vector<8x1x32xf32> to vector<8x32xf32>
    %cst_37 = arith.constant dense<0.000000e+00> : vector<8x32xf32>
    %238 = tpu.matmul %217, %8, %cst_37 {dimension_numbers = #tpu.dot_dimension_numbers<[1], [0], [0], [1], [0, 0, 1, 1], [], []>} : vector<8x8xf32>, vector<8x32xf32>, vector<8x32xf32> -> vector<8x32xf32>
    %239 = arith.addf %237, %238 : vector<8x32xf32>
    %240 = arith.negf %239 : vector<8x32xf32>
    %241 = math.exp %240 : vector<8x32xf32>
    %cst_38 = arith.constant 1.000000e+00 : f32
    %242 = vector.broadcast %cst_38 : f32 to vector<8x32xf32>
    %243 = arith.addf %242, %241 : vector<8x32xf32>
    %244 = arith.divf %242, %243 : vector<8x32xf32>
    %245 = math.tanh %239 : vector<8x32xf32>
    %246 = vector.extract_strided_slice %244 {offsets = [0, 0], sizes = [8, 8], strides = [1, 1]} : vector<8x32xf32> to vector<8x8xf32>
    %247 = vector.extract_strided_slice %244 {offsets = [0, 8], sizes = [8, 8], strides = [1, 1]} : vector<8x32xf32> to vector<8x8xf32>
    %248 = vector.extract_strided_slice %245 {offsets = [0, 16], sizes = [8, 8], strides = [1, 1]} : vector<8x32xf32> to vector<8x8xf32>
    %249 = vector.extract_strided_slice %244 {offsets = [0, 24], sizes = [8, 8], strides = [1, 1]} : vector<8x32xf32> to vector<8x8xf32>
    %250 = arith.mulf %247, %215 : vector<8x8xf32>
    %251 = arith.mulf %246, %248 : vector<8x8xf32>
    %252 = arith.addf %250, %251 : vector<8x8xf32>
    %253 = math.tanh %252 : vector<8x8xf32>
    %254 = arith.mulf %249, %253 : vector<8x8xf32>
    %255 = tpu.concatenate %254, %235 in 1 : vector<8x8xf32>, vector<8x8xf32> -> vector<8x16xf32>
    %cst_39 = arith.constant dense<0.000000e+00> : vector<8x32xf32>
    %256 = tpu.matmul %255, %9, %cst_39 {dimension_numbers = #tpu.dot_dimension_numbers<[1], [0], [0], [1], [0, 0, 1, 1], [], []>} : vector<8x16xf32>, vector<16x32xf32>, vector<8x32xf32> -> vector<8x32xf32>
    %257 = arith.addf %256, %12 : vector<8x32xf32>
    %258 = arith.negf %257 : vector<8x32xf32>
    %259 = math.exp %258 : vector<8x32xf32>
    %cst_40 = arith.constant 1.000000e+00 : f32
    %260 = vector.broadcast %cst_40 : f32 to vector<8x32xf32>
    %261 = arith.addf %260, %259 : vector<8x32xf32>
    %262 = arith.divf %260, %261 : vector<8x32xf32>
    %263 = math.tanh %257 : vector<8x32xf32>
    %264 = vector.extract_strided_slice %262 {offsets = [0, 0], sizes = [8, 8], strides = [1, 1]} : vector<8x32xf32> to vector<8x8xf32>
    %265 = vector.extract_strided_slice %262 {offsets = [0, 8], sizes = [8, 8], strides = [1, 1]} : vector<8x32xf32> to vector<8x8xf32>
    %266 = vector.extract_strided_slice %263 {offsets = [0, 16], sizes = [8, 8], strides = [1, 1]} : vector<8x32xf32> to vector<8x8xf32>
    %267 = vector.extract_strided_slice %262 {offsets = [0, 24], sizes = [8, 8], strides = [1, 1]} : vector<8x32xf32> to vector<8x8xf32>
    %268 = arith.mulf %265, %233 : vector<8x8xf32>
    %269 = arith.mulf %264, %266 : vector<8x8xf32>
    %270 = arith.addf %268, %269 : vector<8x8xf32>
    %271 = math.tanh %270 : vector<8x8xf32>
    %272 = arith.mulf %267, %271 : vector<8x8xf32>
    %273 = vector.extract_strided_slice %7 {offsets = [0, 7, 0], sizes = [8, 1, 32], strides = [1, 1, 1]} : vector<8x8x32xf32> to vector<8x1x32xf32>
    %274 = vector.shape_cast %273 : vector<8x1x32xf32> to vector<8x32xf32>
    %cst_41 = arith.constant dense<0.000000e+00> : vector<8x32xf32>
    %275 = tpu.matmul %254, %8, %cst_41 {dimension_numbers = #tpu.dot_dimension_numbers<[1], [0], [0], [1], [0, 0, 1, 1], [], []>} : vector<8x8xf32>, vector<8x32xf32>, vector<8x32xf32> -> vector<8x32xf32>
    %276 = arith.addf %274, %275 : vector<8x32xf32>
    %277 = arith.negf %276 : vector<8x32xf32>
    %278 = math.exp %277 : vector<8x32xf32>
    %cst_42 = arith.constant 1.000000e+00 : f32
    %279 = vector.broadcast %cst_42 : f32 to vector<8x32xf32>
    %280 = arith.addf %279, %278 : vector<8x32xf32>
    %281 = arith.divf %279, %280 : vector<8x32xf32>
    %282 = math.tanh %276 : vector<8x32xf32>
    %283 = vector.extract_strided_slice %281 {offsets = [0, 0], sizes = [8, 8], strides = [1, 1]} : vector<8x32xf32> to vector<8x8xf32>
    %284 = vector.extract_strided_slice %281 {offsets = [0, 8], sizes = [8, 8], strides = [1, 1]} : vector<8x32xf32> to vector<8x8xf32>
    %285 = vector.extract_strided_slice %282 {offsets = [0, 16], sizes = [8, 8], strides = [1, 1]} : vector<8x32xf32> to vector<8x8xf32>
    %286 = vector.extract_strided_slice %281 {offsets = [0, 24], sizes = [8, 8], strides = [1, 1]} : vector<8x32xf32> to vector<8x8xf32>
    %287 = arith.mulf %284, %252 : vector<8x8xf32>
    %288 = arith.mulf %283, %285 : vector<8x8xf32>
    %289 = arith.addf %287, %288 : vector<8x8xf32>
    %290 = math.tanh %289 : vector<8x8xf32>
    %291 = arith.mulf %286, %290 : vector<8x8xf32>
    %292 = tpu.concatenate %291, %272 in 1 : vector<8x8xf32>, vector<8x8xf32> -> vector<8x16xf32>
    %cst_43 = arith.constant dense<0.000000e+00> : vector<8x32xf32>
    %293 = tpu.matmul %292, %9, %cst_43 {dimension_numbers = #tpu.dot_dimension_numbers<[1], [0], [0], [1], [0, 0, 1, 1], [], []>} : vector<8x16xf32>, vector<16x32xf32>, vector<8x32xf32> -> vector<8x32xf32>
    %294 = arith.addf %293, %12 : vector<8x32xf32>
    %295 = arith.negf %294 : vector<8x32xf32>
    %296 = math.exp %295 : vector<8x32xf32>
    %cst_44 = arith.constant 1.000000e+00 : f32
    %297 = vector.broadcast %cst_44 : f32 to vector<8x32xf32>
    %298 = arith.addf %297, %296 : vector<8x32xf32>
    %299 = arith.divf %297, %298 : vector<8x32xf32>
    %300 = math.tanh %294 : vector<8x32xf32>
    %301 = vector.extract_strided_slice %299 {offsets = [0, 0], sizes = [8, 8], strides = [1, 1]} : vector<8x32xf32> to vector<8x8xf32>
    %302 = vector.extract_strided_slice %299 {offsets = [0, 8], sizes = [8, 8], strides = [1, 1]} : vector<8x32xf32> to vector<8x8xf32>
    %303 = vector.extract_strided_slice %300 {offsets = [0, 16], sizes = [8, 8], strides = [1, 1]} : vector<8x32xf32> to vector<8x8xf32>
    %304 = vector.extract_strided_slice %299 {offsets = [0, 24], sizes = [8, 8], strides = [1, 1]} : vector<8x32xf32> to vector<8x8xf32>
    %305 = arith.mulf %302, %270 : vector<8x8xf32>
    %306 = arith.mulf %301, %303 : vector<8x8xf32>
    %307 = arith.addf %305, %306 : vector<8x8xf32>
    %308 = math.tanh %307 : vector<8x8xf32>
    %309 = arith.mulf %304, %308 : vector<8x8xf32>
    %c0_45 = arith.constant 0 : index
    %c0_46 = arith.constant 0 : index
    %310 = vector.load %arg7[%c0_45, %c0_46] : memref<8x3xf32, #tpu.memory_space<vmem>>, vector<8x3xf32>
    %cst_47 = arith.constant dense<0.000000e+00> : vector<8x3xf32>
    %311 = tpu.matmul %309, %310, %cst_47 {dimension_numbers = #tpu.dot_dimension_numbers<[1], [0], [0], [1], [0, 0, 1, 1], [], []>} : vector<8x8xf32>, vector<8x3xf32>, vector<8x3xf32> -> vector<8x3xf32>
    %c0_48 = arith.constant 0 : index
    %c0_49 = arith.constant 0 : index
    %312 = vector.load %arg8[%c0_48, %c0_49] : memref<1x3xf32, #tpu.memory_space<vmem>>, vector<1x3xf32>
    %313 = vector.broadcast %312 : vector<1x3xf32> to vector<8x3xf32>
    %314 = arith.addf %311, %313 : vector<8x3xf32>
    %cst_50 = arith.constant dense<0xFF800000> : vector<8xf32>
    %315 = vector.multi_reduction <maximumf>, %314, %cst_50 [1] : vector<8x3xf32> to vector<8xf32>
    %316 = vector.shape_cast %315 : vector<8xf32> to vector<8x1xf32>
    %317 = vector.broadcast %316 : vector<8x1xf32> to vector<8x3xf32>
    %318 = arith.subf %314, %317 : vector<8x3xf32>
    %319 = math.exp %318 : vector<8x3xf32>
    %cst_51 = arith.constant dense<0.000000e+00> : vector<8xf32>
    %320 = vector.multi_reduction <add>, %319, %cst_51 [1] : vector<8x3xf32> to vector<8xf32>
    %321 = vector.shape_cast %320 : vector<8xf32> to vector<8x1xf32>
    %322 = vector.broadcast %321 : vector<8x1xf32> to vector<8x3xf32>
    %323 = arith.divf %319, %322 : vector<8x3xf32>
    %c0_52 = arith.constant 0 : index
    %c0_53 = arith.constant 0 : index
    %324 = vector.load %arg9[%c0_52, %c0_53] : memref<8x3xf32, #tpu.memory_space<vmem>>, vector<8x3xf32>
    tpu.vector_store %arg9[%c0_52, %c0_53], %323 {strides = array<i32>} : memref<8x3xf32, #tpu.memory_space<vmem>>, vector<8x3xf32>,
    return
  }
  func.func @transform_0(%arg0: i32) -> (i32, i32, i32) {
    %c0_i32 = arith.constant 0 : i32
    %c0_i32_0 = arith.constant 0 : i32
    %c0_i32_1 = arith.constant 0 : i32
    return %arg0, %c0_i32, %c0_i32_0 : i32, i32, i32
  }
  func.func @transform_1(%arg0: i32) -> (i32, i32) {
    %c0_i32 = arith.constant 0 : i32
    %c0_i32_0 = arith.constant 0 : i32
    %c0_i32_1 = arith.constant 0 : i32
    return %c0_i32, %c0_i32_0 : i32, i32
  }
  func.func @transform_2(%arg0: i32) -> (i32, i32) {
    %c0_i32 = arith.constant 0 : i32
    %c0_i32_0 = arith.constant 0 : i32
    %c0_i32_1 = arith.constant 0 : i32
    return %c0_i32, %c0_i32_0 : i32, i32
  }
  func.func @transform_3(%arg0: i32) -> (i32, i32) {
    %c0_i32 = arith.constant 0 : i32
    %c0_i32_0 = arith.constant 0 : i32
    %c0_i32_1 = arith.constant 0 : i32
    return %c0_i32, %c0_i32_0 : i32, i32
  }
  func.func @transform_4(%arg0: i32) -> (i32, i32) {
    %c0_i32 = arith.constant 0 : i32
    %c0_i32_0 = arith.constant 0 : i32
    %c0_i32_1 = arith.constant 0 : i32
    return %c0_i32, %c0_i32_0 : i32, i32
  }
  func.func @transform_5(%arg0: i32) -> (i32, i32) {
    %c0_i32 = arith.constant 0 : i32
    %c0_i32_0 = arith.constant 0 : i32
    %c0_i32_1 = arith.constant 0 : i32
    return %c0_i32, %c0_i32_0 : i32, i32
  }
  func.func @transform_6(%arg0: i32) -> (i32, i32) {
    %c0_i32 = arith.constant 0 : i32
    %c0_i32_0 = arith.constant 0 : i32
    %c0_i32_1 = arith.constant 0 : i32
    return %c0_i32, %c0_i32_0 : i32, i32
  }
  func.func @transform_7(%arg0: i32) -> (i32, i32) {
    %c0_i32 = arith.constant 0 : i32
    %c0_i32_0 = arith.constant 0 : i32
    %c0_i32_1 = arith.constant 0 : i32
    return %c0_i32, %c0_i32_0 : i32, i32
  }
  func.func @transform_8(%arg0: i32) -> (i32, i32) {
    %c0_i32 = arith.constant 0 : i32
    %c0_i32_0 = arith.constant 0 : i32
    return %arg0, %c0_i32 : i32, i32
  }
}

</mosaic_0001>

<llo_original>
// kernel: tpu_custom_call.1
$region0: #{tpu_custom_call.1}
  #allocation0 [shape = 'u32[]', space=smem, size = 0x4, offset = 0x4, fixed_abs, tag = 'smem constant byte address 0x4 - core index']
  #allocation1 [shape = 'u32[144,128]{1,0:T(1,128)}', space=vmem, size = 0x12000, scoped, tag = 'internal scratch']
  %s0 = inlined_call_operand.hbm [shape: f32[8,8,16], index: 0, kind: input, shape index: {}]
  %s1 = inlined_call_operand.hbm [shape: f32[16,32], index: 1, kind: input, shape index: {}]
  %s2 = inlined_call_operand.vmem [shape: f32[8,32], index: 2, kind: input, shape index: {}]
  %s3 = inlined_call_operand.vmem [shape: f32[1,32], index: 3, kind: input, shape index: {}]
  %s4 = inlined_call_operand.vmem [shape: f32[16,32], index: 4, kind: input, shape index: {}]
  %s5 = inlined_call_operand.vmem [shape: f32[1,32], index: 5, kind: input, shape index: {}]
  %s6 = inlined_call_operand.vmem [shape: f32[8,3], index: 6, kind: input, shape index: {}]
  %s7 = inlined_call_operand.vmem [shape: f32[1,3], index: 7, kind: input, shape index: {}]
  %s8 = inlined_call_operand.vmem [shape: f32[8,3], index: 8, kind: output, shape index: {}]
  %s9 = sld [smem:[#allocation0]]
  $region50: #{tpu_custom_call.1} parent=0
    _
  %s11 = ssub.s32 1, %s9
  %s12 = scalar_select 0, %s11, %s9
  $region1: #{tpu_custom_call.1} parent=0
    #allocation2 [shape = 'u8[32768]{0}', space=vmem, size = 0x8000, scoped, tag = 'input window, operand 0, single buffered']
    #allocation3 [shape = 's32[1]{0}', space=sflag, size = 0x4, scoped, tag = 'scoped memory for tpu_custom_call.1']
    #allocation4 [shape = 'u8[8192]{0}', space=vmem, size = 0x2000, scoped, tag = 'input window, operand 1, single buffered']
    #allocation5 [shape = 's32[1]{0}', space=sflag, size = 0x4, scoped, tag = 'scoped memory for tpu_custom_call.1']
    %13 = vsyncpa [#allocation3], 0
    %14 = vsyncpa [#allocation5], 0
    // Predicated region
    $region2: #{tpu_custom_call.1} parent=1 // pred_check
      _
    $region3: #{tpu_custom_call.1} parent=1 // pred_check_branch
      %16 = sbr.rel (0) target = $region5
    $region4: #{tpu_custom_call.1} parent=1 // pred_region
      %s18 = ssub.s32 1024, 1024
      %19 = vsyncadd [#allocation3], %s18
      %s20 = sshll.u32 [#allocation2], 4
      %s21 = int_to_ptr.vmem [resolvable:$true] %s20
      %26 = dma.hbm_to_vmem [thread:$0]  %s0, 1024, %s21, [#allocation3], 128, 128, 8
    $region5: #{tpu_custom_call.1} parent=1 // pred_fallthru
      _
    // Predicated region
    $region6: #{tpu_custom_call.1} parent=1 // pred_check
      _
    $region7: #{tpu_custom_call.1} parent=1 // pred_check_branch
      %28 = sbr.rel (0) target = $region9
    $region8: #{tpu_custom_call.1} parent=1 // pred_region
      %s30 = ssub.s32 256, 256
      %31 = vsyncadd [#allocation5], %s30
      %s32 = sshll.u32 [#allocation4], 4
      %s33 = int_to_ptr.vmem [resolvable:$true] %s32
      %38 = dma.hbm_to_vmem [thread:$0]  %s1, 256, %s33, [#allocation5], 128, 128, 8
    $region9: #{tpu_custom_call.1} parent=1 // pred_fallthru
      _
    // Predicated region
    $region10: #{tpu_custom_call.1} parent=1 // pred_check
      _
    $region11: #{tpu_custom_call.1} parent=1 // pred_check_branch
      %40 = sbr.rel (0) target = $region13
    $region12: #{tpu_custom_call.1} parent=1 // pred_region
      _
    $region13: #{tpu_custom_call.1} parent=1 // pred_fallthru
      _
    // Predicated region
    $region14: #{tpu_custom_call.1} parent=1 // pred_check
      _
    $region15: #{tpu_custom_call.1} parent=1 // pred_check_branch
      %42 = sbr.rel (0) target = $region17
    $region16: #{tpu_custom_call.1} parent=1 // pred_region
      _
    $region17: #{tpu_custom_call.1} parent=1 // pred_fallthru
      _
    // Predicated region
    $region18: #{tpu_custom_call.1} parent=1 // pred_check
      _
    $region19: #{tpu_custom_call.1} parent=1 // pred_check_branch
      %44 = sbr.rel (0) target = $region21
    $region20: #{tpu_custom_call.1} parent=1 // pred_region
      _
    $region21: #{tpu_custom_call.1} parent=1 // pred_fallthru
      _
    // Predicated region
    $region22: #{tpu_custom_call.1} parent=1 // pred_check
      _
    $region23: #{tpu_custom_call.1} parent=1 // pred_check_branch
      %46 = sbr.rel (0) target = $region25
    $region24: #{tpu_custom_call.1} parent=1 // pred_region
      _
    $region25: #{tpu_custom_call.1} parent=1 // pred_fallthru
      _
    // Predicated region
    $region26: #{tpu_custom_call.1} parent=1 // pred_check
      _
    $region27: #{tpu_custom_call.1} parent=1 // pred_check_branch
      %48 = sbr.rel (0) target = $region29
    $region28: #{tpu_custom_call.1} parent=1 // pred_region
      _
    $region29: #{tpu_custom_call.1} parent=1 // pred_fallthru
      _
    // Predicated region
    $region30: #{tpu_custom_call.1} parent=1 // pred_check
      _
    $region31: #{tpu_custom_call.1} parent=1 // pred_check_branch
      %50 = sbr.rel (0) target = $region33
    $region32: #{tpu_custom_call.1} parent=1 // pred_region
      _
    $region33: #{tpu_custom_call.1} parent=1 // pred_fallthru
      _
    // Predicated region
    $region34: #{tpu_custom_call.1} parent=1 // pred_check
      _
    $region35: #{tpu_custom_call.1} parent=1 // pred_check_branch
      %52 = sbr.rel (0) target = $region37
    $region36: #{tpu_custom_call.1} parent=1 // pred_region
      %53 = dma.done [#allocation3], 1024
    $region37: #{tpu_custom_call.1} parent=1 // pred_fallthru
      _
    // Predicated region
    $region38: #{tpu_custom_call.1} parent=1 // pred_check
      _
    $region39: #{tpu_custom_call.1} parent=1 // pred_check_branch
      %55 = sbr.rel (0) target = $region41
    $region40: #{tpu_custom_call.1} parent=1 // pred_region
      %56 = dma.done [#allocation5], 256
    $region41: #{tpu_custom_call.1} parent=1 // pred_fallthru
      _
    %v57 = vld [vmem:[#allocation2] sm:$0xff]
    %v58 = vld [vmem:[#allocation2 + $0x8] sm:$0xff]
    %v59 = vld [vmem:[#allocation2 + $0x10] sm:$0xff]
    %v60 = vld [vmem:[#allocation2 + $0x18] sm:$0xff]
    %v61 = vld [vmem:[#allocation2 + $0x20] sm:$0xff]
    %v62 = vld [vmem:[#allocation2 + $0x28] sm:$0xff]
    %v63 = vld [vmem:[#allocation2 + $0x30] sm:$0xff]
    %v64 = vld [vmem:[#allocation2 + $0x38] sm:$0xff]
    %v65 = vld [vmem:[#allocation4] sm:$0xff]
    %v66 = vld [vmem:[#allocation4 + $0x8] sm:$0xff]
    %v67 = vld [vmem:[%s3] sm:$0x1]
    %v69 = vlaneseq
    %v70 = vshrl.u32 %v69, 7
    %v71 = vsub.s32 0, %v70
    %v72 = vrot.slane %v67, %v71
    %vm74 = vcmask 130048
    %v76 = vsel %vm74, %v57, 0
    %v79 = vsel %vm74, %v58, 0
    %v82 = vsel %vm74, %v59, 0
    %v85 = vsel %vm74, %v60, 0
    %v88 = vsel %vm74, %v61, 0
    %v91 = vsel %vm74, %v62, 0
    %v94 = vsel %vm74, %v63, 0
    %v97 = vsel %vm74, %v64, 0
    %99 = vmatprep.subr.mxu0 0.0
    %100 = vmatpush1.msra.mxu0 %v65
    %101 = vmatprep.subr.mxu0 0.0
    %102 = vmatpush1.msra.mxu0 %v66
    %103 = vmatprep.subr.mxu0 0.0
    %104 = vmatpush1.msra.mxu0 0.0
    %105 = vmatprep.subr.mxu0 0.0
    %106 = vmatpush1.msra.mxu0 0.0
    %107 = vmatprep.subr.mxu0 0.0
    %108 = vmatpush1.msra.mxu0 0.0
    %109 = vmatprep.subr.mxu0 0.0
    %110 = vmatpush1.msra.mxu0 0.0
    %111 = vmatprep.subr.mxu0 0.0
    %112 = vmatpush1.msra.mxu0 0.0
    %113 = vmatprep.subr.mxu0 0.0
    %114 = vmatpush1.msra.mxu0 0.0
    %115 = vmatprep.subr.mxu0 0.0
    %116 = vmatpush1.msra.mxu0 0.0
    %117 = vmatprep.subr.mxu0 0.0
    %118 = vmatpush1.msra.mxu0 0.0
    %119 = vmatprep.subr.mxu0 0.0
    %120 = vmatpush1.msra.mxu0 0.0
    %121 = vmatprep.subr.mxu0 0.0
    %122 = vmatpush1.msra.mxu0 0.0
    %123 = vmatprep.subr.mxu0 0.0
    %124 = vmatpush1.msra.mxu0 0.0
    %125 = vmatprep.subr.mxu0 0.0
    %126 = vmatpush1.msra.mxu0 0.0
    %127 = vmatprep.subr.mxu0 0.0
    %128 = vmatpush1.msra.mxu0 0.0
    %129 = vmatprep.subr.mxu0 0.0
    %130 = vmatpush1.msra.mxu0 0.0
    %131 = vmatprep.subr.mxu0 0.0
    %132 = vmatpush1.msra.mxu0 0.0
    %133 = vmatprep.subr.mxu0 0.0
    %134 = vmatpush1.msra.mxu0 0.0
    %135 = vmatprep.subr.mxu0 0.0
    %136 = vmatpush1.msra.mxu0 0.0
    %137 = vmatprep.subr.mxu0 0.0
    %138 = vmatpush1.msra.mxu0 0.0
    %139 = vmatprep.subr.mxu0 0.0
    %140 = vmatpush1.msra.mxu0 0.0
    %141 = vmatprep.subr.mxu0 0.0
    %142 = vmatpush1.msra.mxu0 0.0
    %143 = vmatprep.subr.mxu0 0.0
    %144 = vmatpush1.msra.mxu0 0.0
    %145 = vmatprep.subr.mxu0 0.0
    %146 = vmatpush1.msra.mxu0 0.0
    %147 = vmatprep.subr.mxu0 0.0
    %148 = vmatpush1.msra.mxu0 0.0
    %149 = vmatprep.subr.mxu0 0.0
    %150 = vmatpush1.msra.mxu0 0.0
    %151 = vmatprep.subr.mxu0 0.0
    %152 = vmatpush1.msra.mxu0 0.0
    %153 = vmatprep.subr.mxu0 0.0
    %154 = vmatpush1.msra.mxu0 0.0
    %155 = vmatprep.subr.mxu0 0.0
    %156 = vmatpush1.msra.mxu0 0.0
    %157 = vmatprep.subr.mxu0 0.0
    %158 = vmatpush1.msra.mxu0 0.0
    %159 = vmatprep.subr.mxu0 0.0
    %160 = vmatpush1.msra.mxu0 0.0
    %161 = vmatprep.subr.mxu0 0.0
    %162 = vmatpush1.msra.mxu0 0.0
    %163 = vmatprep.mubr.f32.mxu0 0.0
    %164 = vmatmul.mubr.f32.gmra.mrb[0].mxu0 %v76
    %v165 = vpop.f32.mrb[0].mxu0
    %v166 = vadd.f32 %v72, %v165
    %v167 = vpop.f32.mrb[0].mxu0
    %168 = vmatprep.mubr.f32.mxu0 0.0
    %169 = vmatmul.mubr.f32.gmra.mrb[0].mxu0 %v79
    %v170 = vpop.f32.mrb[0].mxu0
    %v171 = vadd.f32 %v72, %v170
    %v172 = vpop.f32.mrb[0].mxu0
    %173 = vmatprep.mubr.f32.mxu0 0.0
    %174 = vmatmul.mubr.f32.gmra.mrb[0].mxu0 %v82
    %v175 = vpop.f32.mrb[0].mxu0
    %v176 = vadd.f32 %v72, %v175
    %v177 = vpop.f32.mrb[0].mxu0
    %178 = vmatprep.mubr.f32.mxu0 0.0
    %179 = vmatmul.mubr.f32.gmra.mrb[0].mxu0 %v85
    %v180 = vpop.f32.mrb[0].mxu0
    %v181 = vadd.f32 %v72, %v180
    %v182 = vpop.f32.mrb[0].mxu0
    %183 = vmatprep.mubr.f32.mxu0 0.0
    %184 = vmatmul.mubr.f32.gmra.mrb[0].mxu0 %v88
    %v185 = vpop.f32.mrb[0].mxu0
    %v186 = vadd.f32 %v72, %v185
    %v187 = vpop.f32.mrb[0].mxu0
    %188 = vmatprep.mubr.f32.mxu0 0.0
    %189 = vmatmul.mubr.f32.gmra.mrb[0].mxu0 %v91
    %v190 = vpop.f32.mrb[0].mxu0
    %v191 = vadd.f32 %v72, %v190
    %v192 = vpop.f32.mrb[0].mxu0
    %193 = vmatprep.mubr.f32.mxu0 0.0
    %194 = vmatmul.mubr.f32.gmra.mrb[0].mxu0 %v94
    %v195 = vpop.f32.mrb[0].mxu0
    %v196 = vadd.f32 %v72, %v195
    %v197 = vpop.f32.mrb[0].mxu0
    %198 = vmatprep.mubr.f32.mxu0 0.0
    %199 = vmatmul.mubr.f32.gmra.mrb[0].mxu0 %v97
    %v200 = vpop.f32.mrb[0].mxu0
    %v201 = vadd.f32 %v72, %v200
    %v202 = vpop.f32.mrb[0].mxu0
    %203 = vdwg.mxu0
    %v204 = vld [vmem:[%s2] sm:$0xff]
    %v205 = vld [vmem:[%s4] sm:$0xff]
    %v206 = vld [vmem:[%s4 + $0x8] sm:$0xff]
    %v207 = vld [vmem:[%s5] sm:$0x1]
    %v209 = vlaneseq
    %v210 = vshrl.u32 %v209, 7
    %v211 = vsub.s32 0, %v210
    %v212 = vrot.slane %v207, %v211
    %vm214 = vcmask 64512
    %v216 = vsel %vm214, 0.0, 0
    %218 = vmatprep.subr.mxu0 0.0
    %219 = vmatpush1.msra.mxu0 %v204
    %220 = vmatprep.subr.mxu0 0.0
    %221 = vmatpush1.msra.mxu0 0.0
    %222 = vmatprep.subr.mxu0 0.0
    %223 = vmatpush1.msra.mxu0 0.0
    %224 = vmatprep.subr.mxu0 0.0
    %225 = vmatpush1.msra.mxu0 0.0
    %226 = vmatprep.subr.mxu0 0.0
    %227 = vmatpush1.msra.mxu0 0.0
    %228 = vmatprep.subr.mxu0 0.0
    %229 = vmatpush1.msra.mxu0 0.0
    %230 = vmatprep.subr.mxu0 0.0
    %231 = vmatpush1.msra.mxu0 0.0
    %232 = vmatprep.subr.mxu0 0.0
    %233 = vmatpush1.msra.mxu0 0.0
    %234 = vmatprep.subr.mxu0 0.0
    %235 = vmatpush1.msra.mxu0 0.0
    %236 = vmatprep.subr.mxu0 0.0
    %237 = vmatpush1.msra.mxu0 0.0
    %238 = vmatprep.subr.mxu0 0.0
    %239 = vmatpush1.msra.mxu0 0.0
    %240 = vmatprep.subr.mxu0 0.0
    %241 = vmatpush1.msra.mxu0 0.0
    %242 = vmatprep.subr.mxu0 0.0
    %243 = vmatpush1.msra.mxu0 0.0
    %244 = vmatprep.subr.mxu0 0.0
    %245 = vmatpush1.msra.mxu0 0.0
    %246 = vmatprep.subr.mxu0 0.0
    %247 = vmatpush1.msra.mxu0 0.0
    %248 = vmatprep.subr.mxu0 0.0
    %249 = vmatpush1.msra.mxu0 0.0
    %250 = vmatprep.subr.mxu0 0.0
    %251 = vmatpush1.msra.mxu0 0.0
    %252 = vmatprep.subr.mxu0 0.0
    %253 = vmatpush1.msra.mxu0 0.0
    %254 = vmatprep.subr.mxu0 0.0
    %255 = vmatpush1.msra.mxu0 0.0
    %256 = vmatprep.subr.mxu0 0.0
    %257 = vmatpush1.msra.mxu0 0.0
    %258 = vmatprep.subr.mxu0 0.0
    %259 = vmatpush1.msra.mxu0 0.0
    %260 = vmatprep.subr.mxu0 0.0
    %261 = vmatpush1.msra.mxu0 0.0
    %262 = vmatprep.subr.mxu0 0.0
    %263 = vmatpush1.msra.mxu0 0.0
    %264 = vmatprep.subr.mxu0 0.0
    %265 = vmatpush1.msra.mxu0 0.0
    %266 = vmatprep.subr.mxu0 0.0
    %267 = vmatpush1.msra.mxu0 0.0
    %268 = vmatprep.subr.mxu0 0.0
    %269 = vmatpush1.msra.mxu0 0.0
    %270 = vmatprep.subr.mxu0 0.0
    %271 = vmatpush1.msra.mxu0 0.0
    %272 = vmatprep.subr.mxu0 0.0
    %273 = vmatpush1.msra.mxu0 0.0
    %274 = vmatprep.subr.mxu0 0.0
    %275 = vmatpush1.msra.mxu0 0.0
    %276 = vmatprep.subr.mxu0 0.0
    %277 = vmatpush1.msra.mxu0 0.0
    %278 = vmatprep.subr.mxu0 0.0
    %279 = vmatpush1.msra.mxu0 0.0
    %280 = vmatprep.subr.mxu0 0.0
    %281 = vmatpush1.msra.mxu0 0.0
    %282 = vmatprep.mubr.f32.mxu0 0.0
    %283 = vmatmul.mubr.f32.gmra.mrb[0].mxu0 %v216
    %v284 = vpop.f32.mrb[0].mxu0
    %v285 = vadd.f32 0.0, %v284
    %v286 = vpop.f32.mrb[0].mxu0
    %287 = vdwg.mxu0
    %v289 = vrot.slane %v285, 1
    %v290 = vrot.slane %v285, 2
    %v291 = vrot.slane %v285, 3
    %v292 = vrot.slane %v285, 4
    %v293 = vrot.slane %v285, 5
    %v294 = vrot.slane %v285, 6
    %v295 = vrot.slane %v285, 7
    %v304 = vadd.f32 %v166, %v285
    %v305 = vadd.f32 %v171, %v289
    %v306 = vadd.f32 %v176, %v290
    %v307 = vadd.f32 %v181, %v291
    %v308 = vadd.f32 %v186, %v292
    %v309 = vadd.f32 %v191, %v293
    %v310 = vadd.f32 %v196, %v294
    %v311 = vadd.f32 %v201, %v295
    %v312 = vxor.u32 %v304, 2147483648
    %v313 = vxor.u32 %v305, 2147483648
    %v314 = vxor.u32 %v306, 2147483648
    %v315 = vxor.u32 %v307, 2147483648
    %v316 = vxor.u32 %v308, 2147483648
    %v317 = vxor.u32 %v309, 2147483648
    %v318 = vxor.u32 %v310, 2147483648
    %v319 = vxor.u32 %v311, 2147483648
    %v320 = vmul.f32 %v312, 1.442695
    %v321 = vpow.pop %v320
    %v322 = vmul.f32 %v313, 1.442695
    %v323 = vpow.pop %v322
    %v324 = vmul.f32 %v314, 1.442695
    %v325 = vpow.pop %v324
    %v326 = vmul.f32 %v315, 1.442695
    %v327 = vpow.pop %v326
    %v328 = vmul.f32 %v316, 1.442695
    %v329 = vpow.pop %v328
    %v330 = vmul.f32 %v317, 1.442695
    %v331 = vpow.pop %v330
    %v332 = vmul.f32 %v318, 1.442695
    %v333 = vpow.pop %v332
    %v334 = vmul.f32 %v319, 1.442695
    %v335 = vpow.pop %v334
    %v336 = vadd.f32 %v321, 1.0
    %v337 = vadd.f32 %v323, 1.0
    %v338 = vadd.f32 %v325, 1.0
    %v339 = vadd.f32 %v327, 1.0
    %v340 = vadd.f32 %v329, 1.0
    %v341 = vadd.f32 %v331, 1.0
    %v342 = vadd.f32 %v333, 1.0
    %v343 = vadd.f32 %v335, 1.0
    %v344 = vrcp.pop %v336
    %v345 = vmul.f32 1.0, %v344
    %v346 = vrcp.pop %v337
    %v347 = vmul.f32 1.0, %v346
    %v348 = vrcp.pop %v338
    %v349 = vmul.f32 1.0, %v348
    %v350 = vrcp.pop %v339
    %v351 = vmul.f32 1.0, %v350
    %v352 = vrcp.pop %v340
    %v353 = vmul.f32 1.0, %v352
    %v354 = vrcp.pop %v341
    %v355 = vmul.f32 1.0, %v354
    %v356 = vrcp.pop %v342
    %v357 = vmul.f32 1.0, %v356
    %v358 = vrcp.pop %v343
    %v359 = vmul.f32 1.0, %v358
    %v360 = vtanh.pop %v304
    %v361 = vtanh.pop %v305
    %v362 = vtanh.pop %v306
    %v363 = vtanh.pop %v307
    %v364 = vtanh.pop %v308
    %v365 = vtanh.pop %v309
    %v366 = vtanh.pop %v310
    %v367 = vtanh.pop %v311
    %v368 = vmul.f32 %v345, 0.0
    %v369 = vmul.f32 %v347, 0.0
    %v370 = vmul.f32 %v349, 0.0
    %v371 = vmul.f32 %v351, 0.0
    %v372 = vmul.f32 %v353, 0.0
    %v373 = vmul.f32 %v355, 0.0
    %v374 = vmul.f32 %v357, 0.0
    %v375 = vmul.f32 %v359, 0.0
    %384 = vrot.lane.b32.xlu0 %v360, 112
    %v385 = vpop.permute.xlu0 %384
    %386 = vrot.lane.b32.xlu0 %v361, 112
    %v387 = vpop.permute.xlu0 %386
    %388 = vrot.lane.b32.xlu0 %v362, 112
    %v389 = vpop.permute.xlu0 %388
    %390 = vrot.lane.b32.xlu0 %v363, 112
    %v391 = vpop.permute.xlu0 %390
    %392 = vrot.lane.b32.xlu0 %v364, 112
    %v393 = vpop.permute.xlu0 %392
    %394 = vrot.lane.b32.xlu0 %v365, 112
    %v395 = vpop.permute.xlu0 %394
    %396 = vrot.lane.b32.xlu0 %v366, 112
    %v397 = vpop.permute.xlu0 %396
    %398 = vrot.lane.b32.xlu0 %v367, 112
    %v399 = vpop.permute.xlu0 %398
    %v408 = vmul.f32 %v345, %v385
    %v409 = vmul.f32 %v347, %v387
    %v410 = vmul.f32 %v349, %v389
    %v411 = vmul.f32 %v351, %v391
    %v412 = vmul.f32 %v353, %v393
    %v413 = vmul.f32 %v355, %v395
    %v414 = vmul.f32 %v357, %v397
    %v415 = vmul.f32 %v359, %v399
    %424 = vrot.lane.b32.xlu0 %v408, 8
    %v425 = vpop.permute.xlu0 %424
    %426 = vrot.lane.b32.xlu0 %v409, 8
    %v427 = vpop.permute.xlu0 %426
    %428 = vrot.lane.b32.xlu0 %v410, 8
    %v429 = vpop.permute.xlu0 %428
    %430 = vrot.lane.b32.xlu0 %v411, 8
    %v431 = vpop.permute.xlu0 %430
    %432 = vrot.lane.b32.xlu0 %v412, 8
    %v433 = vpop.permute.xlu0 %432
    %434 = vrot.lane.b32.xlu0 %v413, 8
    %v435 = vpop.permute.xlu0 %434
    %436 = vrot.lane.b32.xlu0 %v414, 8
    %v437 = vpop.permute.xlu0 %436
    %438 = vrot.lane.b32.xlu0 %v415, 8
    %v439 = vpop.permute.xlu0 %438
    %v448 = vadd.f32 %v368, %v425
    %v449 = vadd.f32 %v369, %v427
    %v450 = vadd.f32 %v370, %v429
    %v451 = vadd.f32 %v371, %v431
    %v452 = vadd.f32 %v372, %v433
    %v453 = vadd.f32 %v373, %v435
    %v454 = vadd.f32 %v374, %v437
    %v455 = vadd.f32 %v375, %v439
    %v456 = vtanh.pop %v448
    %v457 = vtanh.pop %v449
    %v458 = vtanh.pop %v450
    %v459 = vtanh.pop %v451
    %v460 = vtanh.pop %v452
    %v461 = vtanh.pop %v453
    %v462 = vtanh.pop %v454
    %v463 = vtanh.pop %v455
    %472 = vrot.lane.b32.xlu0 %v456, 16
    %v473 = vpop.permute.xlu0 %472
    %474 = vrot.lane.b32.xlu0 %v457, 16
    %v475 = vpop.permute.xlu0 %474
    %476 = vrot.lane.b32.xlu0 %v458, 16
    %v477 = vpop.permute.xlu0 %476
    %478 = vrot.lane.b32.xlu0 %v459, 16
    %v479 = vpop.permute.xlu0 %478
    %480 = vrot.lane.b32.xlu0 %v460, 16
    %v481 = vpop.permute.xlu0 %480
    %482 = vrot.lane.b32.xlu0 %v461, 16
    %v483 = vpop.permute.xlu0 %482
    %484 = vrot.lane.b32.xlu0 %v462, 16
    %v485 = vpop.permute.xlu0 %484
    %486 = vrot.lane.b32.xlu0 %v463, 16
    %v487 = vpop.permute.xlu0 %486
    %v496 = vmul.f32 %v345, %v473
    %v497 = vmul.f32 %v347, %v475
    %v498 = vmul.f32 %v349, %v477
    %v499 = vmul.f32 %v351, %v479
    %v500 = vmul.f32 %v353, %v481
    %v501 = vmul.f32 %v355, %v483
    %v502 = vmul.f32 %v357, %v485
    %v503 = vmul.f32 %v359, %v487
    %v512 = vrot.slane %v497, 7
    %vm513 = vcmask 1041409
    %v514 = vsel %vm513, %v512, %v496
    %v515 = vrot.slane %v498, 6
    %vm516 = vcmask 1042434
    %v517 = vsel %vm516, %v515, %v514
    %v518 = vrot.slane %v499, 5
    %vm519 = vcmask 1043459
    %v520 = vsel %vm519, %v518, %v517
    %v521 = vrot.slane %v500, 4
    %vm522 = vcmask 1044484
    %v523 = vsel %vm522, %v521, %v520
    %v524 = vrot.slane %v501, 3
    %vm525 = vcmask 1045509
    %v526 = vsel %vm525, %v524, %v523
    %v527 = vrot.slane %v502, 2
    %vm528 = vcmask 1046534
    %v529 = vsel %vm528, %v527, %v526
    %v530 = vrot.slane %v503, 1
    %vm531 = vcmask 1047559
    %v532 = vsel %vm531, %v530, %v529
    %533 = vrot.lane.b32.xlu0 %v532, 104
    %v534 = vpop.permute.xlu0 %533
    %v536 = vsel %vm214, %v534, 0.0
    %v538 = vsel %vm74, %v536, 0
    %540 = vmatprep.subr.mxu0 0.0
    %541 = vmatpush1.msra.mxu0 %v205
    %542 = vmatprep.subr.mxu0 0.0
    %543 = vmatpush1.msra.mxu0 %v206
    %544 = vmatprep.subr.mxu0 0.0
    %545 = vmatpush1.msra.mxu0 0.0
    %546 = vmatprep.subr.mxu0 0.0
    %547 = vmatpush1.msra.mxu0 0.0
    %548 = vmatprep.subr.mxu0 0.0
    %549 = vmatpush1.msra.mxu0 0.0
    %550 = vmatprep.subr.mxu0 0.0
    %551 = vmatpush1.msra.mxu0 0.0
    %552 = vmatprep.subr.mxu0 0.0
    %553 = vmatpush1.msra.mxu0 0.0
    %554 = vmatprep.subr.mxu0 0.0
    %555 = vmatpush1.msra.mxu0 0.0
    %556 = vmatprep.subr.mxu0 0.0
    %557 = vmatpush1.msra.mxu0 0.0
    %558 = vmatprep.subr.mxu0 0.0
    %559 = vmatpush1.msra.mxu0 0.0
    %560 = vmatprep.subr.mxu0 0.0
    %561 = vmatpush1.msra.mxu0 0.0
    %562 = vmatprep.subr.mxu0 0.0
    %563 = vmatpush1.msra.mxu0 0.0
    %564 = vmatprep.subr.mxu0 0.0
    %565 = vmatpush1.msra.mxu0 0.0
    %566 = vmatprep.subr.mxu0 0.0
    %567 = vmatpush1.msra.mxu0 0.0
    %568 = vmatprep.subr.mxu0 0.0
    %569 = vmatpush1.msra.mxu0 0.0
    %570 = vmatprep.subr.mxu0 0.0
    %571 = vmatpush1.msra.mxu0 0.0
    %572 = vmatprep.subr.mxu0 0.0
    %573 = vmatpush1.msra.mxu0 0.0
    %574 = vmatprep.subr.mxu0 0.0
    %575 = vmatpush1.msra.mxu0 0.0
    %576 = vmatprep.subr.mxu0 0.0
    %577 = vmatpush1.msra.mxu0 0.0
    %578 = vmatprep.subr.mxu0 0.0
    %579 = vmatpush1.msra.mxu0 0.0
    %580 = vmatprep.subr.mxu0 0.0
    %581 = vmatpush1.msra.mxu0 0.0
    %582 = vmatprep.subr.mxu0 0.0
    %583 = vmatpush1.msra.mxu0 0.0
    %584 = vmatprep.subr.mxu0 0.0
    %585 = vmatpush1.msra.mxu0 0.0
    %586 = vmatprep.subr.mxu0 0.0
    %587 = vmatpush1.msra.mxu0 0.0
    %588 = vmatprep.subr.mxu0 0.0
    %589 = vmatpush1.msra.mxu0 0.0
    %590 = vmatprep.subr.mxu0 0.0
    %591 = vmatpush1.msra.mxu0 0.0
    %592 = vmatprep.subr.mxu0 0.0
    %593 = vmatpush1.msra.mxu0 0.0
    %594 = vmatprep.subr.mxu0 0.0
    %595 = vmatpush1.msra.mxu0 0.0
    %596 = vmatprep.subr.mxu0 0.0
    %597 = vmatpush1.msra.mxu0 0.0
    %598 = vmatprep.subr.mxu0 0.0
    %599 = vmatpush1.msra.mxu0 0.0
    %600 = vmatprep.subr.mxu0 0.0
    %601 = vmatpush1.msra.mxu0 0.0
    %602 = vmatprep.subr.mxu0 0.0
    %603 = vmatpush1.msra.mxu0 0.0
    %604 = vmatprep.mubr.f32.mxu0 0.0
    %605 = vmatmul.mubr.f32.gmra.mrb[0].mxu0 %v538
    %v606 = vpop.f32.mrb[0].mxu0
    %v607 = vadd.f32 %v212, %v606
    %v608 = vpop.f32.mrb[0].mxu0
    %609 = vdwg.mxu0
    %v610 = vxor.u32 %v607, 2147483648
    %v611 = vmul.f32 %v610, 1.442695
    %v612 = vpow.pop %v611
    %v613 = vadd.f32 %v612, 1.0
    %v614 = vrcp.pop %v613
    %v615 = vmul.f32 1.0, %v614
    %v616 = vtanh.pop %v607
    %v617 = vmul.f32 %v615, 0.0
    %619 = vrot.lane.b32.xlu0 %v616, 112
    %v620 = vpop.permute.xlu0 %619
    %v622 = vmul.f32 %v615, %v620
    %624 = vrot.lane.b32.xlu0 %v622, 8
    %v625 = vpop.permute.xlu0 %624
    %v627 = vadd.f32 %v617, %v625
    %v628 = vtanh.pop %v627
    %630 = vrot.lane.b32.xlu0 %v628, 16
    %v631 = vpop.permute.xlu0 %630
    %v633 = vmul.f32 %v615, %v631
    %v634 = vsel %vm214, %v534, 0
    %636 = vmatprep.subr.mxu0 0.0
    %637 = vmatpush1.msra.mxu0 %v204
    %638 = vmatprep.subr.mxu0 0.0
    %639 = vmatpush1.msra.mxu0 0.0
    %640 = vmatprep.subr.mxu0 0.0
    %641 = vmatpush1.msra.mxu0 0.0
    %642 = vmatprep.subr.mxu0 0.0
    %643 = vmatpush1.msra.mxu0 0.0
    %644 = vmatprep.subr.mxu0 0.0
    %645 = vmatpush1.msra.mxu0 0.0
    %646 = vmatprep.subr.mxu0 0.0
    %647 = vmatpush1.msra.mxu0 0.0
    %648 = vmatprep.subr.mxu0 0.0
    %649 = vmatpush1.msra.mxu0 0.0
    %650 = vmatprep.subr.mxu0 0.0
    %651 = vmatpush1.msra.mxu0 0.0
    %652 = vmatprep.subr.mxu0 0.0
    %653 = vmatpush1.msra.mxu0 0.0
    %654 = vmatprep.subr.mxu0 0.0
    %655 = vmatpush1.msra.mxu0 0.0
    %656 = vmatprep.subr.mxu0 0.0
    %657 = vmatpush1.msra.mxu0 0.0
    %658 = vmatprep.subr.mxu0 0.0
    %659 = vmatpush1.msra.mxu0 0.0
    %660 = vmatprep.subr.mxu0 0.0
    %661 = vmatpush1.msra.mxu0 0.0
    %662 = vmatprep.subr.mxu0 0.0
    %663 = vmatpush1.msra.mxu0 0.0
    %664 = vmatprep.subr.mxu0 0.0
    %665 = vmatpush1.msra.mxu0 0.0
    %666 = vmatprep.subr.mxu0 0.0
    %667 = vmatpush1.msra.mxu0 0.0
    %668 = vmatprep.subr.mxu0 0.0
    %669 = vmatpush1.msra.mxu0 0.0
    %670 = vmatprep.subr.mxu0 0.0
    %671 = vmatpush1.msra.mxu0 0.0
    %672 = vmatprep.subr.mxu0 0.0
    %673 = vmatpush1.msra.mxu0 0.0
    %674 = vmatprep.subr.mxu0 0.0
    %675 = vmatpush1.msra.mxu0 0.0
    %676 = vmatprep.subr.mxu0 0.0
    %677 = vmatpush1.msra.mxu0 0.0
    %678 = vmatprep.subr.mxu0 0.0
    %679 = vmatpush1.msra.mxu0 0.0
    %680 = vmatprep.subr.mxu0 0.0
    %681 = vmatpush1.msra.mxu0 0.0
    %682 = vmatprep.subr.mxu0 0.0
    %683 = vmatpush1.msra.mxu0 0.0
    %684 = vmatprep.subr.mxu0 0.0
    %685 = vmatpush1.msra.mxu0 0.0
    %686 = vmatprep.subr.mxu0 0.0
    %687 = vmatpush1.msra.mxu0 0.0
    %688 = vmatprep.subr.mxu0 0.0
    %689 = vmatpush1.msra.mxu0 0.0
    %690 = vmatprep.subr.mxu0 0.0
    %691 = vmatpush1.msra.mxu0 0.0
    %692 = vmatprep.subr.mxu0 0.0
    %693 = vmatpush1.msra.mxu0 0.0
    %694 = vmatprep.subr.mxu0 0.0
    %695 = vmatpush1.msra.mxu0 0.0
    %696 = vmatprep.subr.mxu0 0.0
    %697 = vmatpush1.msra.mxu0 0.0
    %698 = vmatprep.subr.mxu0 0.0
    %699 = vmatpush1.msra.mxu0 0.0
    %700 = vmatprep.mubr.f32.mxu0 0.0
    %701 = vmatmul.mubr.f32.gmra.mrb[0].mxu0 %v634
    %v702 = vpop.f32.mrb[0].mxu0
    %v703 = vadd.f32 0.0, %v702
    %v704 = vpop.f32.mrb[0].mxu0
    %705 = vdwg.mxu0
    %v707 = vrot.slane %v703, 7
    %v708 = vrot.slane %v703, 1
    %v709 = vrot.slane %v703, 2
    %v710 = vrot.slane %v703, 3
    %v711 = vrot.slane %v703, 4
    %v712 = vrot.slane %v703, 5
    %v713 = vrot.slane %v703, 6
    %v722 = vadd.f32 %v166, %v707
    %v723 = vadd.f32 %v171, %v703
    %v724 = vadd.f32 %v176, %v708
    %v725 = vadd.f32 %v181, %v709
    %v726 = vadd.f32 %v186, %v710
    %v727 = vadd.f32 %v191, %v711
    %v728 = vadd.f32 %v196, %v712
    %v729 = vadd.f32 %v201, %v713
    %v730 = vxor.u32 %v722, 2147483648
    %v731 = vxor.u32 %v723, 2147483648
    %v732 = vxor.u32 %v724, 2147483648
    %v733 = vxor.u32 %v725, 2147483648
    %v734 = vxor.u32 %v726, 2147483648
    %v735 = vxor.u32 %v727, 2147483648
    %v736 = vxor.u32 %v728, 2147483648
    %v737 = vxor.u32 %v729, 2147483648
    %v738 = vmul.f32 %v730, 1.442695
    %v739 = vpow.pop %v738
    %v740 = vmul.f32 %v731, 1.442695
    %v741 = vpow.pop %v740
    %v742 = vmul.f32 %v732, 1.442695
    %v743 = vpow.pop %v742
    %v744 = vmul.f32 %v733, 1.442695
    %v745 = vpow.pop %v744
    %v746 = vmul.f32 %v734, 1.442695
    %v747 = vpow.pop %v746
    %v748 = vmul.f32 %v735, 1.442695
    %v749 = vpow.pop %v748
    %v750 = vmul.f32 %v736, 1.442695
    %v751 = vpow.pop %v750
    %v752 = vmul.f32 %v737, 1.442695
    %v753 = vpow.pop %v752
    %v754 = vadd.f32 %v739, 1.0
    %v755 = vadd.f32 %v741, 1.0
    %v756 = vadd.f32 %v743, 1.0
    %v757 = vadd.f32 %v745, 1.0
    %v758 = vadd.f32 %v747, 1.0
    %v759 = vadd.f32 %v749, 1.0
    %v760 = vadd.f32 %v751, 1.0
    %v761 = vadd.f32 %v753, 1.0
    %v762 = vrcp.pop %v754
    %v763 = vmul.f32 1.0, %v762
    %v764 = vrcp.pop %v755
    %v765 = vmul.f32 1.0, %v764
    %v766 = vrcp.pop %v756
    %v767 = vmul.f32 1.0, %v766
    %v768 = vrcp.pop %v757
    %v769 = vmul.f32 1.0, %v768
    %v770 = vrcp.pop %v758
    %v771 = vmul.f32 1.0, %v770
    %v772 = vrcp.pop %v759
    %v773 = vmul.f32 1.0, %v772
    %v774 = vrcp.pop %v760
    %v775 = vmul.f32 1.0, %v774
    %v776 = vrcp.pop %v761
    %v777 = vmul.f32 1.0, %v776
    %v778 = vtanh.pop %v722
    %v779 = vtanh.pop %v723
    %v780 = vtanh.pop %v724
    %v781 = vtanh.pop %v725
    %v782 = vtanh.pop %v726
    %v783 = vtanh.pop %v727
    %v784 = vtanh.pop %v728
    %v785 = vtanh.pop %v729
    %v794 = vrot.slane %v448, 7
    %v795 = vrot.slane %v449, 7
    %v796 = vrot.slane %v450, 7
    %v797 = vrot.slane %v451, 7
    %v798 = vrot.slane %v452, 7
    %v799 = vrot.slane %v453, 7
    %v800 = vrot.slane %v454, 7
    %v801 = vrot.slane %v455, 7
    %v810 = vmul.f32 %v763, %v794
    %v811 = vmul.f32 %v765, %v795
    %v812 = vmul.f32 %v767, %v796
    %v813 = vmul.f32 %v769, %v797
    %v814 = vmul.f32 %v771, %v798
    %v815 = vmul.f32 %v773, %v799
    %v816 = vmul.f32 %v775, %v800
    %v817 = vmul.f32 %v777, %v801
    %826 = vrot.lane.b32.xlu0 %v778, 112
    %v827 = vpop.permute.xlu0 %826
    %828 = vrot.lane.b32.xlu0 %v779, 112
    %v829 = vpop.permute.xlu0 %828
    %830 = vrot.lane.b32.xlu0 %v780, 112
    %v831 = vpop.permute.xlu0 %830
    %832 = vrot.lane.b32.xlu0 %v781, 112
    %v833 = vpop.permute.xlu0 %832
    %834 = vrot.lane.b32.xlu0 %v782, 112
    %v835 = vpop.permute.xlu0 %834
    %836 = vrot.lane.b32.xlu0 %v783, 112
    %v837 = vpop.permute.xlu0 %836
    %838 = vrot.lane.b32.xlu0 %v784, 112
    %v839 = vpop.permute.xlu0 %838
    %840 = vrot.lane.b32.xlu0 %v785, 112
    %v841 = vpop.permute.xlu0 %840
    %v850 = vmul.f32 %v763, %v827
    %v851 = vmul.f32 %v765, %v829
    %v852 = vmul.f32 %v767, %v831
    %v853 = vmul.f32 %v769, %v833
    %v854 = vmul.f32 %v771, %v835
    %v855 = vmul.f32 %v773, %v837
    %v856 = vmul.f32 %v775, %v839
    %v857 = vmul.f32 %v777, %v841
    %866 = vrot.lane.b32.xlu0 %v850, 8
    %v867 = vpop.permute.xlu0 %866
    %868 = vrot.lane.b32.xlu0 %v851, 8
    %v869 = vpop.permute.xlu0 %868
    %870 = vrot.lane.b32.xlu0 %v852, 8
    %v871 = vpop.permute.xlu0 %870
    %872 = vrot.lane.b32.xlu0 %v853, 8
    %v873 = vpop.permute.xlu0 %872
    %874 = vrot.lane.b32.xlu0 %v854, 8
    %v875 = vpop.permute.xlu0 %874
    %876 = vrot.lane.b32.xlu0 %v855, 8
    %v877 = vpop.permute.xlu0 %876
    %878 = vrot.lane.b32.xlu0 %v856, 8
    %v879 = vpop.permute.xlu0 %878
    %880 = vrot.lane.b32.xlu0 %v857, 8
    %v881 = vpop.permute.xlu0 %880
    %v890 = vadd.f32 %v810, %v867
    %v891 = vadd.f32 %v811, %v869
    %v892 = vadd.f32 %v812, %v871
    %v893 = vadd.f32 %v813, %v873
    %v894 = vadd.f32 %v814, %v875
    %v895 = vadd.f32 %v815, %v877
    %v896 = vadd.f32 %v816, %v879
    %v897 = vadd.f32 %v817, %v881
    %v898 = vtanh.pop %v890
    %v899 = vtanh.pop %v891
    %v900 = vtanh.pop %v892
    %v901 = vtanh.pop %v893
    %v902 = vtanh.pop %v894
    %v903 = vtanh.pop %v895
    %v904 = vtanh.pop %v896
    %v905 = vtanh.pop %v897
    %914 = vrot.lane.b32.xlu0 %v898, 16
    %v915 = vpop.permute.xlu0 %914
    %916 = vrot.lane.b32.xlu0 %v899, 16
    %v917 = vpop.permute.xlu0 %916
    %918 = vrot.lane.b32.xlu0 %v900, 16
    %v919 = vpop.permute.xlu0 %918
    %920 = vrot.lane.b32.xlu0 %v901, 16
    %v921 = vpop.permute.xlu0 %920
    %922 = vrot.lane.b32.xlu0 %v902, 16
    %v923 = vpop.permute.xlu0 %922
    %924 = vrot.lane.b32.xlu0 %v903, 16
    %v925 = vpop.permute.xlu0 %924
    %926 = vrot.lane.b32.xlu0 %v904, 16
    %v927 = vpop.permute.xlu0 %926
    %928 = vrot.lane.b32.xlu0 %v905, 16
    %v929 = vpop.permute.xlu0 %928
    %v938 = vmul.f32 %v763, %v915
    %v939 = vmul.f32 %v765, %v917
    %v940 = vmul.f32 %v767, %v919
    %v941 = vmul.f32 %v769, %v921
    %v942 = vmul.f32 %v771, %v923
    %v943 = vmul.f32 %v773, %v925
    %v944 = vmul.f32 %v775, %v927
    %v945 = vmul.f32 %v777, %v929
    %v954 = vrot.slane %v939, 7
    %v955 = vsel %vm516, %v954, %v938
    %v956 = vrot.slane %v940, 6
    %v957 = vsel %vm519, %v956, %v955
    %v958 = vrot.slane %v941, 5
    %v959 = vsel %vm522, %v958, %v957
    %v960 = vrot.slane %v942, 4
    %v961 = vsel %vm525, %v960, %v959
    %v962 = vrot.slane %v943, 3
    %v963 = vsel %vm528, %v962, %v961
    %v964 = vrot.slane %v944, 2
    %v965 = vsel %vm531, %v964, %v963
    %v966 = vrot.slane %v945, 1
    %967 = vrot.lane.b32.xlu0 %v965, 104
    %v968 = vpop.permute.xlu0 %967
    %969 = vrot.lane.b32.xlu0 %v966, 104
    %v970 = vpop.permute.xlu0 %969
    %v974 = vrot.slane %v633, 7
    %975 = vrot.lane.b32.xlu0 %v974, 112
    %v976 = vpop.permute.xlu0 %975
    %v978 = vsel %vm214, %v968, %v976
    %v979 = vsel %vm214, %v970, %v976
    %vm982 = vcmask 1046528
    %v983 = vrot.slane %v978, 1
    %v984 = vrot.slane %v979, 1
    %v985 = vsel %vm982, %v983, %v984
    %v986 = vsel %vm74, %v985, 0
    %988 = vmatprep.subr.mxu0 0.0
    %989 = vmatpush1.msra.mxu0 %v205
    %990 = vmatprep.subr.mxu0 0.0
    %991 = vmatpush1.msra.mxu0 %v206
    %992 = vmatprep.subr.mxu0 0.0
    %993 = vmatpush1.msra.mxu0 0.0
    %994 = vmatprep.subr.mxu0 0.0
    %995 = vmatpush1.msra.mxu0 0.0
    %996 = vmatprep.subr.mxu0 0.0
    %997 = vmatpush1.msra.mxu0 0.0
    %998 = vmatprep.subr.mxu0 0.0
    %999 = vmatpush1.msra.mxu0 0.0
    %1000 = vmatprep.subr.mxu0 0.0
    %1001 = vmatpush1.msra.mxu0 0.0
    %1002 = vmatprep.subr.mxu0 0.0
    %1003 = vmatpush1.msra.mxu0 0.0
    %1004 = vmatprep.subr.mxu0 0.0
    %1005 = vmatpush1.msra.mxu0 0.0
    %1006 = vmatprep.subr.mxu0 0.0
    %1007 = vmatpush1.msra.mxu0 0.0
    %1008 = vmatprep.subr.mxu0 0.0
    %1009 = vmatpush1.msra.mxu0 0.0
    %1010 = vmatprep.subr.mxu0 0.0
    %1011 = vmatpush1.msra.mxu0 0.0
    %1012 = vmatprep.subr.mxu0 0.0
    %1013 = vmatpush1.msra.mxu0 0.0
    %1014 = vmatprep.subr.mxu0 0.0
    %1015 = vmatpush1.msra.mxu0 0.0
    %1016 = vmatprep.subr.mxu0 0.0
    %1017 = vmatpush1.msra.mxu0 0.0
    %1018 = vmatprep.subr.mxu0 0.0
    %1019 = vmatpush1.msra.mxu0 0.0
    %1020 = vmatprep.subr.mxu0 0.0
    %1021 = vmatpush1.msra.mxu0 0.0
    %1022 = vmatprep.subr.mxu0 0.0
    %1023 = vmatpush1.msra.mxu0 0.0
    %1024 = vmatprep.subr.mxu0 0.0
    %1025 = vmatpush1.msra.mxu0 0.0
    %1026 = vmatprep.subr.mxu0 0.0
    %1027 = vmatpush1.msra.mxu0 0.0
    %1028 = vmatprep.subr.mxu0 0.0
    %1029 = vmatpush1.msra.mxu0 0.0
    %1030 = vmatprep.subr.mxu0 0.0
    %1031 = vmatpush1.msra.mxu0 0.0
    %1032 = vmatprep.subr.mxu0 0.0
    %1033 = vmatpush1.msra.mxu0 0.0
    %1034 = vmatprep.subr.mxu0 0.0
    %1035 = vmatpush1.msra.mxu0 0.0
    %1036 = vmatprep.subr.mxu0 0.0
    %1037 = vmatpush1.msra.mxu0 0.0
    %1038 = vmatprep.subr.mxu0 0.0
    %1039 = vmatpush1.msra.mxu0 0.0
    %1040 = vmatprep.subr.mxu0 0.0
    %1041 = vmatpush1.msra.mxu0 0.0
    %1042 = vmatprep.subr.mxu0 0.0
    %1043 = vmatpush1.msra.mxu0 0.0
    %1044 = vmatprep.subr.mxu0 0.0
    %1045 = vmatpush1.msra.mxu0 0.0
    %1046 = vmatprep.subr.mxu0 0.0
    %1047 = vmatpush1.msra.mxu0 0.0
    %1048 = vmatprep.subr.mxu0 0.0
    %1049 = vmatpush1.msra.mxu0 0.0
    %1050 = vmatprep.subr.mxu0 0.0
    %1051 = vmatpush1.msra.mxu0 0.0
    %1052 = vmatprep.mubr.f32.mxu0 0.0
    %1053 = vmatmul.mubr.f32.gmra.mrb[0].mxu0 %v986
    %v1054 = vpop.f32.mrb[0].mxu0
    %v1055 = vadd.f32 %v212, %v1054
    %v1056 = vpop.f32.mrb[0].mxu0
    %1057 = vdwg.mxu0
    %v1058 = vxor.u32 %v1055, 2147483648
    %v1059 = vmul.f32 %v1058, 1.442695
    %v1060 = vpow.pop %v1059
    %v1061 = vadd.f32 %v1060, 1.0
    %v1062 = vrcp.pop %v1061
    %v1063 = vmul.f32 1.0, %v1062
    %v1064 = vtanh.pop %v1055
    %v1065 = vmul.f32 %v1063, %v627
    %1067 = vrot.lane.b32.xlu0 %v1064, 112
    %v1068 = vpop.permute.xlu0 %1067
    %v1070 = vmul.f32 %v1063, %v1068
    %1072 = vrot.lane.b32.xlu0 %v1070, 8
    %v1073 = vpop.permute.xlu0 %1072
    %v1075 = vadd.f32 %v1065, %v1073
    %v1076 = vtanh.pop %v1075
    %1078 = vrot.lane.b32.xlu0 %v1076, 16
    %v1079 = vpop.permute.xlu0 %1078
    %v1081 = vmul.f32 %v1063, %v1079
    %v1082 = vrot.slane %v938, 1
    %v1083 = vsel %vm513, %v939, %v1082
    %v1084 = vrot.slane %v940, 7
    %v1085 = vsel %vm516, %v1084, %v1083
    %v1086 = vrot.slane %v941, 6
    %v1087 = vsel %vm519, %v1086, %v1085
    %v1088 = vrot.slane %v942, 5
    %v1089 = vsel %vm522, %v1088, %v1087
    %v1090 = vrot.slane %v943, 4
    %v1091 = vsel %vm525, %v1090, %v1089
    %v1092 = vrot.slane %v944, 3
    %v1093 = vsel %vm528, %v1092, %v1091
    %v1094 = vrot.slane %v945, 2
    %v1095 = vsel %vm531, %v1094, %v1093
    %1096 = vrot.lane.b32.xlu0 %v1095, 104
    %v1097 = vpop.permute.xlu0 %1096
    %v1098 = vsel %vm214, %v1097, 0
    %1100 = vmatprep.subr.mxu0 0.0
    %1101 = vmatpush1.msra.mxu0 %v204
    %1102 = vmatprep.subr.mxu0 0.0
    %1103 = vmatpush1.msra.mxu0 0.0
    %1104 = vmatprep.subr.mxu0 0.0
    %1105 = vmatpush1.msra.mxu0 0.0
    %1106 = vmatprep.subr.mxu0 0.0
    %1107 = vmatpush1.msra.mxu0 0.0
    %1108 = vmatprep.subr.mxu0 0.0
    %1109 = vmatpush1.msra.mxu0 0.0
    %1110 = vmatprep.subr.mxu0 0.0
    %1111 = vmatpush1.msra.mxu0 0.0
    %1112 = vmatprep.subr.mxu0 0.0
    %1113 = vmatpush1.msra.mxu0 0.0
    %1114 = vmatprep.subr.mxu0 0.0
    %1115 = vmatpush1.msra.mxu0 0.0
    %1116 = vmatprep.subr.mxu0 0.0
    %1117 = vmatpush1.msra.mxu0 0.0
    %1118 = vmatprep.subr.mxu0 0.0
    %1119 = vmatpush1.msra.mxu0 0.0
    %1120 = vmatprep.subr.mxu0 0.0
    %1121 = vmatpush1.msra.mxu0 0.0
    %1122 = vmatprep.subr.mxu0 0.0
    %1123 = vmatpush1.msra.mxu0 0.0
    %1124 = vmatprep.subr.mxu0 0.0
    %1125 = vmatpush1.msra.mxu0 0.0
    %1126 = vmatprep.subr.mxu0 0.0
    %1127 = vmatpush1.msra.mxu0 0.0
    %1128 = vmatprep.subr.mxu0 0.0
    %1129 = vmatpush1.msra.mxu0 0.0
    %1130 = vmatprep.subr.mxu0 0.0
    %1131 = vmatpush1.msra.mxu0 0.0
    %1132 = vmatprep.subr.mxu0 0.0
    %1133 = vmatpush1.msra.mxu0 0.0
    %1134 = vmatprep.subr.mxu0 0.0
    %1135 = vmatpush1.msra.mxu0 0.0
    %1136 = vmatprep.subr.mxu0 0.0
    %1137 = vmatpush1.msra.mxu0 0.0
    %1138 = vmatprep.subr.mxu0 0.0
    %1139 = vmatpush1.msra.mxu0 0.0
    %1140 = vmatprep.subr.mxu0 0.0
    %1141 = vmatpush1.msra.mxu0 0.0
    %1142 = vmatprep.subr.mxu0 0.0
    %1143 = vmatpush1.msra.mxu0 0.0
    %1144 = vmatprep.subr.mxu0 0.0
    %1145 = vmatpush1.msra.mxu0 0.0
    %1146 = vmatprep.subr.mxu0 0.0
    %1147 = vmatpush1.msra.mxu0 0.0
    %1148 = vmatprep.subr.mxu0 0.0
    %1149 = vmatpush1.msra.mxu0 0.0
    %1150 = vmatprep.subr.mxu0 0.0
    %1151 = vmatpush1.msra.mxu0 0.0
    %1152 = vmatprep.subr.mxu0 0.0
    %1153 = vmatpush1.msra.mxu0 0.0
    %1154 = vmatprep.subr.mxu0 0.0
    %1155 = vmatpush1.msra.mxu0 0.0
    %1156 = vmatprep.subr.mxu0 0.0
    %1157 = vmatpush1.msra.mxu0 0.0
    %1158 = vmatprep.subr.mxu0 0.0
    %1159 = vmatpush1.msra.mxu0 0.0
    %1160 = vmatprep.subr.mxu0 0.0
    %1161 = vmatpush1.msra.mxu0 0.0
    %1162 = vmatprep.subr.mxu0 0.0
    %1163 = vmatpush1.msra.mxu0 0.0
    %1164 = vmatprep.mubr.f32.mxu0 0.0
    %1165 = vmatmul.mubr.f32.gmra.mrb[0].mxu0 %v1098
    %v1166 = vpop.f32.mrb[0].mxu0
    %v1167 = vadd.f32 0.0, %v1166
    %v1168 = vpop.f32.mrb[0].mxu0
    %1169 = vdwg.mxu0
    %v1171 = vrot.slane %v1167, 6
    %v1172 = vrot.slane %v1167, 7
    %v1173 = vrot.slane %v1167, 1
    %v1174 = vrot.slane %v1167, 2
    %v1175 = vrot.slane %v1167, 3
    %v1176 = vrot.slane %v1167, 4
    %v1177 = vrot.slane %v1167, 5
    %v1186 = vadd.f32 %v166, %v1171
    %v1187 = vadd.f32 %v171, %v1172
    %v1188 = vadd.f32 %v176, %v1167
    %v1189 = vadd.f32 %v181, %v1173
    %v1190 = vadd.f32 %v186, %v1174
    %v1191 = vadd.f32 %v191, %v1175
    %v1192 = vadd.f32 %v196, %v1176
    %v1193 = vadd.f32 %v201, %v1177
    %v1194 = vxor.u32 %v1186, 2147483648
    %v1195 = vxor.u32 %v1187, 2147483648
    %v1196 = vxor.u32 %v1188, 2147483648
    %v1197 = vxor.u32 %v1189, 2147483648
    %v1198 = vxor.u32 %v1190, 2147483648
    %v1199 = vxor.u32 %v1191, 2147483648
    %v1200 = vxor.u32 %v1192, 2147483648
    %v1201 = vxor.u32 %v1193, 2147483648
    %v1202 = vmul.f32 %v1194, 1.442695
    %v1203 = vpow.pop %v1202
    %v1204 = vmul.f32 %v1195, 1.442695
    %v1205 = vpow.pop %v1204
    %v1206 = vmul.f32 %v1196, 1.442695
    %v1207 = vpow.pop %v1206
    %v1208 = vmul.f32 %v1197, 1.442695
    %v1209 = vpow.pop %v1208
    %v1210 = vmul.f32 %v1198, 1.442695
    %v1211 = vpow.pop %v1210
    %v1212 = vmul.f32 %v1199, 1.442695
    %v1213 = vpow.pop %v1212
    %v1214 = vmul.f32 %v1200, 1.442695
    %v1215 = vpow.pop %v1214
    %v1216 = vmul.f32 %v1201, 1.442695
    %v1217 = vpow.pop %v1216
    %v1218 = vadd.f32 %v1203, 1.0
    %v1219 = vadd.f32 %v1205, 1.0
    %v1220 = vadd.f32 %v1207, 1.0
    %v1221 = vadd.f32 %v1209, 1.0
    %v1222 = vadd.f32 %v1211, 1.0
    %v1223 = vadd.f32 %v1213, 1.0
    %v1224 = vadd.f32 %v1215, 1.0
    %v1225 = vadd.f32 %v1217, 1.0
    %v1226 = vrcp.pop %v1218
    %v1227 = vmul.f32 1.0, %v1226
    %v1228 = vrcp.pop %v1219
    %v1229 = vmul.f32 1.0, %v1228
    %v1230 = vrcp.pop %v1220
    %v1231 = vmul.f32 1.0, %v1230
    %v1232 = vrcp.pop %v1221
    %v1233 = vmul.f32 1.0, %v1232
    %v1234 = vrcp.pop %v1222
    %v1235 = vmul.f32 1.0, %v1234
    %v1236 = vrcp.pop %v1223
    %v1237 = vmul.f32 1.0, %v1236
    %v1238 = vrcp.pop %v1224
    %v1239 = vmul.f32 1.0, %v1238
    %v1240 = vrcp.pop %v1225
    %v1241 = vmul.f32 1.0, %v1240
    %v1242 = vtanh.pop %v1186
    %v1243 = vtanh.pop %v1187
    %v1244 = vtanh.pop %v1188
    %v1245 = vtanh.pop %v1189
    %v1246 = vtanh.pop %v1190
    %v1247 = vtanh.pop %v1191
    %v1248 = vtanh.pop %v1192
    %v1249 = vtanh.pop %v1193
    %v1258 = vrot.slane %v890, 7
    %v1259 = vrot.slane %v891, 7
    %v1260 = vrot.slane %v892, 7
    %v1261 = vrot.slane %v893, 7
    %v1262 = vrot.slane %v894, 7
    %v1263 = vrot.slane %v895, 7
    %v1264 = vrot.slane %v896, 7
    %v1265 = vrot.slane %v897, 7
    %v1274 = vmul.f32 %v1227, %v1258
    %v1275 = vmul.f32 %v1229, %v1259
    %v1276 = vmul.f32 %v1231, %v1260
    %v1277 = vmul.f32 %v1233, %v1261
    %v1278 = vmul.f32 %v1235, %v1262
    %v1279 = vmul.f32 %v1237, %v1263
    %v1280 = vmul.f32 %v1239, %v1264
    %v1281 = vmul.f32 %v1241, %v1265
    %1290 = vrot.lane.b32.xlu0 %v1242, 112
    %v1291 = vpop.permute.xlu0 %1290
    %1292 = vrot.lane.b32.xlu0 %v1243, 112
    %v1293 = vpop.permute.xlu0 %1292
    %1294 = vrot.lane.b32.xlu0 %v1244, 112
    %v1295 = vpop.permute.xlu0 %1294
    %1296 = vrot.lane.b32.xlu0 %v1245, 112
    %v1297 = vpop.permute.xlu0 %1296
    %1298 = vrot.lane.b32.xlu0 %v1246, 112
    %v1299 = vpop.permute.xlu0 %1298
    %1300 = vrot.lane.b32.xlu0 %v1247, 112
    %v1301 = vpop.permute.xlu0 %1300
    %1302 = vrot.lane.b32.xlu0 %v1248, 112
    %v1303 = vpop.permute.xlu0 %1302
    %1304 = vrot.lane.b32.xlu0 %v1249, 112
    %v1305 = vpop.permute.xlu0 %1304
    %v1314 = vmul.f32 %v1227, %v1291
    %v1315 = vmul.f32 %v1229, %v1293
    %v1316 = vmul.f32 %v1231, %v1295
    %v1317 = vmul.f32 %v1233, %v1297
    %v1318 = vmul.f32 %v1235, %v1299
    %v1319 = vmul.f32 %v1237, %v1301
    %v1320 = vmul.f32 %v1239, %v1303
    %v1321 = vmul.f32 %v1241, %v1305
    %1330 = vrot.lane.b32.xlu0 %v1314, 8
    %v1331 = vpop.permute.xlu0 %1330
    %1332 = vrot.lane.b32.xlu0 %v1315, 8
    %v1333 = vpop.permute.xlu0 %1332
    %1334 = vrot.lane.b32.xlu0 %v1316, 8
    %v1335 = vpop.permute.xlu0 %1334
    %1336 = vrot.lane.b32.xlu0 %v1317, 8
    %v1337 = vpop.permute.xlu0 %1336
    %1338 = vrot.lane.b32.xlu0 %v1318, 8
    %v1339 = vpop.permute.xlu0 %1338
    %1340 = vrot.lane.b32.xlu0 %v1319, 8
    %v1341 = vpop.permute.xlu0 %1340
    %1342 = vrot.lane.b32.xlu0 %v1320, 8
    %v1343 = vpop.permute.xlu0 %1342
    %1344 = vrot.lane.b32.xlu0 %v1321, 8
    %v1345 = vpop.permute.xlu0 %1344
    %v1354 = vadd.f32 %v1274, %v1331
    %v1355 = vadd.f32 %v1275, %v1333
    %v1356 = vadd.f32 %v1276, %v1335
    %v1357 = vadd.f32 %v1277, %v1337
    %v1358 = vadd.f32 %v1278, %v1339
    %v1359 = vadd.f32 %v1279, %v1341
    %v1360 = vadd.f32 %v1280, %v1343
    %v1361 = vadd.f32 %v1281, %v1345
    %v1362 = vtanh.pop %v1354
    %v1363 = vtanh.pop %v1355
    %v1364 = vtanh.pop %v1356
    %v1365 = vtanh.pop %v1357
    %v1366 = vtanh.pop %v1358
    %v1367 = vtanh.pop %v1359
    %v1368 = vtanh.pop %v1360
    %v1369 = vtanh.pop %v1361
    %1378 = vrot.lane.b32.xlu0 %v1362, 16
    %v1379 = vpop.permute.xlu0 %1378
    %1380 = vrot.lane.b32.xlu0 %v1363, 16
    %v1381 = vpop.permute.xlu0 %1380
    %1382 = vrot.lane.b32.xlu0 %v1364, 16
    %v1383 = vpop.permute.xlu0 %1382
    %1384 = vrot.lane.b32.xlu0 %v1365, 16
    %v1385 = vpop.permute.xlu0 %1384
    %1386 = vrot.lane.b32.xlu0 %v1366, 16
    %v1387 = vpop.permute.xlu0 %1386
    %1388 = vrot.lane.b32.xlu0 %v1367, 16
    %v1389 = vpop.permute.xlu0 %1388
    %1390 = vrot.lane.b32.xlu0 %v1368, 16
    %v1391 = vpop.permute.xlu0 %1390
    %1392 = vrot.lane.b32.xlu0 %v1369, 16
    %v1393 = vpop.permute.xlu0 %1392
    %v1402 = vmul.f32 %v1227, %v1379
    %v1403 = vmul.f32 %v1229, %v1381
    %v1404 = vmul.f32 %v1231, %v1383
    %v1405 = vmul.f32 %v1233, %v1385
    %v1406 = vmul.f32 %v1235, %v1387
    %v1407 = vmul.f32 %v1237, %v1389
    %v1408 = vmul.f32 %v1239, %v1391
    %v1409 = vmul.f32 %v1241, %v1393
    %v1418 = vrot.slane %v1403, 7
    %v1419 = vsel %vm519, %v1418, %v1402
    %v1420 = vrot.slane %v1404, 6
    %v1421 = vsel %vm522, %v1420, %v1419
    %v1422 = vrot.slane %v1405, 5
    %v1423 = vsel %vm525, %v1422, %v1421
    %v1424 = vrot.slane %v1406, 4
    %v1425 = vsel %vm528, %v1424, %v1423
    %v1426 = vrot.slane %v1407, 3
    %v1427 = vsel %vm531, %v1426, %v1425
    %v1428 = vrot.slane %v1408, 2
    %v1429 = vrot.slane %v1409, 1
    %v1430 = vsel %vm513, %v1429, %v1428
    %1431 = vrot.lane.b32.xlu0 %v1427, 104
    %v1432 = vpop.permute.xlu0 %1431
    %1433 = vrot.lane.b32.xlu0 %v1430, 104
    %v1434 = vpop.permute.xlu0 %1433
    %v1438 = vrot.slane %v1081, 6
    %1439 = vrot.lane.b32.xlu0 %v1438, 112
    %v1440 = vpop.permute.xlu0 %1439
    %v1442 = vsel %vm214, %v1432, %v1440
    %v1443 = vsel %vm214, %v1434, %v1440
    %vm1446 = vcmask 1045504
    %v1447 = vrot.slane %v1442, 2
    %v1448 = vrot.slane %v1443, 2
    %v1449 = vsel %vm1446, %v1447, %v1448
    %v1450 = vsel %vm74, %v1449, 0
    %1452 = vmatprep.subr.mxu0 0.0
    %1453 = vmatpush1.msra.mxu0 %v205
    %1454 = vmatprep.subr.mxu0 0.0
    %1455 = vmatpush1.msra.mxu0 %v206
    %1456 = vmatprep.subr.mxu0 0.0
    %1457 = vmatpush1.msra.mxu0 0.0
    %1458 = vmatprep.subr.mxu0 0.0
    %1459 = vmatpush1.msra.mxu0 0.0
    %1460 = vmatprep.subr.mxu0 0.0
    %1461 = vmatpush1.msra.mxu0 0.0
    %1462 = vmatprep.subr.mxu0 0.0
    %1463 = vmatpush1.msra.mxu0 0.0
    %1464 = vmatprep.subr.mxu0 0.0
    %1465 = vmatpush1.msra.mxu0 0.0
    %1466 = vmatprep.subr.mxu0 0.0
    %1467 = vmatpush1.msra.mxu0 0.0
    %1468 = vmatprep.subr.mxu0 0.0
    %1469 = vmatpush1.msra.mxu0 0.0
    %1470 = vmatprep.subr.mxu0 0.0
    %1471 = vmatpush1.msra.mxu0 0.0
    %1472 = vmatprep.subr.mxu0 0.0
    %1473 = vmatpush1.msra.mxu0 0.0
    %1474 = vmatprep.subr.mxu0 0.0
    %1475 = vmatpush1.msra.mxu0 0.0
    %1476 = vmatprep.subr.mxu0 0.0
    %1477 = vmatpush1.msra.mxu0 0.0
    %1478 = vmatprep.subr.mxu0 0.0
    %1479 = vmatpush1.msra.mxu0 0.0
    %1480 = vmatprep.subr.mxu0 0.0
    %1481 = vmatpush1.msra.mxu0 0.0
    %1482 = vmatprep.subr.mxu0 0.0
    %1483 = vmatpush1.msra.mxu0 0.0
    %1484 = vmatprep.subr.mxu0 0.0
    %1485 = vmatpush1.msra.mxu0 0.0
    %1486 = vmatprep.subr.mxu0 0.0
    %1487 = vmatpush1.msra.mxu0 0.0
    %1488 = vmatprep.subr.mxu0 0.0
    %1489 = vmatpush1.msra.mxu0 0.0
    %1490 = vmatprep.subr.mxu0 0.0
    %1491 = vmatpush1.msra.mxu0 0.0
    %1492 = vmatprep.subr.mxu0 0.0
    %1493 = vmatpush1.msra.mxu0 0.0
    %1494 = vmatprep.subr.mxu0 0.0
    %1495 = vmatpush1.msra.mxu0 0.0
    %1496 = vmatprep.subr.mxu0 0.0
    %1497 = vmatpush1.msra.mxu0 0.0
    %1498 = vmatprep.subr.mxu0 0.0
    %1499 = vmatpush1.msra.mxu0 0.0
    %1500 = vmatprep.subr.mxu0 0.0
    %1501 = vmatpush1.msra.mxu0 0.0
    %1502 = vmatprep.subr.mxu0 0.0
    %1503 = vmatpush1.msra.mxu0 0.0
    %1504 = vmatprep.subr.mxu0 0.0
    %1505 = vmatpush1.msra.mxu0 0.0
    %1506 = vmatprep.subr.mxu0 0.0
    %1507 = vmatpush1.msra.mxu0 0.0
    %1508 = vmatprep.subr.mxu0 0.0
    %1509 = vmatpush1.msra.mxu0 0.0
    %1510 = vmatprep.subr.mxu0 0.0
    %1511 = vmatpush1.msra.mxu0 0.0
    %1512 = vmatprep.subr.mxu0 0.0
    %1513 = vmatpush1.msra.mxu0 0.0
    %1514 = vmatprep.subr.mxu0 0.0
    %1515 = vmatpush1.msra.mxu0 0.0
    %1516 = vmatprep.mubr.f32.mxu0 0.0
    %1517 = vmatmul.mubr.f32.gmra.mrb[0].mxu0 %v1450
    %v1518 = vpop.f32.mrb[0].mxu0
    %v1519 = vadd.f32 %v212, %v1518
    %v1520 = vpop.f32.mrb[0].mxu0
    %1521 = vdwg.mxu0
    %v1522 = vxor.u32 %v1519, 2147483648
    %v1523 = vmul.f32 %v1522, 1.442695
    %v1524 = vpow.pop %v1523
    %v1525 = vadd.f32 %v1524, 1.0
    %v1526 = vrcp.pop %v1525
    %v1527 = vmul.f32 1.0, %v1526
    %v1528 = vtanh.pop %v1519
    %v1529 = vmul.f32 %v1527, %v1075
    %1531 = vrot.lane.b32.xlu0 %v1528, 112
    %v1532 = vpop.permute.xlu0 %1531
    %v1534 = vmul.f32 %v1527, %v1532
    %1536 = vrot.lane.b32.xlu0 %v1534, 8
    %v1537 = vpop.permute.xlu0 %1536
    %v1539 = vadd.f32 %v1529, %v1537
    %v1540 = vtanh.pop %v1539
    %1542 = vrot.lane.b32.xlu0 %v1540, 16
    %v1543 = vpop.permute.xlu0 %1542
    %v1545 = vmul.f32 %v1527, %v1543
    %v1546 = vrot.slane %v1402, 2
    %v1547 = vrot.slane %v1403, 1
    %v1548 = vsel %vm513, %v1547, %v1546
    %v1549 = vsel %vm516, %v1404, %v1548
    %v1550 = vrot.slane %v1405, 7
    %v1551 = vsel %vm519, %v1550, %v1549
    %v1552 = vrot.slane %v1406, 6
    %v1553 = vsel %vm522, %v1552, %v1551
    %v1554 = vrot.slane %v1407, 5
    %v1555 = vsel %vm525, %v1554, %v1553
    %v1556 = vrot.slane %v1408, 4
    %v1557 = vsel %vm528, %v1556, %v1555
    %v1558 = vrot.slane %v1409, 3
    %v1559 = vsel %vm531, %v1558, %v1557
    %1560 = vrot.lane.b32.xlu0 %v1559, 104
    %v1561 = vpop.permute.xlu0 %1560
    %v1562 = vsel %vm214, %v1561, 0
    %1564 = vmatprep.subr.mxu0 0.0
    %1565 = vmatpush1.msra.mxu0 %v204
    %1566 = vmatprep.subr.mxu0 0.0
    %1567 = vmatpush1.msra.mxu0 0.0
    %1568 = vmatprep.subr.mxu0 0.0
    %1569 = vmatpush1.msra.mxu0 0.0
    %1570 = vmatprep.subr.mxu0 0.0
    %1571 = vmatpush1.msra.mxu0 0.0
    %1572 = vmatprep.subr.mxu0 0.0
    %1573 = vmatpush1.msra.mxu0 0.0
    %1574 = vmatprep.subr.mxu0 0.0
    %1575 = vmatpush1.msra.mxu0 0.0
    %1576 = vmatprep.subr.mxu0 0.0
    %1577 = vmatpush1.msra.mxu0 0.0
    %1578 = vmatprep.subr.mxu0 0.0
    %1579 = vmatpush1.msra.mxu0 0.0
    %1580 = vmatprep.subr.mxu0 0.0
    %1581 = vmatpush1.msra.mxu0 0.0
    %1582 = vmatprep.subr.mxu0 0.0
    %1583 = vmatpush1.msra.mxu0 0.0
    %1584 = vmatprep.subr.mxu0 0.0
    %1585 = vmatpush1.msra.mxu0 0.0
    %1586 = vmatprep.subr.mxu0 0.0
    %1587 = vmatpush1.msra.mxu0 0.0
    %1588 = vmatprep.subr.mxu0 0.0
    %1589 = vmatpush1.msra.mxu0 0.0
    %1590 = vmatprep.subr.mxu0 0.0
    %1591 = vmatpush1.msra.mxu0 0.0
    %1592 = vmatprep.subr.mxu0 0.0
    %1593 = vmatpush1.msra.mxu0 0.0
    %1594 = vmatprep.subr.mxu0 0.0
    %1595 = vmatpush1.msra.mxu0 0.0
    %1596 = vmatprep.subr.mxu0 0.0
    %1597 = vmatpush1.msra.mxu0 0.0
    %1598 = vmatprep.subr.mxu0 0.0
    %1599 = vmatpush1.msra.mxu0 0.0
    %1600 = vmatprep.subr.mxu0 0.0
    %1601 = vmatpush1.msra.mxu0 0.0
    %1602 = vmatprep.subr.mxu0 0.0
    %1603 = vmatpush1.msra.mxu0 0.0
    %1604 = vmatprep.subr.mxu0 0.0
    %1605 = vmatpush1.msra.mxu0 0.0
    %1606 = vmatprep.subr.mxu0 0.0
    %1607 = vmatpush1.msra.mxu0 0.0
    %1608 = vmatprep.subr.mxu0 0.0
    %1609 = vmatpush1.msra.mxu0 0.0
    %1610 = vmatprep.subr.mxu0 0.0
    %1611 = vmatpush1.msra.mxu0 0.0
    %1612 = vmatprep.subr.mxu0 0.0
    %1613 = vmatpush1.msra.mxu0 0.0
    %1614 = vmatprep.subr.mxu0 0.0
    %1615 = vmatpush1.msra.mxu0 0.0
    %1616 = vmatprep.subr.mxu0 0.0
    %1617 = vmatpush1.msra.mxu0 0.0
    %1618 = vmatprep.subr.mxu0 0.0
    %1619 = vmatpush1.msra.mxu0 0.0
    %1620 = vmatprep.subr.mxu0 0.0
    %1621 = vmatpush1.msra.mxu0 0.0
    %1622 = vmatprep.subr.mxu0 0.0
    %1623 = vmatpush1.msra.mxu0 0.0
    %1624 = vmatprep.subr.mxu0 0.0
    %1625 = vmatpush1.msra.mxu0 0.0
    %1626 = vmatprep.subr.mxu0 0.0
    %1627 = vmatpush1.msra.mxu0 0.0
    %1628 = vmatprep.mubr.f32.mxu0 0.0
    %1629 = vmatmul.mubr.f32.gmra.mrb[0].mxu0 %v1562
    %v1630 = vpop.f32.mrb[0].mxu0
    %v1631 = vadd.f32 0.0, %v1630
    %v1632 = vpop.f32.mrb[0].mxu0
    %1633 = vdwg.mxu0
    %v1635 = vrot.slane %v1631, 5
    %v1636 = vrot.slane %v1631, 6
    %v1637 = vrot.slane %v1631, 7
    %v1638 = vrot.slane %v1631, 1
    %v1639 = vrot.slane %v1631, 2
    %v1640 = vrot.slane %v1631, 3
    %v1641 = vrot.slane %v1631, 4
    %v1650 = vadd.f32 %v166, %v1635
    %v1651 = vadd.f32 %v171, %v1636
    %v1652 = vadd.f32 %v176, %v1637
    %v1653 = vadd.f32 %v181, %v1631
    %v1654 = vadd.f32 %v186, %v1638
    %v1655 = vadd.f32 %v191, %v1639
    %v1656 = vadd.f32 %v196, %v1640
    %v1657 = vadd.f32 %v201, %v1641
    %v1658 = vxor.u32 %v1650, 2147483648
    %v1659 = vxor.u32 %v1651, 2147483648
    %v1660 = vxor.u32 %v1652, 2147483648
    %v1661 = vxor.u32 %v1653, 2147483648
    %v1662 = vxor.u32 %v1654, 2147483648
    %v1663 = vxor.u32 %v1655, 2147483648
    %v1664 = vxor.u32 %v1656, 2147483648
    %v1665 = vxor.u32 %v1657, 2147483648
    %v1666 = vmul.f32 %v1658, 1.442695
    %v1667 = vpow.pop %v1666
    %v1668 = vmul.f32 %v1659, 1.442695
    %v1669 = vpow.pop %v1668
    %v1670 = vmul.f32 %v1660, 1.442695
    %v1671 = vpow.pop %v1670
    %v1672 = vmul.f32 %v1661, 1.442695
    %v1673 = vpow.pop %v1672
    %v1674 = vmul.f32 %v1662, 1.442695
    %v1675 = vpow.pop %v1674
    %v1676 = vmul.f32 %v1663, 1.442695
    %v1677 = vpow.pop %v1676
    %v1678 = vmul.f32 %v1664, 1.442695
    %v1679 = vpow.pop %v1678
    %v1680 = vmul.f32 %v1665, 1.442695
    %v1681 = vpow.pop %v1680
    %v1682 = vadd.f32 %v1667, 1.0
    %v1683 = vadd.f32 %v1669, 1.0
    %v1684 = vadd.f32 %v1671, 1.0
    %v1685 = vadd.f32 %v1673, 1.0
    %v1686 = vadd.f32 %v1675, 1.0
    %v1687 = vadd.f32 %v1677, 1.0
    %v1688 = vadd.f32 %v1679, 1.0
    %v1689 = vadd.f32 %v1681, 1.0
    %v1690 = vrcp.pop %v1682
    %v1691 = vmul.f32 1.0, %v1690
    %v1692 = vrcp.pop %v1683
    %v1693 = vmul.f32 1.0, %v1692
    %v1694 = vrcp.pop %v1684
    %v1695 = vmul.f32 1.0, %v1694
    %v1696 = vrcp.pop %v1685
    %v1697 = vmul.f32 1.0, %v1696
    %v1698 = vrcp.pop %v1686
    %v1699 = vmul.f32 1.0, %v1698
    %v1700 = vrcp.pop %v1687
    %v1701 = vmul.f32 1.0, %v1700
    %v1702 = vrcp.pop %v1688
    %v1703 = vmul.f32 1.0, %v1702
    %v1704 = vrcp.pop %v1689
    %v1705 = vmul.f32 1.0, %v1704
    %v1706 = vtanh.pop %v1650
    %v1707 = vtanh.pop %v1651
    %v1708 = vtanh.pop %v1652
    %v1709 = vtanh.pop %v1653
    %v1710 = vtanh.pop %v1654
    %v1711 = vtanh.pop %v1655
    %v1712 = vtanh.pop %v1656
    %v1713 = vtanh.pop %v1657
    %v1722 = vrot.slane %v1354, 7
    %v1723 = vrot.slane %v1355, 7
    %v1724 = vrot.slane %v1356, 7
    %v1725 = vrot.slane %v1357, 7
    %v1726 = vrot.slane %v1358, 7
    %v1727 = vrot.slane %v1359, 7
    %v1728 = vrot.slane %v1360, 7
    %v1729 = vrot.slane %v1361, 7
    %v1738 = vmul.f32 %v1691, %v1722
    %v1739 = vmul.f32 %v1693, %v1723
    %v1740 = vmul.f32 %v1695, %v1724
    %v1741 = vmul.f32 %v1697, %v1725
    %v1742 = vmul.f32 %v1699, %v1726
    %v1743 = vmul.f32 %v1701, %v1727
    %v1744 = vmul.f32 %v1703, %v1728
    %v1745 = vmul.f32 %v1705, %v1729
    %1754 = vrot.lane.b32.xlu0 %v1706, 112
    %v1755 = vpop.permute.xlu0 %1754
    %1756 = vrot.lane.b32.xlu0 %v1707, 112
    %v1757 = vpop.permute.xlu0 %1756
    %1758 = vrot.lane.b32.xlu0 %v1708, 112
    %v1759 = vpop.permute.xlu0 %1758
    %1760 = vrot.lane.b32.xlu0 %v1709, 112
    %v1761 = vpop.permute.xlu0 %1760
    %1762 = vrot.lane.b32.xlu0 %v1710, 112
    %v1763 = vpop.permute.xlu0 %1762
    %1764 = vrot.lane.b32.xlu0 %v1711, 112
    %v1765 = vpop.permute.xlu0 %1764
    %1766 = vrot.lane.b32.xlu0 %v1712, 112
    %v1767 = vpop.permute.xlu0 %1766
    %1768 = vrot.lane.b32.xlu0 %v1713, 112
    %v1769 = vpop.permute.xlu0 %1768
    %v1778 = vmul.f32 %v1691, %v1755
    %v1779 = vmul.f32 %v1693, %v1757
    %v1780 = vmul.f32 %v1695, %v1759
    %v1781 = vmul.f32 %v1697, %v1761
    %v1782 = vmul.f32 %v1699, %v1763
    %v1783 = vmul.f32 %v1701, %v1765
    %v1784 = vmul.f32 %v1703, %v1767
    %v1785 = vmul.f32 %v1705, %v1769
    %1794 = vrot.lane.b32.xlu0 %v1778, 8
    %v1795 = vpop.permute.xlu0 %1794
    %1796 = vrot.lane.b32.xlu0 %v1779, 8
    %v1797 = vpop.permute.xlu0 %1796
    %1798 = vrot.lane.b32.xlu0 %v1780, 8
    %v1799 = vpop.permute.xlu0 %1798
    %1800 = vrot.lane.b32.xlu0 %v1781, 8
    %v1801 = vpop.permute.xlu0 %1800
    %1802 = vrot.lane.b32.xlu0 %v1782, 8
    %v1803 = vpop.permute.xlu0 %1802
    %1804 = vrot.lane.b32.xlu0 %v1783, 8
    %v1805 = vpop.permute.xlu0 %1804
    %1806 = vrot.lane.b32.xlu0 %v1784, 8
    %v1807 = vpop.permute.xlu0 %1806
    %1808 = vrot.lane.b32.xlu0 %v1785, 8
    %v1809 = vpop.permute.xlu0 %1808
    %v1818 = vadd.f32 %v1738, %v1795
    %v1819 = vadd.f32 %v1739, %v1797
    %v1820 = vadd.f32 %v1740, %v1799
    %v1821 = vadd.f32 %v1741, %v1801
    %v1822 = vadd.f32 %v1742, %v1803
    %v1823 = vadd.f32 %v1743, %v1805
    %v1824 = vadd.f32 %v1744, %v1807
    %v1825 = vadd.f32 %v1745, %v1809
    %v1826 = vtanh.pop %v1818
    %v1827 = vtanh.pop %v1819
    %v1828 = vtanh.pop %v1820
    %v1829 = vtanh.pop %v1821
    %v1830 = vtanh.pop %v1822
    %v1831 = vtanh.pop %v1823
    %v1832 = vtanh.pop %v1824
    %v1833 = vtanh.pop %v1825
    %1842 = vrot.lane.b32.xlu0 %v1826, 16
    %v1843 = vpop.permute.xlu0 %1842
    %1844 = vrot.lane.b32.xlu0 %v1827, 16
    %v1845 = vpop.permute.xlu0 %1844
    %1846 = vrot.lane.b32.xlu0 %v1828, 16
    %v1847 = vpop.permute.xlu0 %1846
    %1848 = vrot.lane.b32.xlu0 %v1829, 16
    %v1849 = vpop.permute.xlu0 %1848
    %1850 = vrot.lane.b32.xlu0 %v1830, 16
    %v1851 = vpop.permute.xlu0 %1850
    %1852 = vrot.lane.b32.xlu0 %v1831, 16
    %v1853 = vpop.permute.xlu0 %1852
    %1854 = vrot.lane.b32.xlu0 %v1832, 16
    %v1855 = vpop.permute.xlu0 %1854
    %1856 = vrot.lane.b32.xlu0 %v1833, 16
    %v1857 = vpop.permute.xlu0 %1856
    %v1866 = vmul.f32 %v1691, %v1843
    %v1867 = vmul.f32 %v1693, %v1845
    %v1868 = vmul.f32 %v1695, %v1847
    %v1869 = vmul.f32 %v1697, %v1849
    %v1870 = vmul.f32 %v1699, %v1851
    %v1871 = vmul.f32 %v1701, %v1853
    %v1872 = vmul.f32 %v1703, %v1855
    %v1873 = vmul.f32 %v1705, %v1857
    %v1882 = vrot.slane %v1867, 7
    %v1883 = vsel %vm522, %v1882, %v1866
    %v1884 = vrot.slane %v1868, 6
    %v1885 = vsel %vm525, %v1884, %v1883
    %v1886 = vrot.slane %v1869, 5
    %v1887 = vsel %vm528, %v1886, %v1885
    %v1888 = vrot.slane %v1870, 4
    %v1889 = vsel %vm531, %v1888, %v1887
    %v1890 = vrot.slane %v1871, 3
    %v1891 = vrot.slane %v1872, 2
    %v1892 = vsel %vm513, %v1891, %v1890
    %v1893 = vrot.slane %v1873, 1
    %v1894 = vsel %vm516, %v1893, %v1892
    %1895 = vrot.lane.b32.xlu0 %v1889, 104
    %v1896 = vpop.permute.xlu0 %1895
    %1897 = vrot.lane.b32.xlu0 %v1894, 104
    %v1898 = vpop.permute.xlu0 %1897
    %v1902 = vrot.slane %v1545, 5
    %1903 = vrot.lane.b32.xlu0 %v1902, 112
    %v1904 = vpop.permute.xlu0 %1903
    %v1906 = vsel %vm214, %v1896, %v1904
    %v1907 = vsel %vm214, %v1898, %v1904
    %vm1910 = vcmask 1044480
    %v1911 = vrot.slane %v1906, 3
    %v1912 = vrot.slane %v1907, 3
    %v1913 = vsel %vm1910, %v1911, %v1912
    %v1914 = vsel %vm74, %v1913, 0
    %1916 = vmatprep.subr.mxu0 0.0
    %1917 = vmatpush1.msra.mxu0 %v205
    %1918 = vmatprep.subr.mxu0 0.0
    %1919 = vmatpush1.msra.mxu0 %v206
    %1920 = vmatprep.subr.mxu0 0.0
    %1921 = vmatpush1.msra.mxu0 0.0
    %1922 = vmatprep.subr.mxu0 0.0
    %1923 = vmatpush1.msra.mxu0 0.0
    %1924 = vmatprep.subr.mxu0 0.0
    %1925 = vmatpush1.msra.mxu0 0.0
    %1926 = vmatprep.subr.mxu0 0.0
    %1927 = vmatpush1.msra.mxu0 0.0
    %1928 = vmatprep.subr.mxu0 0.0
    %1929 = vmatpush1.msra.mxu0 0.0
    %1930 = vmatprep.subr.mxu0 0.0
    %1931 = vmatpush1.msra.mxu0 0.0
    %1932 = vmatprep.subr.mxu0 0.0
    %1933 = vmatpush1.msra.mxu0 0.0
    %1934 = vmatprep.subr.mxu0 0.0
    %1935 = vmatpush1.msra.mxu0 0.0
    %1936 = vmatprep.subr.mxu0 0.0
    %1937 = vmatpush1.msra.mxu0 0.0
    %1938 = vmatprep.subr.mxu0 0.0
    %1939 = vmatpush1.msra.mxu0 0.0
    %1940 = vmatprep.subr.mxu0 0.0
    %1941 = vmatpush1.msra.mxu0 0.0
    %1942 = vmatprep.subr.mxu0 0.0
    %1943 = vmatpush1.msra.mxu0 0.0
    %1944 = vmatprep.subr.mxu0 0.0
    %1945 = vmatpush1.msra.mxu0 0.0
    %1946 = vmatprep.subr.mxu0 0.0
    %1947 = vmatpush1.msra.mxu0 0.0
    %1948 = vmatprep.subr.mxu0 0.0
    %1949 = vmatpush1.msra.mxu0 0.0
    %1950 = vmatprep.subr.mxu0 0.0
    %1951 = vmatpush1.msra.mxu0 0.0
    %1952 = vmatprep.subr.mxu0 0.0
    %1953 = vmatpush1.msra.mxu0 0.0
    %1954 = vmatprep.subr.mxu0 0.0
    %1955 = vmatpush1.msra.mxu0 0.0
    %1956 = vmatprep.subr.mxu0 0.0
    %1957 = vmatpush1.msra.mxu0 0.0
    %1958 = vmatprep.subr.mxu0 0.0
    %1959 = vmatpush1.msra.mxu0 0.0
    %1960 = vmatprep.subr.mxu0 0.0
    %1961 = vmatpush1.msra.mxu0 0.0
    %1962 = vmatprep.subr.mxu0 0.0
    %1963 = vmatpush1.msra.mxu0 0.0
    %1964 = vmatprep.subr.mxu0 0.0
    %1965 = vmatpush1.msra.mxu0 0.0
    %1966 = vmatprep.subr.mxu0 0.0
    %1967 = vmatpush1.msra.mxu0 0.0
    %1968 = vmatprep.subr.mxu0 0.0
    %1969 = vmatpush1.msra.mxu0 0.0
    %1970 = vmatprep.subr.mxu0 0.0
    %1971 = vmatpush1.msra.mxu0 0.0
    %1972 = vmatprep.subr.mxu0 0.0
    %1973 = vmatpush1.msra.mxu0 0.0
    %1974 = vmatprep.subr.mxu0 0.0
    %1975 = vmatpush1.msra.mxu0 0.0
    %1976 = vmatprep.subr.mxu0 0.0
    %1977 = vmatpush1.msra.mxu0 0.0
    %1978 = vmatprep.subr.mxu0 0.0
    %1979 = vmatpush1.msra.mxu0 0.0
    %1980 = vmatprep.mubr.f32.mxu0 0.0
    %1981 = vmatmul.mubr.f32.gmra.mrb[0].mxu0 %v1914
    %v1982 = vpop.f32.mrb[0].mxu0
    %v1983 = vadd.f32 %v212, %v1982
    %v1984 = vpop.f32.mrb[0].mxu0
    %1985 = vdwg.mxu0
    %v1986 = vxor.u32 %v1983, 2147483648
    %v1987 = vmul.f32 %v1986, 1.442695
    %v1988 = vpow.pop %v1987
    %v1989 = vadd.f32 %v1988, 1.0
    %v1990 = vrcp.pop %v1989
    %v1991 = vmul.f32 1.0, %v1990
    %v1992 = vtanh.pop %v1983
    %v1993 = vmul.f32 %v1991, %v1539
    %1995 = vrot.lane.b32.xlu0 %v1992, 112
    %v1996 = vpop.permute.xlu0 %1995
    %v1998 = vmul.f32 %v1991, %v1996
    %2000 = vrot.lane.b32.xlu0 %v1998, 8
    %v2001 = vpop.permute.xlu0 %2000
    %v2003 = vadd.f32 %v1993, %v2001
    %v2004 = vtanh.pop %v2003
    %2006 = vrot.lane.b32.xlu0 %v2004, 16
    %v2007 = vpop.permute.xlu0 %2006
    %v2009 = vmul.f32 %v1991, %v2007
    %v2010 = vrot.slane %v1866, 3
    %v2011 = vrot.slane %v1867, 2
    %v2012 = vsel %vm513, %v2011, %v2010
    %v2013 = vrot.slane %v1868, 1
    %v2014 = vsel %vm516, %v2013, %v2012
    %v2015 = vsel %vm519, %v1869, %v2014
    %v2016 = vrot.slane %v1870, 7
    %v2017 = vsel %vm522, %v2016, %v2015
    %v2018 = vrot.slane %v1871, 6
    %v2019 = vsel %vm525, %v2018, %v2017
    %v2020 = vrot.slane %v1872, 5
    %v2021 = vsel %vm528, %v2020, %v2019
    %v2022 = vrot.slane %v1873, 4
    %v2023 = vsel %vm531, %v2022, %v2021
    %2024 = vrot.lane.b32.xlu0 %v2023, 104
    %v2025 = vpop.permute.xlu0 %2024
    %v2026 = vsel %vm214, %v2025, 0
    %2028 = vmatprep.subr.mxu0 0.0
    %2029 = vmatpush1.msra.mxu0 %v204
    %2030 = vmatprep.subr.mxu0 0.0
    %2031 = vmatpush1.msra.mxu0 0.0
    %2032 = vmatprep.subr.mxu0 0.0
    %2033 = vmatpush1.msra.mxu0 0.0
    %2034 = vmatprep.subr.mxu0 0.0
    %2035 = vmatpush1.msra.mxu0 0.0
    %2036 = vmatprep.subr.mxu0 0.0
    %2037 = vmatpush1.msra.mxu0 0.0
    %2038 = vmatprep.subr.mxu0 0.0
    %2039 = vmatpush1.msra.mxu0 0.0
    %2040 = vmatprep.subr.mxu0 0.0
    %2041 = vmatpush1.msra.mxu0 0.0
    %2042 = vmatprep.subr.mxu0 0.0
    %2043 = vmatpush1.msra.mxu0 0.0
    %2044 = vmatprep.subr.mxu0 0.0
    %2045 = vmatpush1.msra.mxu0 0.0
    %2046 = vmatprep.subr.mxu0 0.0
    %2047 = vmatpush1.msra.mxu0 0.0
    %2048 = vmatprep.subr.mxu0 0.0
    %2049 = vmatpush1.msra.mxu0 0.0
    %2050 = vmatprep.subr.mxu0 0.0
    %2051 = vmatpush1.msra.mxu0 0.0
    %2052 = vmatprep.subr.mxu0 0.0
    %2053 = vmatpush1.msra.mxu0 0.0
    %2054 = vmatprep.subr.mxu0 0.0
    %2055 = vmatpush1.msra.mxu0 0.0
    %2056 = vmatprep.subr.mxu0 0.0
    %2057 = vmatpush1.msra.mxu0 0.0
    %2058 = vmatprep.subr.mxu0 0.0
    %2059 = vmatpush1.msra.mxu0 0.0
    %2060 = vmatprep.subr.mxu0 0.0
    %2061 = vmatpush1.msra.mxu0 0.0
    %2062 = vmatprep.subr.mxu0 0.0
    %2063 = vmatpush1.msra.mxu0 0.0
    %2064 = vmatprep.subr.mxu0 0.0
    %2065 = vmatpush1.msra.mxu0 0.0
    %2066 = vmatprep.subr.mxu0 0.0
    %2067 = vmatpush1.msra.mxu0 0.0
    %2068 = vmatprep.subr.mxu0 0.0
    %2069 = vmatpush1.msra.mxu0 0.0
    %2070 = vmatprep.subr.mxu0 0.0
    %2071 = vmatpush1.msra.mxu0 0.0
    %2072 = vmatprep.subr.mxu0 0.0
    %2073 = vmatpush1.msra.mxu0 0.0
    %2074 = vmatprep.subr.mxu0 0.0
    %2075 = vmatpush1.msra.mxu0 0.0
    %2076 = vmatprep.subr.mxu0 0.0
    %2077 = vmatpush1.msra.mxu0 0.0
    %2078 = vmatprep.subr.mxu0 0.0
    %2079 = vmatpush1.msra.mxu0 0.0
    %2080 = vmatprep.subr.mxu0 0.0
    %2081 = vmatpush1.msra.mxu0 0.0
    %2082 = vmatprep.subr.mxu0 0.0
    %2083 = vmatpush1.msra.mxu0 0.0
    %2084 = vmatprep.subr.mxu0 0.0
    %2085 = vmatpush1.msra.mxu0 0.0
    %2086 = vmatprep.subr.mxu0 0.0
    %2087 = vmatpush1.msra.mxu0 0.0
    %2088 = vmatprep.subr.mxu0 0.0
    %2089 = vmatpush1.msra.mxu0 0.0
    %2090 = vmatprep.subr.mxu0 0.0
    %2091 = vmatpush1.msra.mxu0 0.0
    %2092 = vmatprep.mubr.f32.mxu0 0.0
    %2093 = vmatmul.mubr.f32.gmra.mrb[0].mxu0 %v2026
    %v2094 = vpop.f32.mrb[0].mxu0
    %v2095 = vadd.f32 0.0, %v2094
    %v2096 = vpop.f32.mrb[0].mxu0
    %2097 = vdwg.mxu0
    %v2099 = vrot.slane %v2095, 4
    %v2100 = vrot.slane %v2095, 5
    %v2101 = vrot.slane %v2095, 6
    %v2102 = vrot.slane %v2095, 7
    %v2103 = vrot.slane %v2095, 1
    %v2104 = vrot.slane %v2095, 2
    %v2105 = vrot.slane %v2095, 3
    %v2114 = vadd.f32 %v166, %v2099
    %v2115 = vadd.f32 %v171, %v2100
    %v2116 = vadd.f32 %v176, %v2101
    %v2117 = vadd.f32 %v181, %v2102
    %v2118 = vadd.f32 %v186, %v2095
    %v2119 = vadd.f32 %v191, %v2103
    %v2120 = vadd.f32 %v196, %v2104
    %v2121 = vadd.f32 %v201, %v2105
    %v2122 = vxor.u32 %v2114, 2147483648
    %v2123 = vxor.u32 %v2115, 2147483648
    %v2124 = vxor.u32 %v2116, 2147483648
    %v2125 = vxor.u32 %v2117, 2147483648
    %v2126 = vxor.u32 %v2118, 2147483648
    %v2127 = vxor.u32 %v2119, 2147483648
    %v2128 = vxor.u32 %v2120, 2147483648
    %v2129 = vxor.u32 %v2121, 2147483648
    %v2130 = vmul.f32 %v2122, 1.442695
    %v2131 = vpow.pop %v2130
    %v2132 = vmul.f32 %v2123, 1.442695
    %v2133 = vpow.pop %v2132
    %v2134 = vmul.f32 %v2124, 1.442695
    %v2135 = vpow.pop %v2134
    %v2136 = vmul.f32 %v2125, 1.442695
    %v2137 = vpow.pop %v2136
    %v2138 = vmul.f32 %v2126, 1.442695
    %v2139 = vpow.pop %v2138
    %v2140 = vmul.f32 %v2127, 1.442695
    %v2141 = vpow.pop %v2140
    %v2142 = vmul.f32 %v2128, 1.442695
    %v2143 = vpow.pop %v2142
    %v2144 = vmul.f32 %v2129, 1.442695
    %v2145 = vpow.pop %v2144
    %v2146 = vadd.f32 %v2131, 1.0
    %v2147 = vadd.f32 %v2133, 1.0
    %v2148 = vadd.f32 %v2135, 1.0
    %v2149 = vadd.f32 %v2137, 1.0
    %v2150 = vadd.f32 %v2139, 1.0
    %v2151 = vadd.f32 %v2141, 1.0
    %v2152 = vadd.f32 %v2143, 1.0
    %v2153 = vadd.f32 %v2145, 1.0
    %v2154 = vrcp.pop %v2146
    %v2155 = vmul.f32 1.0, %v2154
    %v2156 = vrcp.pop %v2147
    %v2157 = vmul.f32 1.0, %v2156
    %v2158 = vrcp.pop %v2148
    %v2159 = vmul.f32 1.0, %v2158
    %v2160 = vrcp.pop %v2149
    %v2161 = vmul.f32 1.0, %v2160
    %v2162 = vrcp.pop %v2150
    %v2163 = vmul.f32 1.0, %v2162
    %v2164 = vrcp.pop %v2151
    %v2165 = vmul.f32 1.0, %v2164
    %v2166 = vrcp.pop %v2152
    %v2167 = vmul.f32 1.0, %v2166
    %v2168 = vrcp.pop %v2153
    %v2169 = vmul.f32 1.0, %v2168
    %v2170 = vtanh.pop %v2114
    %v2171 = vtanh.pop %v2115
    %v2172 = vtanh.pop %v2116
    %v2173 = vtanh.pop %v2117
    %v2174 = vtanh.pop %v2118
    %v2175 = vtanh.pop %v2119
    %v2176 = vtanh.pop %v2120
    %v2177 = vtanh.pop %v2121
    %v2186 = vrot.slane %v1818, 7
    %v2187 = vrot.slane %v1819, 7
    %v2188 = vrot.slane %v1820, 7
    %v2189 = vrot.slane %v1821, 7
    %v2190 = vrot.slane %v1822, 7
    %v2191 = vrot.slane %v1823, 7
    %v2192 = vrot.slane %v1824, 7
    %v2193 = vrot.slane %v1825, 7
    %v2202 = vmul.f32 %v2155, %v2186
    %v2203 = vmul.f32 %v2157, %v2187
    %v2204 = vmul.f32 %v2159, %v2188
    %v2205 = vmul.f32 %v2161, %v2189
    %v2206 = vmul.f32 %v2163, %v2190
    %v2207 = vmul.f32 %v2165, %v2191
    %v2208 = vmul.f32 %v2167, %v2192
    %v2209 = vmul.f32 %v2169, %v2193
    %2218 = vrot.lane.b32.xlu0 %v2170, 112
    %v2219 = vpop.permute.xlu0 %2218
    %2220 = vrot.lane.b32.xlu0 %v2171, 112
    %v2221 = vpop.permute.xlu0 %2220
    %2222 = vrot.lane.b32.xlu0 %v2172, 112
    %v2223 = vpop.permute.xlu0 %2222
    %2224 = vrot.lane.b32.xlu0 %v2173, 112
    %v2225 = vpop.permute.xlu0 %2224
    %2226 = vrot.lane.b32.xlu0 %v2174, 112
    %v2227 = vpop.permute.xlu0 %2226
    %2228 = vrot.lane.b32.xlu0 %v2175, 112
    %v2229 = vpop.permute.xlu0 %2228
    %2230 = vrot.lane.b32.xlu0 %v2176, 112
    %v2231 = vpop.permute.xlu0 %2230
    %2232 = vrot.lane.b32.xlu0 %v2177, 112
    %v2233 = vpop.permute.xlu0 %2232
    %v2242 = vmul.f32 %v2155, %v2219
    %v2243 = vmul.f32 %v2157, %v2221
    %v2244 = vmul.f32 %v2159, %v2223
    %v2245 = vmul.f32 %v2161, %v2225
    %v2246 = vmul.f32 %v2163, %v2227
    %v2247 = vmul.f32 %v2165, %v2229
    %v2248 = vmul.f32 %v2167, %v2231
    %v2249 = vmul.f32 %v2169, %v2233
    %2258 = vrot.lane.b32.xlu0 %v2242, 8
    %v2259 = vpop.permute.xlu0 %2258
    %2260 = vrot.lane.b32.xlu0 %v2243, 8
    %v2261 = vpop.permute.xlu0 %2260
    %2262 = vrot.lane.b32.xlu0 %v2244, 8
    %v2263 = vpop.permute.xlu0 %2262
    %2264 = vrot.lane.b32.xlu0 %v2245, 8
    %v2265 = vpop.permute.xlu0 %2264
    %2266 = vrot.lane.b32.xlu0 %v2246, 8
    %v2267 = vpop.permute.xlu0 %2266
    %2268 = vrot.lane.b32.xlu0 %v2247, 8
    %v2269 = vpop.permute.xlu0 %2268
    %2270 = vrot.lane.b32.xlu0 %v2248, 8
    %v2271 = vpop.permute.xlu0 %2270
    %2272 = vrot.lane.b32.xlu0 %v2249, 8
    %v2273 = vpop.permute.xlu0 %2272
    %v2282 = vadd.f32 %v2202, %v2259
    %v2283 = vadd.f32 %v2203, %v2261
    %v2284 = vadd.f32 %v2204, %v2263
    %v2285 = vadd.f32 %v2205, %v2265
    %v2286 = vadd.f32 %v2206, %v2267
    %v2287 = vadd.f32 %v2207, %v2269
    %v2288 = vadd.f32 %v2208, %v2271
    %v2289 = vadd.f32 %v2209, %v2273
    %v2290 = vtanh.pop %v2282
    %v2291 = vtanh.pop %v2283
    %v2292 = vtanh.pop %v2284
    %v2293 = vtanh.pop %v2285
    %v2294 = vtanh.pop %v2286
    %v2295 = vtanh.pop %v2287
    %v2296 = vtanh.pop %v2288
    %v2297 = vtanh.pop %v2289
    %2306 = vrot.lane.b32.xlu0 %v2290, 16
    %v2307 = vpop.permute.xlu0 %2306
    %2308 = vrot.lane.b32.xlu0 %v2291, 16
    %v2309 = vpop.permute.xlu0 %2308
    %2310 = vrot.lane.b32.xlu0 %v2292, 16
    %v2311 = vpop.permute.xlu0 %2310
    %2312 = vrot.lane.b32.xlu0 %v2293, 16
    %v2313 = vpop.permute.xlu0 %2312
    %2314 = vrot.lane.b32.xlu0 %v2294, 16
    %v2315 = vpop.permute.xlu0 %2314
    %2316 = vrot.lane.b32.xlu0 %v2295, 16
    %v2317 = vpop.permute.xlu0 %2316
    %2318 = vrot.lane.b32.xlu0 %v2296, 16
    %v2319 = vpop.permute.xlu0 %2318
    %2320 = vrot.lane.b32.xlu0 %v2297, 16
    %v2321 = vpop.permute.xlu0 %2320
    %v2330 = vmul.f32 %v2155, %v2307
    %v2331 = vmul.f32 %v2157, %v2309
    %v2332 = vmul.f32 %v2159, %v2311
    %v2333 = vmul.f32 %v2161, %v2313
    %v2334 = vmul.f32 %v2163, %v2315
    %v2335 = vmul.f32 %v2165, %v2317
    %v2336 = vmul.f32 %v2167, %v2319
    %v2337 = vmul.f32 %v2169, %v2321
    %v2346 = vrot.slane %v2331, 7
    %v2347 = vsel %vm525, %v2346, %v2330
    %v2348 = vrot.slane %v2332, 6
    %v2349 = vsel %vm528, %v2348, %v2347
    %v2350 = vrot.slane %v2333, 5
    %v2351 = vsel %vm531, %v2350, %v2349
    %v2352 = vrot.slane %v2334, 4
    %v2353 = vrot.slane %v2335, 3
    %v2354 = vsel %vm513, %v2353, %v2352
    %v2355 = vrot.slane %v2336, 2
    %v2356 = vsel %vm516, %v2355, %v2354
    %v2357 = vrot.slane %v2337, 1
    %v2358 = vsel %vm519, %v2357, %v2356
    %2359 = vrot.lane.b32.xlu0 %v2351, 104
    %v2360 = vpop.permute.xlu0 %2359
    %2361 = vrot.lane.b32.xlu0 %v2358, 104
    %v2362 = vpop.permute.xlu0 %2361
    %v2366 = vrot.slane %v2009, 4
    %2367 = vrot.lane.b32.xlu0 %v2366, 112
    %v2368 = vpop.permute.xlu0 %2367
    %v2370 = vsel %vm214, %v2360, %v2368
    %v2371 = vsel %vm214, %v2362, %v2368
    %vm2374 = vcmask 1043456
    %v2375 = vrot.slane %v2370, 4
    %v2376 = vrot.slane %v2371, 4
    %v2377 = vsel %vm2374, %v2375, %v2376
    %v2378 = vsel %vm74, %v2377, 0
    %2380 = vmatprep.subr.mxu0 0.0
    %2381 = vmatpush1.msra.mxu0 %v205
    %2382 = vmatprep.subr.mxu0 0.0
    %2383 = vmatpush1.msra.mxu0 %v206
    %2384 = vmatprep.subr.mxu0 0.0
    %2385 = vmatpush1.msra.mxu0 0.0
    %2386 = vmatprep.subr.mxu0 0.0
    %2387 = vmatpush1.msra.mxu0 0.0
    %2388 = vmatprep.subr.mxu0 0.0
    %2389 = vmatpush1.msra.mxu0 0.0
    %2390 = vmatprep.subr.mxu0 0.0
    %2391 = vmatpush1.msra.mxu0 0.0
    %2392 = vmatprep.subr.mxu0 0.0
    %2393 = vmatpush1.msra.mxu0 0.0
    %2394 = vmatprep.subr.mxu0 0.0
    %2395 = vmatpush1.msra.mxu0 0.0
    %2396 = vmatprep.subr.mxu0 0.0
    %2397 = vmatpush1.msra.mxu0 0.0
    %2398 = vmatprep.subr.mxu0 0.0
    %2399 = vmatpush1.msra.mxu0 0.0
    %2400 = vmatprep.subr.mxu0 0.0
    %2401 = vmatpush1.msra.mxu0 0.0
    %2402 = vmatprep.subr.mxu0 0.0
    %2403 = vmatpush1.msra.mxu0 0.0
    %2404 = vmatprep.subr.mxu0 0.0
    %2405 = vmatpush1.msra.mxu0 0.0
    %2406 = vmatprep.subr.mxu0 0.0
    %2407 = vmatpush1.msra.mxu0 0.0
    %2408 = vmatprep.subr.mxu0 0.0
    %2409 = vmatpush1.msra.mxu0 0.0
    %2410 = vmatprep.subr.mxu0 0.0
    %2411 = vmatpush1.msra.mxu0 0.0
    %2412 = vmatprep.subr.mxu0 0.0
    %2413 = vmatpush1.msra.mxu0 0.0
    %2414 = vmatprep.subr.mxu0 0.0
    %2415 = vmatpush1.msra.mxu0 0.0
    %2416 = vmatprep.subr.mxu0 0.0
    %2417 = vmatpush1.msra.mxu0 0.0
    %2418 = vmatprep.subr.mxu0 0.0
    %2419 = vmatpush1.msra.mxu0 0.0
    %2420 = vmatprep.subr.mxu0 0.0
    %2421 = vmatpush1.msra.mxu0 0.0
    %2422 = vmatprep.subr.mxu0 0.0
    %2423 = vmatpush1.msra.mxu0 0.0
    %2424 = vmatprep.subr.mxu0 0.0
    %2425 = vmatpush1.msra.mxu0 0.0
    %2426 = vmatprep.subr.mxu0 0.0
    %2427 = vmatpush1.msra.mxu0 0.0
    %2428 = vmatprep.subr.mxu0 0.0
    %2429 = vmatpush1.msra.mxu0 0.0
    %2430 = vmatprep.subr.mxu0 0.0
    %2431 = vmatpush1.msra.mxu0 0.0
    %2432 = vmatprep.subr.mxu0 0.0
    %2433 = vmatpush1.msra.mxu0 0.0
    %2434 = vmatprep.subr.mxu0 0.0
    %2435 = vmatpush1.msra.mxu0 0.0
    %2436 = vmatprep.subr.mxu0 0.0
    %2437 = vmatpush1.msra.mxu0 0.0
    %2438 = vmatprep.subr.mxu0 0.0
    %2439 = vmatpush1.msra.mxu0 0.0
    %2440 = vmatprep.subr.mxu0 0.0
    %2441 = vmatpush1.msra.mxu0 0.0
    %2442 = vmatprep.subr.mxu0 0.0
    %2443 = vmatpush1.msra.mxu0 0.0
    %2444 = vmatprep.mubr.f32.mxu0 0.0
    %2445 = vmatmul.mubr.f32.gmra.mrb[0].mxu0 %v2378
    %v2446 = vpop.f32.mrb[0].mxu0
    %v2447 = vadd.f32 %v212, %v2446
    %v2448 = vpop.f32.mrb[0].mxu0
    %2449 = vdwg.mxu0
    %v2450 = vxor.u32 %v2447, 2147483648
    %v2451 = vmul.f32 %v2450, 1.442695
    %v2452 = vpow.pop %v2451
    %v2453 = vadd.f32 %v2452, 1.0
    %v2454 = vrcp.pop %v2453
    %v2455 = vmul.f32 1.0, %v2454
    %v2456 = vtanh.pop %v2447
    %v2457 = vmul.f32 %v2455, %v2003
    %2459 = vrot.lane.b32.xlu0 %v2456, 112
    %v2460 = vpop.permute.xlu0 %2459
    %v2462 = vmul.f32 %v2455, %v2460
    %2464 = vrot.lane.b32.xlu0 %v2462, 8
    %v2465 = vpop.permute.xlu0 %2464
    %v2467 = vadd.f32 %v2457, %v2465
    %v2468 = vtanh.pop %v2467
    %2470 = vrot.lane.b32.xlu0 %v2468, 16
    %v2471 = vpop.permute.xlu0 %2470
    %v2473 = vmul.f32 %v2455, %v2471
    %v2474 = vrot.slane %v2330, 4
    %v2475 = vrot.slane %v2331, 3
    %v2476 = vsel %vm513, %v2475, %v2474
    %v2477 = vrot.slane %v2332, 2
    %v2478 = vsel %vm516, %v2477, %v2476
    %v2479 = vrot.slane %v2333, 1
    %v2480 = vsel %vm519, %v2479, %v2478
    %v2481 = vsel %vm522, %v2334, %v2480
    %v2482 = vrot.slane %v2335, 7
    %v2483 = vsel %vm525, %v2482, %v2481
    %v2484 = vrot.slane %v2336, 6
    %v2485 = vsel %vm528, %v2484, %v2483
    %v2486 = vrot.slane %v2337, 5
    %v2487 = vsel %vm531, %v2486, %v2485
    %2488 = vrot.lane.b32.xlu0 %v2487, 104
    %v2489 = vpop.permute.xlu0 %2488
    %v2490 = vsel %vm214, %v2489, 0
    %2492 = vmatprep.subr.mxu0 0.0
    %2493 = vmatpush1.msra.mxu0 %v204
    %2494 = vmatprep.subr.mxu0 0.0
    %2495 = vmatpush1.msra.mxu0 0.0
    %2496 = vmatprep.subr.mxu0 0.0
    %2497 = vmatpush1.msra.mxu0 0.0
    %2498 = vmatprep.subr.mxu0 0.0
    %2499 = vmatpush1.msra.mxu0 0.0
    %2500 = vmatprep.subr.mxu0 0.0
    %2501 = vmatpush1.msra.mxu0 0.0
    %2502 = vmatprep.subr.mxu0 0.0
    %2503 = vmatpush1.msra.mxu0 0.0
    %2504 = vmatprep.subr.mxu0 0.0
    %2505 = vmatpush1.msra.mxu0 0.0
    %2506 = vmatprep.subr.mxu0 0.0
    %2507 = vmatpush1.msra.mxu0 0.0
    %2508 = vmatprep.subr.mxu0 0.0
    %2509 = vmatpush1.msra.mxu0 0.0
    %2510 = vmatprep.subr.mxu0 0.0
    %2511 = vmatpush1.msra.mxu0 0.0
    %2512 = vmatprep.subr.mxu0 0.0
    %2513 = vmatpush1.msra.mxu0 0.0
    %2514 = vmatprep.subr.mxu0 0.0
    %2515 = vmatpush1.msra.mxu0 0.0
    %2516 = vmatprep.subr.mxu0 0.0
    %2517 = vmatpush1.msra.mxu0 0.0
    %2518 = vmatprep.subr.mxu0 0.0
    %2519 = vmatpush1.msra.mxu0 0.0
    %2520 = vmatprep.subr.mxu0 0.0
    %2521 = vmatpush1.msra.mxu0 0.0
    %2522 = vmatprep.subr.mxu0 0.0
    %2523 = vmatpush1.msra.mxu0 0.0
    %2524 = vmatprep.subr.mxu0 0.0
    %2525 = vmatpush1.msra.mxu0 0.0
    %2526 = vmatprep.subr.mxu0 0.0
    %2527 = vmatpush1.msra.mxu0 0.0
    %2528 = vmatprep.subr.mxu0 0.0
    %2529 = vmatpush1.msra.mxu0 0.0
    %2530 = vmatprep.subr.mxu0 0.0
    %2531 = vmatpush1.msra.mxu0 0.0
    %2532 = vmatprep.subr.mxu0 0.0
    %2533 = vmatpush1.msra.mxu0 0.0
    %2534 = vmatprep.subr.mxu0 0.0
    %2535 = vmatpush1.msra.mxu0 0.0
    %2536 = vmatprep.subr.mxu0 0.0
    %2537 = vmatpush1.msra.mxu0 0.0
    %2538 = vmatprep.subr.mxu0 0.0
    %2539 = vmatpush1.msra.mxu0 0.0
    %2540 = vmatprep.subr.mxu0 0.0
    %2541 = vmatpush1.msra.mxu0 0.0
    %2542 = vmatprep.subr.mxu0 0.0
    %2543 = vmatpush1.msra.mxu0 0.0
    %2544 = vmatprep.subr.mxu0 0.0
    %2545 = vmatpush1.msra.mxu0 0.0
    %2546 = vmatprep.subr.mxu0 0.0
    %2547 = vmatpush1.msra.mxu0 0.0
    %2548 = vmatprep.subr.mxu0 0.0
    %2549 = vmatpush1.msra.mxu0 0.0
    %2550 = vmatprep.subr.mxu0 0.0
    %2551 = vmatpush1.msra.mxu0 0.0
    %2552 = vmatprep.subr.mxu0 0.0
    %2553 = vmatpush1.msra.mxu0 0.0
    %2554 = vmatprep.subr.mxu0 0.0
    %2555 = vmatpush1.msra.mxu0 0.0
    %2556 = vmatprep.mubr.f32.mxu0 0.0
    %2557 = vmatmul.mubr.f32.gmra.mrb[0].mxu0 %v2490
    %v2558 = vpop.f32.mrb[0].mxu0
    %v2559 = vadd.f32 0.0, %v2558
    %v2560 = vpop.f32.mrb[0].mxu0
    %2561 = vdwg.mxu0
    %v2563 = vrot.slane %v2559, 3
    %v2564 = vrot.slane %v2559, 4
    %v2565 = vrot.slane %v2559, 5
    %v2566 = vrot.slane %v2559, 6
    %v2567 = vrot.slane %v2559, 7
    %v2568 = vrot.slane %v2559, 1
    %v2569 = vrot.slane %v2559, 2
    %v2578 = vadd.f32 %v166, %v2563
    %v2579 = vadd.f32 %v171, %v2564
    %v2580 = vadd.f32 %v176, %v2565
    %v2581 = vadd.f32 %v181, %v2566
    %v2582 = vadd.f32 %v186, %v2567
    %v2583 = vadd.f32 %v191, %v2559
    %v2584 = vadd.f32 %v196, %v2568
    %v2585 = vadd.f32 %v201, %v2569
    %v2586 = vxor.u32 %v2578, 2147483648
    %v2587 = vxor.u32 %v2579, 2147483648
    %v2588 = vxor.u32 %v2580, 2147483648
    %v2589 = vxor.u32 %v2581, 2147483648
    %v2590 = vxor.u32 %v2582, 2147483648
    %v2591 = vxor.u32 %v2583, 2147483648
    %v2592 = vxor.u32 %v2584, 2147483648
    %v2593 = vxor.u32 %v2585, 2147483648
    %v2594 = vmul.f32 %v2586, 1.442695
    %v2595 = vpow.pop %v2594
    %v2596 = vmul.f32 %v2587, 1.442695
    %v2597 = vpow.pop %v2596
    %v2598 = vmul.f32 %v2588, 1.442695
    %v2599 = vpow.pop %v2598
    %v2600 = vmul.f32 %v2589, 1.442695
    %v2601 = vpow.pop %v2600
    %v2602 = vmul.f32 %v2590, 1.442695
    %v2603 = vpow.pop %v2602
    %v2604 = vmul.f32 %v2591, 1.442695
    %v2605 = vpow.pop %v2604
    %v2606 = vmul.f32 %v2592, 1.442695
    %v2607 = vpow.pop %v2606
    %v2608 = vmul.f32 %v2593, 1.442695
    %v2609 = vpow.pop %v2608
    %v2610 = vadd.f32 %v2595, 1.0
    %v2611 = vadd.f32 %v2597, 1.0
    %v2612 = vadd.f32 %v2599, 1.0
    %v2613 = vadd.f32 %v2601, 1.0
    %v2614 = vadd.f32 %v2603, 1.0
    %v2615 = vadd.f32 %v2605, 1.0
    %v2616 = vadd.f32 %v2607, 1.0
    %v2617 = vadd.f32 %v2609, 1.0
    %v2618 = vrcp.pop %v2610
    %v2619 = vmul.f32 1.0, %v2618
    %v2620 = vrcp.pop %v2611
    %v2621 = vmul.f32 1.0, %v2620
    %v2622 = vrcp.pop %v2612
    %v2623 = vmul.f32 1.0, %v2622
    %v2624 = vrcp.pop %v2613
    %v2625 = vmul.f32 1.0, %v2624
    %v2626 = vrcp.pop %v2614
    %v2627 = vmul.f32 1.0, %v2626
    %v2628 = vrcp.pop %v2615
    %v2629 = vmul.f32 1.0, %v2628
    %v2630 = vrcp.pop %v2616
    %v2631 = vmul.f32 1.0, %v2630
    %v2632 = vrcp.pop %v2617
    %v2633 = vmul.f32 1.0, %v2632
    %v2634 = vtanh.pop %v2578
    %v2635 = vtanh.pop %v2579
    %v2636 = vtanh.pop %v2580
    %v2637 = vtanh.pop %v2581
    %v2638 = vtanh.pop %v2582
    %v2639 = vtanh.pop %v2583
    %v2640 = vtanh.pop %v2584
    %v2641 = vtanh.pop %v2585
    %v2650 = vrot.slane %v2282, 7
    %v2651 = vrot.slane %v2283, 7
    %v2652 = vrot.slane %v2284, 7
    %v2653 = vrot.slane %v2285, 7
    %v2654 = vrot.slane %v2286, 7
    %v2655 = vrot.slane %v2287, 7
    %v2656 = vrot.slane %v2288, 7
    %v2657 = vrot.slane %v2289, 7
    %v2666 = vmul.f32 %v2619, %v2650
    %v2667 = vmul.f32 %v2621, %v2651
    %v2668 = vmul.f32 %v2623, %v2652
    %v2669 = vmul.f32 %v2625, %v2653
    %v2670 = vmul.f32 %v2627, %v2654
    %v2671 = vmul.f32 %v2629, %v2655
    %v2672 = vmul.f32 %v2631, %v2656
    %v2673 = vmul.f32 %v2633, %v2657
    %2682 = vrot.lane.b32.xlu0 %v2634, 112
    %v2683 = vpop.permute.xlu0 %2682
    %2684 = vrot.lane.b32.xlu0 %v2635, 112
    %v2685 = vpop.permute.xlu0 %2684
    %2686 = vrot.lane.b32.xlu0 %v2636, 112
    %v2687 = vpop.permute.xlu0 %2686
    %2688 = vrot.lane.b32.xlu0 %v2637, 112
    %v2689 = vpop.permute.xlu0 %2688
    %2690 = vrot.lane.b32.xlu0 %v2638, 112
    %v2691 = vpop.permute.xlu0 %2690
    %2692 = vrot.lane.b32.xlu0 %v2639, 112
    %v2693 = vpop.permute.xlu0 %2692
    %2694 = vrot.lane.b32.xlu0 %v2640, 112
    %v2695 = vpop.permute.xlu0 %2694
    %2696 = vrot.lane.b32.xlu0 %v2641, 112
    %v2697 = vpop.permute.xlu0 %2696
    %v2706 = vmul.f32 %v2619, %v2683
    %v2707 = vmul.f32 %v2621, %v2685
    %v2708 = vmul.f32 %v2623, %v2687
    %v2709 = vmul.f32 %v2625, %v2689
    %v2710 = vmul.f32 %v2627, %v2691
    %v2711 = vmul.f32 %v2629, %v2693
    %v2712 = vmul.f32 %v2631, %v2695
    %v2713 = vmul.f32 %v2633, %v2697
    %2722 = vrot.lane.b32.xlu0 %v2706, 8
    %v2723 = vpop.permute.xlu0 %2722
    %2724 = vrot.lane.b32.xlu0 %v2707, 8
    %v2725 = vpop.permute.xlu0 %2724
    %2726 = vrot.lane.b32.xlu0 %v2708, 8
    %v2727 = vpop.permute.xlu0 %2726
    %2728 = vrot.lane.b32.xlu0 %v2709, 8
    %v2729 = vpop.permute.xlu0 %2728
    %2730 = vrot.lane.b32.xlu0 %v2710, 8
    %v2731 = vpop.permute.xlu0 %2730
    %2732 = vrot.lane.b32.xlu0 %v2711, 8
    %v2733 = vpop.permute.xlu0 %2732
    %2734 = vrot.lane.b32.xlu0 %v2712, 8
    %v2735 = vpop.permute.xlu0 %2734
    %2736 = vrot.lane.b32.xlu0 %v2713, 8
    %v2737 = vpop.permute.xlu0 %2736
    %v2746 = vadd.f32 %v2666, %v2723
    %v2747 = vadd.f32 %v2667, %v2725
    %v2748 = vadd.f32 %v2668, %v2727
    %v2749 = vadd.f32 %v2669, %v2729
    %v2750 = vadd.f32 %v2670, %v2731
    %v2751 = vadd.f32 %v2671, %v2733
    %v2752 = vadd.f32 %v2672, %v2735
    %v2753 = vadd.f32 %v2673, %v2737
    %v2754 = vtanh.pop %v2746
    %v2755 = vtanh.pop %v2747
    %v2756 = vtanh.pop %v2748
    %v2757 = vtanh.pop %v2749
    %v2758 = vtanh.pop %v2750
    %v2759 = vtanh.pop %v2751
    %v2760 = vtanh.pop %v2752
    %v2761 = vtanh.pop %v2753
    %2770 = vrot.lane.b32.xlu0 %v2754, 16
    %v2771 = vpop.permute.xlu0 %2770
    %2772 = vrot.lane.b32.xlu0 %v2755, 16
    %v2773 = vpop.permute.xlu0 %2772
    %2774 = vrot.lane.b32.xlu0 %v2756, 16
    %v2775 = vpop.permute.xlu0 %2774
    %2776 = vrot.lane.b32.xlu0 %v2757, 16
    %v2777 = vpop.permute.xlu0 %2776
    %2778 = vrot.lane.b32.xlu0 %v2758, 16
    %v2779 = vpop.permute.xlu0 %2778
    %2780 = vrot.lane.b32.xlu0 %v2759, 16
    %v2781 = vpop.permute.xlu0 %2780
    %2782 = vrot.lane.b32.xlu0 %v2760, 16
    %v2783 = vpop.permute.xlu0 %2782
    %2784 = vrot.lane.b32.xlu0 %v2761, 16
    %v2785 = vpop.permute.xlu0 %2784
    %v2794 = vmul.f32 %v2619, %v2771
    %v2795 = vmul.f32 %v2621, %v2773
    %v2796 = vmul.f32 %v2623, %v2775
    %v2797 = vmul.f32 %v2625, %v2777
    %v2798 = vmul.f32 %v2627, %v2779
    %v2799 = vmul.f32 %v2629, %v2781
    %v2800 = vmul.f32 %v2631, %v2783
    %v2801 = vmul.f32 %v2633, %v2785
    %v2810 = vrot.slane %v2795, 7
    %v2811 = vsel %vm528, %v2810, %v2794
    %v2812 = vrot.slane %v2796, 6
    %v2813 = vsel %vm531, %v2812, %v2811
    %v2814 = vrot.slane %v2797, 5
    %v2815 = vrot.slane %v2798, 4
    %v2816 = vsel %vm513, %v2815, %v2814
    %v2817 = vrot.slane %v2799, 3
    %v2818 = vsel %vm516, %v2817, %v2816
    %v2819 = vrot.slane %v2800, 2
    %v2820 = vsel %vm519, %v2819, %v2818
    %v2821 = vrot.slane %v2801, 1
    %v2822 = vsel %vm522, %v2821, %v2820
    %2823 = vrot.lane.b32.xlu0 %v2813, 104
    %v2824 = vpop.permute.xlu0 %2823
    %2825 = vrot.lane.b32.xlu0 %v2822, 104
    %v2826 = vpop.permute.xlu0 %2825
    %v2830 = vrot.slane %v2473, 3
    %2831 = vrot.lane.b32.xlu0 %v2830, 112
    %v2832 = vpop.permute.xlu0 %2831
    %v2834 = vsel %vm214, %v2824, %v2832
    %v2835 = vsel %vm214, %v2826, %v2832
    %vm2838 = vcmask 1042432
    %v2839 = vrot.slane %v2834, 5
    %v2840 = vrot.slane %v2835, 5
    %v2841 = vsel %vm2838, %v2839, %v2840
    %v2842 = vsel %vm74, %v2841, 0
    %2844 = vmatprep.subr.mxu0 0.0
    %2845 = vmatpush1.msra.mxu0 %v205
    %2846 = vmatprep.subr.mxu0 0.0
    %2847 = vmatpush1.msra.mxu0 %v206
    %2848 = vmatprep.subr.mxu0 0.0
    %2849 = vmatpush1.msra.mxu0 0.0
    %2850 = vmatprep.subr.mxu0 0.0
    %2851 = vmatpush1.msra.mxu0 0.0
    %2852 = vmatprep.subr.mxu0 0.0
    %2853 = vmatpush1.msra.mxu0 0.0
    %2854 = vmatprep.subr.mxu0 0.0
    %2855 = vmatpush1.msra.mxu0 0.0
    %2856 = vmatprep.subr.mxu0 0.0
    %2857 = vmatpush1.msra.mxu0 0.0
    %2858 = vmatprep.subr.mxu0 0.0
    %2859 = vmatpush1.msra.mxu0 0.0
    %2860 = vmatprep.subr.mxu0 0.0
    %2861 = vmatpush1.msra.mxu0 0.0
    %2862 = vmatprep.subr.mxu0 0.0
    %2863 = vmatpush1.msra.mxu0 0.0
    %2864 = vmatprep.subr.mxu0 0.0
    %2865 = vmatpush1.msra.mxu0 0.0
    %2866 = vmatprep.subr.mxu0 0.0
    %2867 = vmatpush1.msra.mxu0 0.0
    %2868 = vmatprep.subr.mxu0 0.0
    %2869 = vmatpush1.msra.mxu0 0.0
    %2870 = vmatprep.subr.mxu0 0.0
    %2871 = vmatpush1.msra.mxu0 0.0
    %2872 = vmatprep.subr.mxu0 0.0
    %2873 = vmatpush1.msra.mxu0 0.0
    %2874 = vmatprep.subr.mxu0 0.0
    %2875 = vmatpush1.msra.mxu0 0.0
    %2876 = vmatprep.subr.mxu0 0.0
    %2877 = vmatpush1.msra.mxu0 0.0
    %2878 = vmatprep.subr.mxu0 0.0
    %2879 = vmatpush1.msra.mxu0 0.0
    %2880 = vmatprep.subr.mxu0 0.0
    %2881 = vmatpush1.msra.mxu0 0.0
    %2882 = vmatprep.subr.mxu0 0.0
    %2883 = vmatpush1.msra.mxu0 0.0
    %2884 = vmatprep.subr.mxu0 0.0
    %2885 = vmatpush1.msra.mxu0 0.0
    %2886 = vmatprep.subr.mxu0 0.0
    %2887 = vmatpush1.msra.mxu0 0.0
    %2888 = vmatprep.subr.mxu0 0.0
    %2889 = vmatpush1.msra.mxu0 0.0
    %2890 = vmatprep.subr.mxu0 0.0
    %2891 = vmatpush1.msra.mxu0 0.0
    %2892 = vmatprep.subr.mxu0 0.0
    %2893 = vmatpush1.msra.mxu0 0.0
    %2894 = vmatprep.subr.mxu0 0.0
    %2895 = vmatpush1.msra.mxu0 0.0
    %2896 = vmatprep.subr.mxu0 0.0
    %2897 = vmatpush1.msra.mxu0 0.0
    %2898 = vmatprep.subr.mxu0 0.0
    %2899 = vmatpush1.msra.mxu0 0.0
    %2900 = vmatprep.subr.mxu0 0.0
    %2901 = vmatpush1.msra.mxu0 0.0
    %2902 = vmatprep.subr.mxu0 0.0
    %2903 = vmatpush1.msra.mxu0 0.0
    %2904 = vmatprep.subr.mxu0 0.0
    %2905 = vmatpush1.msra.mxu0 0.0
    %2906 = vmatprep.subr.mxu0 0.0
    %2907 = vmatpush1.msra.mxu0 0.0
    %2908 = vmatprep.mubr.f32.mxu0 0.0
    %2909 = vmatmul.mubr.f32.gmra.mrb[0].mxu0 %v2842
    %v2910 = vpop.f32.mrb[0].mxu0
    %v2911 = vadd.f32 %v212, %v2910
    %v2912 = vpop.f32.mrb[0].mxu0
    %2913 = vdwg.mxu0
    %v2914 = vxor.u32 %v2911, 2147483648
    %v2915 = vmul.f32 %v2914, 1.442695
    %v2916 = vpow.pop %v2915
    %v2917 = vadd.f32 %v2916, 1.0
    %v2918 = vrcp.pop %v2917
    %v2919 = vmul.f32 1.0, %v2918
    %v2920 = vtanh.pop %v2911
    %v2921 = vmul.f32 %v2919, %v2467
    %2923 = vrot.lane.b32.xlu0 %v2920, 112
    %v2924 = vpop.permute.xlu0 %2923
    %v2926 = vmul.f32 %v2919, %v2924
    %2928 = vrot.lane.b32.xlu0 %v2926, 8
    %v2929 = vpop.permute.xlu0 %2928
    %v2931 = vadd.f32 %v2921, %v2929
    %v2932 = vtanh.pop %v2931
    %2934 = vrot.lane.b32.xlu0 %v2932, 16
    %v2935 = vpop.permute.xlu0 %2934
    %v2937 = vmul.f32 %v2919, %v2935
    %v2938 = vrot.slane %v2794, 5
    %v2939 = vrot.slane %v2795, 4
    %v2940 = vsel %vm513, %v2939, %v2938
    %v2941 = vrot.slane %v2796, 3
    %v2942 = vsel %vm516, %v2941, %v2940
    %v2943 = vrot.slane %v2797, 2
    %v2944 = vsel %vm519, %v2943, %v2942
    %v2945 = vrot.slane %v2798, 1
    %v2946 = vsel %vm522, %v2945, %v2944
    %v2947 = vsel %vm525, %v2799, %v2946
    %v2948 = vrot.slane %v2800, 7
    %v2949 = vsel %vm528, %v2948, %v2947
    %v2950 = vrot.slane %v2801, 6
    %v2951 = vsel %vm531, %v2950, %v2949
    %2952 = vrot.lane.b32.xlu0 %v2951, 104
    %v2953 = vpop.permute.xlu0 %2952
    %v2954 = vsel %vm214, %v2953, 0
    %2956 = vmatprep.subr.mxu0 0.0
    %2957 = vmatpush1.msra.mxu0 %v204
    %2958 = vmatprep.subr.mxu0 0.0
    %2959 = vmatpush1.msra.mxu0 0.0
    %2960 = vmatprep.subr.mxu0 0.0
    %2961 = vmatpush1.msra.mxu0 0.0
    %2962 = vmatprep.subr.mxu0 0.0
    %2963 = vmatpush1.msra.mxu0 0.0
    %2964 = vmatprep.subr.mxu0 0.0
    %2965 = vmatpush1.msra.mxu0 0.0
    %2966 = vmatprep.subr.mxu0 0.0
    %2967 = vmatpush1.msra.mxu0 0.0
    %2968 = vmatprep.subr.mxu0 0.0
    %2969 = vmatpush1.msra.mxu0 0.0
    %2970 = vmatprep.subr.mxu0 0.0
    %2971 = vmatpush1.msra.mxu0 0.0
    %2972 = vmatprep.subr.mxu0 0.0
    %2973 = vmatpush1.msra.mxu0 0.0
    %2974 = vmatprep.subr.mxu0 0.0
    %2975 = vmatpush1.msra.mxu0 0.0
    %2976 = vmatprep.subr.mxu0 0.0
    %2977 = vmatpush1.msra.mxu0 0.0
    %2978 = vmatprep.subr.mxu0 0.0
    %2979 = vmatpush1.msra.mxu0 0.0
    %2980 = vmatprep.subr.mxu0 0.0
    %2981 = vmatpush1.msra.mxu0 0.0
    %2982 = vmatprep.subr.mxu0 0.0
    %2983 = vmatpush1.msra.mxu0 0.0
    %2984 = vmatprep.subr.mxu0 0.0
    %2985 = vmatpush1.msra.mxu0 0.0
    %2986 = vmatprep.subr.mxu0 0.0
    %2987 = vmatpush1.msra.mxu0 0.0
    %2988 = vmatprep.subr.mxu0 0.0
    %2989 = vmatpush1.msra.mxu0 0.0
    %2990 = vmatprep.subr.mxu0 0.0
    %2991 = vmatpush1.msra.mxu0 0.0
    %2992 = vmatprep.subr.mxu0 0.0
    %2993 = vmatpush1.msra.mxu0 0.0
    %2994 = vmatprep.subr.mxu0 0.0
    %2995 = vmatpush1.msra.mxu0 0.0
    %2996 = vmatprep.subr.mxu0 0.0
    %2997 = vmatpush1.msra.mxu0 0.0
    %2998 = vmatprep.subr.mxu0 0.0
    %2999 = vmatpush1.msra.mxu0 0.0
    %3000 = vmatprep.subr.mxu0 0.0
    %3001 = vmatpush1.msra.mxu0 0.0
    %3002 = vmatprep.subr.mxu0 0.0
    %3003 = vmatpush1.msra.mxu0 0.0
    %3004 = vmatprep.subr.mxu0 0.0
    %3005 = vmatpush1.msra.mxu0 0.0
    %3006 = vmatprep.subr.mxu0 0.0
    %3007 = vmatpush1.msra.mxu0 0.0
    %3008 = vmatprep.subr.mxu0 0.0
    %3009 = vmatpush1.msra.mxu0 0.0
    %3010 = vmatprep.subr.mxu0 0.0
    %3011 = vmatpush1.msra.mxu0 0.0
    %3012 = vmatprep.subr.mxu0 0.0
    %3013 = vmatpush1.msra.mxu0 0.0
    %3014 = vmatprep.subr.mxu0 0.0
    %3015 = vmatpush1.msra.mxu0 0.0
    %3016 = vmatprep.subr.mxu0 0.0
    %3017 = vmatpush1.msra.mxu0 0.0
    %3018 = vmatprep.subr.mxu0 0.0
    %3019 = vmatpush1.msra.mxu0 0.0
    %3020 = vmatprep.mubr.f32.mxu0 0.0
    %3021 = vmatmul.mubr.f32.gmra.mrb[0].mxu0 %v2954
    %v3022 = vpop.f32.mrb[0].mxu0
    %v3023 = vadd.f32 0.0, %v3022
    %v3024 = vpop.f32.mrb[0].mxu0
    %3025 = vdwg.mxu0
    %v3027 = vrot.slane %v3023, 2
    %v3028 = vrot.slane %v3023, 3
    %v3029 = vrot.slane %v3023, 4
    %v3030 = vrot.slane %v3023, 5
    %v3031 = vrot.slane %v3023, 6
    %v3032 = vrot.slane %v3023, 7
    %v3033 = vrot.slane %v3023, 1
    %v3042 = vadd.f32 %v166, %v3027
    %v3043 = vadd.f32 %v171, %v3028
    %v3044 = vadd.f32 %v176, %v3029
    %v3045 = vadd.f32 %v181, %v3030
    %v3046 = vadd.f32 %v186, %v3031
    %v3047 = vadd.f32 %v191, %v3032
    %v3048 = vadd.f32 %v196, %v3023
    %v3049 = vadd.f32 %v201, %v3033
    %v3050 = vxor.u32 %v3042, 2147483648
    %v3051 = vxor.u32 %v3043, 2147483648
    %v3052 = vxor.u32 %v3044, 2147483648
    %v3053 = vxor.u32 %v3045, 2147483648
    %v3054 = vxor.u32 %v3046, 2147483648
    %v3055 = vxor.u32 %v3047, 2147483648
    %v3056 = vxor.u32 %v3048, 2147483648
    %v3057 = vxor.u32 %v3049, 2147483648
    %v3058 = vmul.f32 %v3050, 1.442695
    %v3059 = vpow.pop %v3058
    %v3060 = vmul.f32 %v3051, 1.442695
    %v3061 = vpow.pop %v3060
    %v3062 = vmul.f32 %v3052, 1.442695
    %v3063 = vpow.pop %v3062
    %v3064 = vmul.f32 %v3053, 1.442695
    %v3065 = vpow.pop %v3064
    %v3066 = vmul.f32 %v3054, 1.442695
    %v3067 = vpow.pop %v3066
    %v3068 = vmul.f32 %v3055, 1.442695
    %v3069 = vpow.pop %v3068
    %v3070 = vmul.f32 %v3056, 1.442695
    %v3071 = vpow.pop %v3070
    %v3072 = vmul.f32 %v3057, 1.442695
    %v3073 = vpow.pop %v3072
    %v3074 = vadd.f32 %v3059, 1.0
    %v3075 = vadd.f32 %v3061, 1.0
    %v3076 = vadd.f32 %v3063, 1.0
    %v3077 = vadd.f32 %v3065, 1.0
    %v3078 = vadd.f32 %v3067, 1.0
    %v3079 = vadd.f32 %v3069, 1.0
    %v3080 = vadd.f32 %v3071, 1.0
    %v3081 = vadd.f32 %v3073, 1.0
    %v3082 = vrcp.pop %v3074
    %v3083 = vmul.f32 1.0, %v3082
    %v3084 = vrcp.pop %v3075
    %v3085 = vmul.f32 1.0, %v3084
    %v3086 = vrcp.pop %v3076
    %v3087 = vmul.f32 1.0, %v3086
    %v3088 = vrcp.pop %v3077
    %v3089 = vmul.f32 1.0, %v3088
    %v3090 = vrcp.pop %v3078
    %v3091 = vmul.f32 1.0, %v3090
    %v3092 = vrcp.pop %v3079
    %v3093 = vmul.f32 1.0, %v3092
    %v3094 = vrcp.pop %v3080
    %v3095 = vmul.f32 1.0, %v3094
    %v3096 = vrcp.pop %v3081
    %v3097 = vmul.f32 1.0, %v3096
    %v3098 = vtanh.pop %v3042
    %v3099 = vtanh.pop %v3043
    %v3100 = vtanh.pop %v3044
    %v3101 = vtanh.pop %v3045
    %v3102 = vtanh.pop %v3046
    %v3103 = vtanh.pop %v3047
    %v3104 = vtanh.pop %v3048
    %v3105 = vtanh.pop %v3049
    %v3114 = vrot.slane %v2746, 7
    %v3115 = vrot.slane %v2747, 7
    %v3116 = vrot.slane %v2748, 7
    %v3117 = vrot.slane %v2749, 7
    %v3118 = vrot.slane %v2750, 7
    %v3119 = vrot.slane %v2751, 7
    %v3120 = vrot.slane %v2752, 7
    %v3121 = vrot.slane %v2753, 7
    %v3130 = vmul.f32 %v3083, %v3114
    %v3131 = vmul.f32 %v3085, %v3115
    %v3132 = vmul.f32 %v3087, %v3116
    %v3133 = vmul.f32 %v3089, %v3117
    %v3134 = vmul.f32 %v3091, %v3118
    %v3135 = vmul.f32 %v3093, %v3119
    %v3136 = vmul.f32 %v3095, %v3120
    %v3137 = vmul.f32 %v3097, %v3121
    %3146 = vrot.lane.b32.xlu0 %v3098, 112
    %v3147 = vpop.permute.xlu0 %3146
    %3148 = vrot.lane.b32.xlu0 %v3099, 112
    %v3149 = vpop.permute.xlu0 %3148
    %3150 = vrot.lane.b32.xlu0 %v3100, 112
    %v3151 = vpop.permute.xlu0 %3150
    %3152 = vrot.lane.b32.xlu0 %v3101, 112
    %v3153 = vpop.permute.xlu0 %3152
    %3154 = vrot.lane.b32.xlu0 %v3102, 112
    %v3155 = vpop.permute.xlu0 %3154
    %3156 = vrot.lane.b32.xlu0 %v3103, 112
    %v3157 = vpop.permute.xlu0 %3156
    %3158 = vrot.lane.b32.xlu0 %v3104, 112
    %v3159 = vpop.permute.xlu0 %3158
    %3160 = vrot.lane.b32.xlu0 %v3105, 112
    %v3161 = vpop.permute.xlu0 %3160
    %v3170 = vmul.f32 %v3083, %v3147
    %v3171 = vmul.f32 %v3085, %v3149
    %v3172 = vmul.f32 %v3087, %v3151
    %v3173 = vmul.f32 %v3089, %v3153
    %v3174 = vmul.f32 %v3091, %v3155
    %v3175 = vmul.f32 %v3093, %v3157
    %v3176 = vmul.f32 %v3095, %v3159
    %v3177 = vmul.f32 %v3097, %v3161
    %3186 = vrot.lane.b32.xlu0 %v3170, 8
    %v3187 = vpop.permute.xlu0 %3186
    %3188 = vrot.lane.b32.xlu0 %v3171, 8
    %v3189 = vpop.permute.xlu0 %3188
    %3190 = vrot.lane.b32.xlu0 %v3172, 8
    %v3191 = vpop.permute.xlu0 %3190
    %3192 = vrot.lane.b32.xlu0 %v3173, 8
    %v3193 = vpop.permute.xlu0 %3192
    %3194 = vrot.lane.b32.xlu0 %v3174, 8
    %v3195 = vpop.permute.xlu0 %3194
    %3196 = vrot.lane.b32.xlu0 %v3175, 8
    %v3197 = vpop.permute.xlu0 %3196
    %3198 = vrot.lane.b32.xlu0 %v3176, 8
    %v3199 = vpop.permute.xlu0 %3198
    %3200 = vrot.lane.b32.xlu0 %v3177, 8
    %v3201 = vpop.permute.xlu0 %3200
    %v3210 = vadd.f32 %v3130, %v3187
    %v3211 = vadd.f32 %v3131, %v3189
    %v3212 = vadd.f32 %v3132, %v3191
    %v3213 = vadd.f32 %v3133, %v3193
    %v3214 = vadd.f32 %v3134, %v3195
    %v3215 = vadd.f32 %v3135, %v3197
    %v3216 = vadd.f32 %v3136, %v3199
    %v3217 = vadd.f32 %v3137, %v3201
    %v3218 = vtanh.pop %v3210
    %v3219 = vtanh.pop %v3211
    %v3220 = vtanh.pop %v3212
    %v3221 = vtanh.pop %v3213
    %v3222 = vtanh.pop %v3214
    %v3223 = vtanh.pop %v3215
    %v3224 = vtanh.pop %v3216
    %v3225 = vtanh.pop %v3217
    %3234 = vrot.lane.b32.xlu0 %v3218, 16
    %v3235 = vpop.permute.xlu0 %3234
    %3236 = vrot.lane.b32.xlu0 %v3219, 16
    %v3237 = vpop.permute.xlu0 %3236
    %3238 = vrot.lane.b32.xlu0 %v3220, 16
    %v3239 = vpop.permute.xlu0 %3238
    %3240 = vrot.lane.b32.xlu0 %v3221, 16
    %v3241 = vpop.permute.xlu0 %3240
    %3242 = vrot.lane.b32.xlu0 %v3222, 16
    %v3243 = vpop.permute.xlu0 %3242
    %3244 = vrot.lane.b32.xlu0 %v3223, 16
    %v3245 = vpop.permute.xlu0 %3244
    %3246 = vrot.lane.b32.xlu0 %v3224, 16
    %v3247 = vpop.permute.xlu0 %3246
    %3248 = vrot.lane.b32.xlu0 %v3225, 16
    %v3249 = vpop.permute.xlu0 %3248
    %v3258 = vmul.f32 %v3083, %v3235
    %v3259 = vmul.f32 %v3085, %v3237
    %v3260 = vmul.f32 %v3087, %v3239
    %v3261 = vmul.f32 %v3089, %v3241
    %v3262 = vmul.f32 %v3091, %v3243
    %v3263 = vmul.f32 %v3093, %v3245
    %v3264 = vmul.f32 %v3095, %v3247
    %v3265 = vmul.f32 %v3097, %v3249
    %v3274 = vrot.slane %v3259, 7
    %v3275 = vsel %vm531, %v3274, %v3258
    %v3276 = vrot.slane %v3260, 6
    %v3277 = vrot.slane %v3261, 5
    %v3278 = vsel %vm513, %v3277, %v3276
    %v3279 = vrot.slane %v3262, 4
    %v3280 = vsel %vm516, %v3279, %v3278
    %v3281 = vrot.slane %v3263, 3
    %v3282 = vsel %vm519, %v3281, %v3280
    %v3283 = vrot.slane %v3264, 2
    %v3284 = vsel %vm522, %v3283, %v3282
    %v3285 = vrot.slane %v3265, 1
    %v3286 = vsel %vm525, %v3285, %v3284
    %3287 = vrot.lane.b32.xlu0 %v3275, 104
    %v3288 = vpop.permute.xlu0 %3287
    %3289 = vrot.lane.b32.xlu0 %v3286, 104
    %v3290 = vpop.permute.xlu0 %3289
    %v3294 = vrot.slane %v2937, 2
    %3295 = vrot.lane.b32.xlu0 %v3294, 112
    %v3296 = vpop.permute.xlu0 %3295
    %v3298 = vsel %vm214, %v3288, %v3296
    %v3299 = vsel %vm214, %v3290, %v3296
    %vm3302 = vcmask 1041408
    %v3303 = vrot.slane %v3298, 6
    %v3304 = vrot.slane %v3299, 6
    %v3305 = vsel %vm3302, %v3303, %v3304
    %v3306 = vsel %vm74, %v3305, 0
    %3308 = vmatprep.subr.mxu0 0.0
    %3309 = vmatpush1.msra.mxu0 %v205
    %3310 = vmatprep.subr.mxu0 0.0
    %3311 = vmatpush1.msra.mxu0 %v206
    %3312 = vmatprep.subr.mxu0 0.0
    %3313 = vmatpush1.msra.mxu0 0.0
    %3314 = vmatprep.subr.mxu0 0.0
    %3315 = vmatpush1.msra.mxu0 0.0
    %3316 = vmatprep.subr.mxu0 0.0
    %3317 = vmatpush1.msra.mxu0 0.0
    %3318 = vmatprep.subr.mxu0 0.0
    %3319 = vmatpush1.msra.mxu0 0.0
    %3320 = vmatprep.subr.mxu0 0.0
    %3321 = vmatpush1.msra.mxu0 0.0
    %3322 = vmatprep.subr.mxu0 0.0
    %3323 = vmatpush1.msra.mxu0 0.0
    %3324 = vmatprep.subr.mxu0 0.0
    %3325 = vmatpush1.msra.mxu0 0.0
    %3326 = vmatprep.subr.mxu0 0.0
    %3327 = vmatpush1.msra.mxu0 0.0
    %3328 = vmatprep.subr.mxu0 0.0
    %3329 = vmatpush1.msra.mxu0 0.0
    %3330 = vmatprep.subr.mxu0 0.0
    %3331 = vmatpush1.msra.mxu0 0.0
    %3332 = vmatprep.subr.mxu0 0.0
    %3333 = vmatpush1.msra.mxu0 0.0
    %3334 = vmatprep.subr.mxu0 0.0
    %3335 = vmatpush1.msra.mxu0 0.0
    %3336 = vmatprep.subr.mxu0 0.0
    %3337 = vmatpush1.msra.mxu0 0.0
    %3338 = vmatprep.subr.mxu0 0.0
    %3339 = vmatpush1.msra.mxu0 0.0
    %3340 = vmatprep.subr.mxu0 0.0
    %3341 = vmatpush1.msra.mxu0 0.0
    %3342 = vmatprep.subr.mxu0 0.0
    %3343 = vmatpush1.msra.mxu0 0.0
    %3344 = vmatprep.subr.mxu0 0.0
    %3345 = vmatpush1.msra.mxu0 0.0
    %3346 = vmatprep.subr.mxu0 0.0
    %3347 = vmatpush1.msra.mxu0 0.0
    %3348 = vmatprep.subr.mxu0 0.0
    %3349 = vmatpush1.msra.mxu0 0.0
    %3350 = vmatprep.subr.mxu0 0.0
    %3351 = vmatpush1.msra.mxu0 0.0
    %3352 = vmatprep.subr.mxu0 0.0
    %3353 = vmatpush1.msra.mxu0 0.0
    %3354 = vmatprep.subr.mxu0 0.0
    %3355 = vmatpush1.msra.mxu0 0.0
    %3356 = vmatprep.subr.mxu0 0.0
    %3357 = vmatpush1.msra.mxu0 0.0
    %3358 = vmatprep.subr.mxu0 0.0
    %3359 = vmatpush1.msra.mxu0 0.0
    %3360 = vmatprep.subr.mxu0 0.0
    %3361 = vmatpush1.msra.mxu0 0.0
    %3362 = vmatprep.subr.mxu0 0.0
    %3363 = vmatpush1.msra.mxu0 0.0
    %3364 = vmatprep.subr.mxu0 0.0
    %3365 = vmatpush1.msra.mxu0 0.0
    %3366 = vmatprep.subr.mxu0 0.0
    %3367 = vmatpush1.msra.mxu0 0.0
    %3368 = vmatprep.subr.mxu0 0.0
    %3369 = vmatpush1.msra.mxu0 0.0
    %3370 = vmatprep.subr.mxu0 0.0
    %3371 = vmatpush1.msra.mxu0 0.0
    %3372 = vmatprep.mubr.f32.mxu0 0.0
    %3373 = vmatmul.mubr.f32.gmra.mrb[0].mxu0 %v3306
    %v3374 = vpop.f32.mrb[0].mxu0
    %v3375 = vadd.f32 %v212, %v3374
    %v3376 = vpop.f32.mrb[0].mxu0
    %3377 = vdwg.mxu0
    %v3378 = vxor.u32 %v3375, 2147483648
    %v3379 = vmul.f32 %v3378, 1.442695
    %v3380 = vpow.pop %v3379
    %v3381 = vadd.f32 %v3380, 1.0
    %v3382 = vrcp.pop %v3381
    %v3383 = vmul.f32 1.0, %v3382
    %v3384 = vtanh.pop %v3375
    %v3385 = vmul.f32 %v3383, %v2931
    %3387 = vrot.lane.b32.xlu0 %v3384, 112
    %v3388 = vpop.permute.xlu0 %3387
    %v3390 = vmul.f32 %v3383, %v3388
    %3392 = vrot.lane.b32.xlu0 %v3390, 8
    %v3393 = vpop.permute.xlu0 %3392
    %v3395 = vadd.f32 %v3385, %v3393
    %v3396 = vtanh.pop %v3395
    %3398 = vrot.lane.b32.xlu0 %v3396, 16
    %v3399 = vpop.permute.xlu0 %3398
    %v3401 = vmul.f32 %v3383, %v3399
    %v3402 = vrot.slane %v3258, 6
    %v3403 = vrot.slane %v3259, 5
    %v3404 = vsel %vm513, %v3403, %v3402
    %v3405 = vrot.slane %v3260, 4
    %v3406 = vsel %vm516, %v3405, %v3404
    %v3407 = vrot.slane %v3261, 3
    %v3408 = vsel %vm519, %v3407, %v3406
    %v3409 = vrot.slane %v3262, 2
    %v3410 = vsel %vm522, %v3409, %v3408
    %v3411 = vrot.slane %v3263, 1
    %v3412 = vsel %vm525, %v3411, %v3410
    %v3413 = vsel %vm528, %v3264, %v3412
    %v3414 = vrot.slane %v3265, 7
    %v3415 = vsel %vm531, %v3414, %v3413
    %3416 = vrot.lane.b32.xlu0 %v3415, 104
    %v3417 = vpop.permute.xlu0 %3416
    %v3418 = vsel %vm214, %v3417, 0
    %3420 = vmatprep.subr.mxu0 0.0
    %3421 = vmatpush1.msra.mxu0 %v204
    %3422 = vmatprep.subr.mxu0 0.0
    %3423 = vmatpush1.msra.mxu0 0.0
    %3424 = vmatprep.subr.mxu0 0.0
    %3425 = vmatpush1.msra.mxu0 0.0
    %3426 = vmatprep.subr.mxu0 0.0
    %3427 = vmatpush1.msra.mxu0 0.0
    %3428 = vmatprep.subr.mxu0 0.0
    %3429 = vmatpush1.msra.mxu0 0.0
    %3430 = vmatprep.subr.mxu0 0.0
    %3431 = vmatpush1.msra.mxu0 0.0
    %3432 = vmatprep.subr.mxu0 0.0
    %3433 = vmatpush1.msra.mxu0 0.0
    %3434 = vmatprep.subr.mxu0 0.0
    %3435 = vmatpush1.msra.mxu0 0.0
    %3436 = vmatprep.subr.mxu0 0.0
    %3437 = vmatpush1.msra.mxu0 0.0
    %3438 = vmatprep.subr.mxu0 0.0
    %3439 = vmatpush1.msra.mxu0 0.0
    %3440 = vmatprep.subr.mxu0 0.0
    %3441 = vmatpush1.msra.mxu0 0.0
    %3442 = vmatprep.subr.mxu0 0.0
    %3443 = vmatpush1.msra.mxu0 0.0
    %3444 = vmatprep.subr.mxu0 0.0
    %3445 = vmatpush1.msra.mxu0 0.0
    %3446 = vmatprep.subr.mxu0 0.0
    %3447 = vmatpush1.msra.mxu0 0.0
    %3448 = vmatprep.subr.mxu0 0.0
    %3449 = vmatpush1.msra.mxu0 0.0
    %3450 = vmatprep.subr.mxu0 0.0
    %3451 = vmatpush1.msra.mxu0 0.0
    %3452 = vmatprep.subr.mxu0 0.0
    %3453 = vmatpush1.msra.mxu0 0.0
    %3454 = vmatprep.subr.mxu0 0.0
    %3455 = vmatpush1.msra.mxu0 0.0
    %3456 = vmatprep.subr.mxu0 0.0
    %3457 = vmatpush1.msra.mxu0 0.0
    %3458 = vmatprep.subr.mxu0 0.0
    %3459 = vmatpush1.msra.mxu0 0.0
    %3460 = vmatprep.subr.mxu0 0.0
    %3461 = vmatpush1.msra.mxu0 0.0
    %3462 = vmatprep.subr.mxu0 0.0
    %3463 = vmatpush1.msra.mxu0 0.0
    %3464 = vmatprep.subr.mxu0 0.0
    %3465 = vmatpush1.msra.mxu0 0.0
    %3466 = vmatprep.subr.mxu0 0.0
    %3467 = vmatpush1.msra.mxu0 0.0
    %3468 = vmatprep.subr.mxu0 0.0
    %3469 = vmatpush1.msra.mxu0 0.0
    %3470 = vmatprep.subr.mxu0 0.0
    %3471 = vmatpush1.msra.mxu0 0.0
    %3472 = vmatprep.subr.mxu0 0.0
    %3473 = vmatpush1.msra.mxu0 0.0
    %3474 = vmatprep.subr.mxu0 0.0
    %3475 = vmatpush1.msra.mxu0 0.0
    %3476 = vmatprep.subr.mxu0 0.0
    %3477 = vmatpush1.msra.mxu0 0.0
    %3478 = vmatprep.subr.mxu0 0.0
    %3479 = vmatpush1.msra.mxu0 0.0
    %3480 = vmatprep.subr.mxu0 0.0
    %3481 = vmatpush1.msra.mxu0 0.0
    %3482 = vmatprep.subr.mxu0 0.0
    %3483 = vmatpush1.msra.mxu0 0.0
    %3484 = vmatprep.mubr.f32.mxu0 0.0
    %3485 = vmatmul.mubr.f32.gmra.mrb[0].mxu0 %v3418
    %v3486 = vpop.f32.mrb[0].mxu0
    %v3487 = vadd.f32 0.0, %v3486
    %v3488 = vpop.f32.mrb[0].mxu0
    %3489 = vdwg.mxu0
    %v3491 = vrot.slane %v3487, 1
    %v3492 = vrot.slane %v3487, 2
    %v3493 = vrot.slane %v3487, 3
    %v3494 = vrot.slane %v3487, 4
    %v3495 = vrot.slane %v3487, 5
    %v3496 = vrot.slane %v3487, 6
    %v3497 = vrot.slane %v3487, 7
    %v3506 = vadd.f32 %v166, %v3491
    %v3507 = vadd.f32 %v171, %v3492
    %v3508 = vadd.f32 %v176, %v3493
    %v3509 = vadd.f32 %v181, %v3494
    %v3510 = vadd.f32 %v186, %v3495
    %v3511 = vadd.f32 %v191, %v3496
    %v3512 = vadd.f32 %v196, %v3497
    %v3513 = vadd.f32 %v201, %v3487
    %v3514 = vxor.u32 %v3506, 2147483648
    %v3515 = vxor.u32 %v3507, 2147483648
    %v3516 = vxor.u32 %v3508, 2147483648
    %v3517 = vxor.u32 %v3509, 2147483648
    %v3518 = vxor.u32 %v3510, 2147483648
    %v3519 = vxor.u32 %v3511, 2147483648
    %v3520 = vxor.u32 %v3512, 2147483648
    %v3521 = vxor.u32 %v3513, 2147483648
    %v3522 = vmul.f32 %v3514, 1.442695
    %v3523 = vpow.pop %v3522
    %v3524 = vmul.f32 %v3515, 1.442695
    %v3525 = vpow.pop %v3524
    %v3526 = vmul.f32 %v3516, 1.442695
    %v3527 = vpow.pop %v3526
    %v3528 = vmul.f32 %v3517, 1.442695
    %v3529 = vpow.pop %v3528
    %v3530 = vmul.f32 %v3518, 1.442695
    %v3531 = vpow.pop %v3530
    %v3532 = vmul.f32 %v3519, 1.442695
    %v3533 = vpow.pop %v3532
    %v3534 = vmul.f32 %v3520, 1.442695
    %v3535 = vpow.pop %v3534
    %v3536 = vmul.f32 %v3521, 1.442695
    %v3537 = vpow.pop %v3536
    %v3538 = vadd.f32 %v3523, 1.0
    %v3539 = vadd.f32 %v3525, 1.0
    %v3540 = vadd.f32 %v3527, 1.0
    %v3541 = vadd.f32 %v3529, 1.0
    %v3542 = vadd.f32 %v3531, 1.0
    %v3543 = vadd.f32 %v3533, 1.0
    %v3544 = vadd.f32 %v3535, 1.0
    %v3545 = vadd.f32 %v3537, 1.0
    %v3546 = vrcp.pop %v3538
    %v3547 = vmul.f32 1.0, %v3546
    %v3548 = vrcp.pop %v3539
    %v3549 = vmul.f32 1.0, %v3548
    %v3550 = vrcp.pop %v3540
    %v3551 = vmul.f32 1.0, %v3550
    %v3552 = vrcp.pop %v3541
    %v3553 = vmul.f32 1.0, %v3552
    %v3554 = vrcp.pop %v3542
    %v3555 = vmul.f32 1.0, %v3554
    %v3556 = vrcp.pop %v3543
    %v3557 = vmul.f32 1.0, %v3556
    %v3558 = vrcp.pop %v3544
    %v3559 = vmul.f32 1.0, %v3558
    %v3560 = vrcp.pop %v3545
    %v3561 = vmul.f32 1.0, %v3560
    %v3562 = vtanh.pop %v3506
    %v3563 = vtanh.pop %v3507
    %v3564 = vtanh.pop %v3508
    %v3565 = vtanh.pop %v3509
    %v3566 = vtanh.pop %v3510
    %v3567 = vtanh.pop %v3511
    %v3568 = vtanh.pop %v3512
    %v3569 = vtanh.pop %v3513
    %v3578 = vrot.slane %v3210, 7
    %v3579 = vrot.slane %v3211, 7
    %v3580 = vrot.slane %v3212, 7
    %v3581 = vrot.slane %v3213, 7
    %v3582 = vrot.slane %v3214, 7
    %v3583 = vrot.slane %v3215, 7
    %v3584 = vrot.slane %v3216, 7
    %v3585 = vrot.slane %v3217, 7
    %v3594 = vmul.f32 %v3547, %v3578
    %v3595 = vmul.f32 %v3549, %v3579
    %v3596 = vmul.f32 %v3551, %v3580
    %v3597 = vmul.f32 %v3553, %v3581
    %v3598 = vmul.f32 %v3555, %v3582
    %v3599 = vmul.f32 %v3557, %v3583
    %v3600 = vmul.f32 %v3559, %v3584
    %v3601 = vmul.f32 %v3561, %v3585
    %3610 = vrot.lane.b32.xlu0 %v3562, 112
    %v3611 = vpop.permute.xlu0 %3610
    %3612 = vrot.lane.b32.xlu0 %v3563, 112
    %v3613 = vpop.permute.xlu0 %3612
    %3614 = vrot.lane.b32.xlu0 %v3564, 112
    %v3615 = vpop.permute.xlu0 %3614
    %3616 = vrot.lane.b32.xlu0 %v3565, 112
    %v3617 = vpop.permute.xlu0 %3616
    %3618 = vrot.lane.b32.xlu0 %v3566, 112
    %v3619 = vpop.permute.xlu0 %3618
    %3620 = vrot.lane.b32.xlu0 %v3567, 112
    %v3621 = vpop.permute.xlu0 %3620
    %3622 = vrot.lane.b32.xlu0 %v3568, 112
    %v3623 = vpop.permute.xlu0 %3622
    %3624 = vrot.lane.b32.xlu0 %v3569, 112
    %v3625 = vpop.permute.xlu0 %3624
    %v3634 = vmul.f32 %v3547, %v3611
    %v3635 = vmul.f32 %v3549, %v3613
    %v3636 = vmul.f32 %v3551, %v3615
    %v3637 = vmul.f32 %v3553, %v3617
    %v3638 = vmul.f32 %v3555, %v3619
    %v3639 = vmul.f32 %v3557, %v3621
    %v3640 = vmul.f32 %v3559, %v3623
    %v3641 = vmul.f32 %v3561, %v3625
    %3650 = vrot.lane.b32.xlu0 %v3634, 8
    %v3651 = vpop.permute.xlu0 %3650
    %3652 = vrot.lane.b32.xlu0 %v3635, 8
    %v3653 = vpop.permute.xlu0 %3652
    %3654 = vrot.lane.b32.xlu0 %v3636, 8
    %v3655 = vpop.permute.xlu0 %3654
    %3656 = vrot.lane.b32.xlu0 %v3637, 8
    %v3657 = vpop.permute.xlu0 %3656
    %3658 = vrot.lane.b32.xlu0 %v3638, 8
    %v3659 = vpop.permute.xlu0 %3658
    %3660 = vrot.lane.b32.xlu0 %v3639, 8
    %v3661 = vpop.permute.xlu0 %3660
    %3662 = vrot.lane.b32.xlu0 %v3640, 8
    %v3663 = vpop.permute.xlu0 %3662
    %3664 = vrot.lane.b32.xlu0 %v3641, 8
    %v3665 = vpop.permute.xlu0 %3664
    %v3674 = vadd.f32 %v3594, %v3651
    %v3675 = vadd.f32 %v3595, %v3653
    %v3676 = vadd.f32 %v3596, %v3655
    %v3677 = vadd.f32 %v3597, %v3657
    %v3678 = vadd.f32 %v3598, %v3659
    %v3679 = vadd.f32 %v3599, %v3661
    %v3680 = vadd.f32 %v3600, %v3663
    %v3681 = vadd.f32 %v3601, %v3665
    %v3682 = vtanh.pop %v3674
    %v3683 = vtanh.pop %v3675
    %v3684 = vtanh.pop %v3676
    %v3685 = vtanh.pop %v3677
    %v3686 = vtanh.pop %v3678
    %v3687 = vtanh.pop %v3679
    %v3688 = vtanh.pop %v3680
    %v3689 = vtanh.pop %v3681
    %3698 = vrot.lane.b32.xlu0 %v3682, 16
    %v3699 = vpop.permute.xlu0 %3698
    %3700 = vrot.lane.b32.xlu0 %v3683, 16
    %v3701 = vpop.permute.xlu0 %3700
    %3702 = vrot.lane.b32.xlu0 %v3684, 16
    %v3703 = vpop.permute.xlu0 %3702
    %3704 = vrot.lane.b32.xlu0 %v3685, 16
    %v3705 = vpop.permute.xlu0 %3704
    %3706 = vrot.lane.b32.xlu0 %v3686, 16
    %v3707 = vpop.permute.xlu0 %3706
    %3708 = vrot.lane.b32.xlu0 %v3687, 16
    %v3709 = vpop.permute.xlu0 %3708
    %3710 = vrot.lane.b32.xlu0 %v3688, 16
    %v3711 = vpop.permute.xlu0 %3710
    %3712 = vrot.lane.b32.xlu0 %v3689, 16
    %v3713 = vpop.permute.xlu0 %3712
    %v3722 = vmul.f32 %v3547, %v3699
    %v3723 = vmul.f32 %v3549, %v3701
    %v3724 = vmul.f32 %v3551, %v3703
    %v3725 = vmul.f32 %v3553, %v3705
    %v3726 = vmul.f32 %v3555, %v3707
    %v3727 = vmul.f32 %v3557, %v3709
    %v3728 = vmul.f32 %v3559, %v3711
    %v3729 = vmul.f32 %v3561, %v3713
    %v3738 = vrot.slane %v3723, 7
    %v3739 = vrot.slane %v3724, 6
    %v3740 = vsel %vm513, %v3739, %v3738
    %v3741 = vrot.slane %v3725, 5
    %v3742 = vsel %vm516, %v3741, %v3740
    %v3743 = vrot.slane %v3726, 4
    %v3744 = vsel %vm519, %v3743, %v3742
    %v3745 = vrot.slane %v3727, 3
    %v3746 = vsel %vm522, %v3745, %v3744
    %v3747 = vrot.slane %v3728, 2
    %v3748 = vsel %vm525, %v3747, %v3746
    %v3749 = vrot.slane %v3729, 1
    %v3750 = vsel %vm528, %v3749, %v3748
    %3751 = vrot.lane.b32.xlu0 %v3722, 104
    %v3752 = vpop.permute.xlu0 %3751
    %3753 = vrot.lane.b32.xlu0 %v3750, 104
    %v3754 = vpop.permute.xlu0 %3753
    %v3758 = vrot.slane %v3401, 1
    %3759 = vrot.lane.b32.xlu0 %v3758, 112
    %v3760 = vpop.permute.xlu0 %3759
    %v3762 = vsel %vm214, %v3752, %v3760
    %v3763 = vsel %vm214, %v3754, %v3760
    %vm3766 = vcmask 1040384
    %v3767 = vrot.slane %v3762, 7
    %v3768 = vrot.slane %v3763, 7
    %v3769 = vsel %vm3766, %v3767, %v3768
    %v3770 = vsel %vm74, %v3769, 0
    %3772 = vmatprep.subr.mxu0 0.0
    %3773 = vmatpush1.msra.mxu0 %v205
    %3774 = vmatprep.subr.mxu0 0.0
    %3775 = vmatpush1.msra.mxu0 %v206
    %3776 = vmatprep.subr.mxu0 0.0
    %3777 = vmatpush1.msra.mxu0 0.0
    %3778 = vmatprep.subr.mxu0 0.0
    %3779 = vmatpush1.msra.mxu0 0.0
    %3780 = vmatprep.subr.mxu0 0.0
    %3781 = vmatpush1.msra.mxu0 0.0
    %3782 = vmatprep.subr.mxu0 0.0
    %3783 = vmatpush1.msra.mxu0 0.0
    %3784 = vmatprep.subr.mxu0 0.0
    %3785 = vmatpush1.msra.mxu0 0.0
    %3786 = vmatprep.subr.mxu0 0.0
    %3787 = vmatpush1.msra.mxu0 0.0
    %3788 = vmatprep.subr.mxu0 0.0
    %3789 = vmatpush1.msra.mxu0 0.0
    %3790 = vmatprep.subr.mxu0 0.0
    %3791 = vmatpush1.msra.mxu0 0.0
    %3792 = vmatprep.subr.mxu0 0.0
    %3793 = vmatpush1.msra.mxu0 0.0
    %3794 = vmatprep.subr.mxu0 0.0
    %3795 = vmatpush1.msra.mxu0 0.0
    %3796 = vmatprep.subr.mxu0 0.0
    %3797 = vmatpush1.msra.mxu0 0.0
    %3798 = vmatprep.subr.mxu0 0.0
    %3799 = vmatpush1.msra.mxu0 0.0
    %3800 = vmatprep.subr.mxu0 0.0
    %3801 = vmatpush1.msra.mxu0 0.0
    %3802 = vmatprep.subr.mxu0 0.0
    %3803 = vmatpush1.msra.mxu0 0.0
    %3804 = vmatprep.subr.mxu0 0.0
    %3805 = vmatpush1.msra.mxu0 0.0
    %3806 = vmatprep.subr.mxu0 0.0
    %3807 = vmatpush1.msra.mxu0 0.0
    %3808 = vmatprep.subr.mxu0 0.0
    %3809 = vmatpush1.msra.mxu0 0.0
    %3810 = vmatprep.subr.mxu0 0.0
    %3811 = vmatpush1.msra.mxu0 0.0
    %3812 = vmatprep.subr.mxu0 0.0
    %3813 = vmatpush1.msra.mxu0 0.0
    %3814 = vmatprep.subr.mxu0 0.0
    %3815 = vmatpush1.msra.mxu0 0.0
    %3816 = vmatprep.subr.mxu0 0.0
    %3817 = vmatpush1.msra.mxu0 0.0
    %3818 = vmatprep.subr.mxu0 0.0
    %3819 = vmatpush1.msra.mxu0 0.0
    %3820 = vmatprep.subr.mxu0 0.0
    %3821 = vmatpush1.msra.mxu0 0.0
    %3822 = vmatprep.subr.mxu0 0.0
    %3823 = vmatpush1.msra.mxu0 0.0
    %3824 = vmatprep.subr.mxu0 0.0
    %3825 = vmatpush1.msra.mxu0 0.0
    %3826 = vmatprep.subr.mxu0 0.0
    %3827 = vmatpush1.msra.mxu0 0.0
    %3828 = vmatprep.subr.mxu0 0.0
    %3829 = vmatpush1.msra.mxu0 0.0
    %3830 = vmatprep.subr.mxu0 0.0
    %3831 = vmatpush1.msra.mxu0 0.0
    %3832 = vmatprep.subr.mxu0 0.0
    %3833 = vmatpush1.msra.mxu0 0.0
    %3834 = vmatprep.subr.mxu0 0.0
    %3835 = vmatpush1.msra.mxu0 0.0
    %3836 = vmatprep.mubr.f32.mxu0 0.0
    %3837 = vmatmul.mubr.f32.gmra.mrb[0].mxu0 %v3770
    %v3838 = vpop.f32.mrb[0].mxu0
    %v3839 = vadd.f32 %v212, %v3838
    %v3840 = vpop.f32.mrb[0].mxu0
    %3841 = vdwg.mxu0
    %v3842 = vxor.u32 %v3839, 2147483648
    %v3843 = vmul.f32 %v3842, 1.442695
    %v3844 = vpow.pop %v3843
    %v3845 = vadd.f32 %v3844, 1.0
    %v3846 = vrcp.pop %v3845
    %v3847 = vmul.f32 1.0, %v3846
    %v3848 = vtanh.pop %v3839
    %v3849 = vmul.f32 %v3847, %v3395
    %3851 = vrot.lane.b32.xlu0 %v3848, 112
    %v3852 = vpop.permute.xlu0 %3851
    %v3854 = vmul.f32 %v3847, %v3852
    %3856 = vrot.lane.b32.xlu0 %v3854, 8
    %v3857 = vpop.permute.xlu0 %3856
    %v3859 = vadd.f32 %v3849, %v3857
    %v3860 = vtanh.pop %v3859
    %3862 = vrot.lane.b32.xlu0 %v3860, 16
    %v3863 = vpop.permute.xlu0 %3862
    %v3865 = vmul.f32 %v3847, %v3863
    %v3866 = vld [vmem:[%s6] sm:$0xff]
    %v3867 = vld [vmem:[%s7] sm:$0x1]
    %v3869 = vlaneseq
    %v3870 = vshrl.u32 %v3869, 7
    %v3871 = vsub.s32 0, %v3870
    %v3872 = vrot.slane %v3867, %v3871
    %3875 = vrot.lane.b32.xlu0 %v3865, 104
    %v3876 = vpop.permute.xlu0 %3875
    %v3877 = vsel %vm214, %v3876, 0
    %3879 = vmatprep.subr.mxu0 0.0
    %3880 = vmatpush1.msra.mxu0 %v3866
    %3881 = vmatprep.subr.mxu0 0.0
    %3882 = vmatpush1.msra.mxu0 0.0
    %3883 = vmatprep.subr.mxu0 0.0
    %3884 = vmatpush1.msra.mxu0 0.0
    %3885 = vmatprep.subr.mxu0 0.0
    %3886 = vmatpush1.msra.mxu0 0.0
    %3887 = vmatprep.subr.mxu0 0.0
    %3888 = vmatpush1.msra.mxu0 0.0
    %3889 = vmatprep.subr.mxu0 0.0
    %3890 = vmatpush1.msra.mxu0 0.0
    %3891 = vmatprep.subr.mxu0 0.0
    %3892 = vmatpush1.msra.mxu0 0.0
    %3893 = vmatprep.subr.mxu0 0.0
    %3894 = vmatpush1.msra.mxu0 0.0
    %3895 = vmatprep.subr.mxu0 0.0
    %3896 = vmatpush1.msra.mxu0 0.0
    %3897 = vmatprep.subr.mxu0 0.0
    %3898 = vmatpush1.msra.mxu0 0.0
    %3899 = vmatprep.subr.mxu0 0.0
    %3900 = vmatpush1.msra.mxu0 0.0
    %3901 = vmatprep.subr.mxu0 0.0
    %3902 = vmatpush1.msra.mxu0 0.0
    %3903 = vmatprep.subr.mxu0 0.0
    %3904 = vmatpush1.msra.mxu0 0.0
    %3905 = vmatprep.subr.mxu0 0.0
    %3906 = vmatpush1.msra.mxu0 0.0
    %3907 = vmatprep.subr.mxu0 0.0
    %3908 = vmatpush1.msra.mxu0 0.0
    %3909 = vmatprep.subr.mxu0 0.0
    %3910 = vmatpush1.msra.mxu0 0.0
    %3911 = vmatprep.subr.mxu0 0.0
    %3912 = vmatpush1.msra.mxu0 0.0
    %3913 = vmatprep.subr.mxu0 0.0
    %3914 = vmatpush1.msra.mxu0 0.0
    %3915 = vmatprep.subr.mxu0 0.0
    %3916 = vmatpush1.msra.mxu0 0.0
    %3917 = vmatprep.subr.mxu0 0.0
    %3918 = vmatpush1.msra.mxu0 0.0
    %3919 = vmatprep.subr.mxu0 0.0
    %3920 = vmatpush1.msra.mxu0 0.0
    %3921 = vmatprep.subr.mxu0 0.0
    %3922 = vmatpush1.msra.mxu0 0.0
    %3923 = vmatprep.subr.mxu0 0.0
    %3924 = vmatpush1.msra.mxu0 0.0
    %3925 = vmatprep.subr.mxu0 0.0
    %3926 = vmatpush1.msra.mxu0 0.0
    %3927 = vmatprep.subr.mxu0 0.0
    %3928 = vmatpush1.msra.mxu0 0.0
    %3929 = vmatprep.subr.mxu0 0.0
    %3930 = vmatpush1.msra.mxu0 0.0
    %3931 = vmatprep.subr.mxu0 0.0
    %3932 = vmatpush1.msra.mxu0 0.0
    %3933 = vmatprep.subr.mxu0 0.0
    %3934 = vmatpush1.msra.mxu0 0.0
    %3935 = vmatprep.subr.mxu0 0.0
    %3936 = vmatpush1.msra.mxu0 0.0
    %3937 = vmatprep.subr.mxu0 0.0
    %3938 = vmatpush1.msra.mxu0 0.0
    %3939 = vmatprep.subr.mxu0 0.0
    %3940 = vmatpush1.msra.mxu0 0.0
    %3941 = vmatprep.subr.mxu0 0.0
    %3942 = vmatpush1.msra.mxu0 0.0
    %3943 = vmatprep.mubr.f32.mxu0 0.0
    %3944 = vmatmul.mubr.f32.gmra.mrb[0].mxu0 %v3877
    %v3945 = vpop.f32.mrb[0].mxu0
    %v3946 = vadd.f32 %v3872, %v3945
    %v3947 = vpop.f32.mrb[0].mxu0
    %3948 = vdwg.mxu0
    %vm3949 = vcmask 23552
    %v3950 = vsel %vm3949, %v3946, -inf
    %3951 = vmax.xlane.f32.xlu0 %v3950
    %v3952 = vpop.xlane.xlu0 %3951
    %v3953 = vsub.f32 %v3946, %v3952
    %v3954 = vmul.f32 %v3953, 1.442695
    %v3955 = vpow.pop %v3954
    %v3956 = vsel %vm3949, %v3955, 0.0
    %3957 = vadd.xlane.f32.xlu0 %v3956
    %v3958 = vpop.xlane.xlu0 %3957
    %v3959 = vrcp.pop %v3958
    %v3960 = vmul.f32 %v3955, %v3959
    %3961 = vst.msk [vmem:[%s8] sm:$0xff] %vm3949, %v3960
    // Predicated region
    $region42: #{tpu_custom_call.1} parent=1 // pred_check
      _
    $region43: #{tpu_custom_call.1} parent=1 // pred_check_branch
      %3963 = sbr.rel (0) target = $region45
    $region44: #{tpu_custom_call.1} parent=1 // pred_region
      _
    $region45: #{tpu_custom_call.1} parent=1 // pred_fallthru
      _
    // Predicated region
    $region46: #{tpu_custom_call.1} parent=1 // pred_check
      _
    $region47: #{tpu_custom_call.1} parent=1 // pred_check_branch
      %3965 = sbr.rel (0) target = $region49
    $region48: #{tpu_custom_call.1} parent=1 // pred_region
      _
    $region49: #{tpu_custom_call.1} parent=1 // pred_fallthru
      _
    %3966 = vsyncpa [#allocation3], 1
    %3967 = vsyncpa [#allocation5], 1

</llo_original>
